<compile_context>
chip_gen: v7x
topology: tpu7x:2x2x1
jax: 0.10.0
libtpu: 0.0.40
codegen_flags: <defaults>
</compile_context>

<pallas_src>
import math

import jax
import jax.numpy as jnp
from jax import lax
from jax.experimental import pallas as pl
from jax.experimental.pallas import tpu as pltpu

# ---------------- small config consistent with ModelArgs ----------------
BATCH = 2
SEQ = 8
DIM = 64
N_LAYERS = 2
N_HEADS = 4
N_KV_HEADS = 4                    # args.n_kv_heads is None -> n_heads (n_rep == 1)
HEAD_DIM = DIM // N_HEADS         # 16 -> q|k slab width DQK = 128 (one full vreg of lanes)
MULTIPLE_OF = 16
NORM_EPS = 1e-5
VOCAB = 256                       # multiple of 128 -> lane-dense logits output
ROPE_THETA = 10000.0              # Attention.forward uses precompute_freqs_cis default theta

N_REP = N_HEADS // N_KV_HEADS
DQ = N_HEADS * HEAD_DIM
DKV = N_KV_HEADS * HEAD_DIM
DQK = DQ + DKV                    # width of the rotary-rotated q|k slab (= 128 here)
DQKV = DQ + 2 * DKV               # width of fused qkv projection output
N_SLAB_HEADS = N_HEADS + N_KV_HEADS


def _ffn_hidden(dim, hidden, multiple_of, ffn_dim_multiplier=None):
    hidden = int(2 * hidden / 3)
    if ffn_dim_multiplier is not None:
        hidden = int(ffn_dim_multiplier * hidden)
    return multiple_of * ((hidden + multiple_of - 1) // multiple_of)


HID = _ffn_hidden(DIM, DIM, MULTIPLE_OF)   # = 48 for this config


# ============================ fused Pallas kernel ============================

def _transformer_kernel(x_ref, attn_g_ref, ffn_g_ref, wqkv_ref, wo_ref, w13_ref,
                        w2_ref, fin_g_ref, wout_ref, cos_ref, sin_ref, logits_ref):
    S = x_ref.shape[0]                          # rows for this grid step (= SEQ)

    def rmsnorm(v, g):
        return v * lax.rsqrt(jnp.mean(v * v, axis=-1, keepdims=True) + NORM_EPS) * g

    def bdot(a, w_bf16):                        # bf16-in / f32-accumulate MXU matmul
        return jnp.dot(a.astype(jnp.bfloat16), w_bf16,
                       preferred_element_type=jnp.float32)

    # RoPE tables (S, HEAD_DIM) broadcast across all q+kv heads in-kernel.
    cos = jnp.concatenate([cos_ref[...]] * N_SLAB_HEADS, axis=1)        # (S, DQK)
    sin_sgn = jnp.concatenate([sin_ref[...]] * N_SLAB_HEADS, axis=1)    # (S, DQK)

    even_lane = (lax.broadcasted_iota(jnp.int32, (S, DQK), 1) % 2) == 0

    # Per-sequence causal mask built in-kernel (no O(S^2) HBM traffic).
    q_pos = lax.broadcasted_iota(jnp.int32, (S, S), 0)
    k_pos = lax.broadcasted_iota(jnp.int32, (S, S), 1)
    causal = k_pos <= q_pos                                             # (S, S) bool

    h = x_ref[...]                                                      # (S, DIM) f32
    # TODO(synk): static unroll is fine for N_LAYERS=2; at depth, stream weights
    # through a grid axis / emit_pipeline and switch to lax.fori_loop.
    for l in range(N_LAYERS):
        # ---------------- attention sub-block ----------------
        xn = rmsnorm(h, attn_g_ref[l])
        qkv = bdot(xn, wqkv_ref[l])             # (S, DQ + 2*DKV) f32
        qk = qkv[:, :DQK]
        v = qkv[:, DQK:]

        # RoPE (torch view_as_complex adjacent-pair convention):
        #   out[2i]   = x[2i]*cos_i - x[2i+1]*sin_i
        #   out[2i+1] = x[2i+1]*cos_i + x[2i]*sin_i
        # pair swap via XLU lane rolls; signs folded into the sin table.
        swapped = jnp.where(even_lane,
                            pltpu.roll(qk, DQK - 1, axis=1),   # out[2i]   <- x[2i+1]
                            pltpu.roll(qk, 1, axis=1))         # out[2i+1] <- x[2i]
        qk = qk * cos + swapped * sin_sgn

        q3 = qk[:, :DQ].reshape(S, N_HEADS, HEAD_DIM).transpose(1, 0, 2)      # (H, S, hd)
        k3 = qk[:, DQ:].reshape(S, N_KV_HEADS, HEAD_DIM).transpose(1, 0, 2)   # (Hkv, S, hd)
        v3 = v.reshape(S, N_KV_HEADS, HEAD_DIM).transpose(1, 0, 2)            # (Hkv, S, hd)
        if N_REP > 1:                            # repeat_kv (static; no-op, n_rep == 1)
            k3 = jnp.repeat(k3, N_REP, axis=0)
            v3 = jnp.repeat(v3, N_REP, axis=0)

        # All heads in one batched MXU contraction; 1/sqrt(hd) folded into wq.
        scores = jnp.einsum("hqd,hkd->hqk",
                            q3.astype(jnp.bfloat16), k3.astype(jnp.bfloat16),
                            preferred_element_type=jnp.float32)               # (H, S, S)
        scores = jnp.where(causal[None], scores, -jnp.inf)
        m = jnp.max(scores, axis=-1, keepdims=True)
        e = jnp.exp(scores - m)
        p = e * pl.reciprocal(jnp.sum(e, axis=-1, keepdims=True), approx=True)
        ctx = jnp.einsum("hqk,hkd->hqd",
                         p.astype(jnp.bfloat16), v3.astype(jnp.bfloat16),
                         preferred_element_type=jnp.float32)                  # (H, S, hd)
        ctx = ctx.transpose(1, 0, 2).reshape(S, DIM)                          # head-major
        h = h + bdot(ctx, wo_ref[l])

        # ---------------- feed-forward sub-block (fused w1|w3) ----------------
        hn = rmsnorm(h, ffn_g_ref[l])
        a13 = bdot(hn, w13_ref[l])               # (S, 2*HID)
        a1 = a13[:, :HID]
        a3 = a13[:, HID:]
        h = h + bdot(jax.nn.silu(a1) * a3, w2_ref[l])

    # ------------- final RMSNorm + vocab projection (lane-dense store) -------------
    hn = rmsnorm(h, fin_g_ref[...])
    logits_ref[...] = bdot(hn, wout_ref[...])


# ============================ trace-time constant builders ============================

def _rope_tables(seq, head_dim, theta):
    freqs = 1.0 / (theta ** (jnp.arange(0, head_dim, 2, dtype=jnp.float32) / head_dim))
    t = jnp.arange(seq, dtype=jnp.float32)
    ang = t[:, None] * freqs[None, :]                               # (S, hd/2)
    cos = jnp.repeat(jnp.cos(ang), 2, axis=-1)                      # [c0,c0,c1,c1,...]
    s = jnp.sin(ang)
    sin_sgn = jnp.stack([-s, s], axis=-1).reshape(seq, head_dim)    # [-s0,+s0,-s1,+s1,...]
    return cos, sin_sgn


# ============================ Transformer forward (wrapper) ============================

def transformer_forward(tokens, params, start_pos=0, targets=None, inference=False):
    """Training-path forward of Transformer.forward; returns (logits, loss)."""
    b, s = tokens.shape
    # TODO(synk): nn.Embedding gather stays in plain JAX (a Pallas DMA-gather is
    # unnecessary at this scale).
    h = jnp.take(params["tok_emb"], tokens.reshape(-1), axis=0)     # (B*S, DIM) f32

    # Fuse / stack per-layer weights at trace time (pre-transposed: y = x @ W),
    # fold 1/sqrt(HEAD_DIM) into wq, and cast all matmul weights to bf16.
    layers = params["layers"]
    scale = 1.0 / math.sqrt(HEAD_DIM)
    wqkv = jnp.stack([jnp.concatenate([lp["wq"] * scale, lp["wk"], lp["wv"]], axis=1)
                      for lp in layers]).astype(jnp.bfloat16)        # (L, D, DQ+2*DKV)
    wo = jnp.stack([lp["wo"] for lp in layers]).astype(jnp.bfloat16)             # (L, D, D)
    w13 = jnp.stack([jnp.concatenate([lp["w1"], lp["w3"]], axis=1)
                     for lp in layers]).astype(jnp.bfloat16)         # (L, D, 2*HID)
    w2 = jnp.stack([lp["w2"] for lp in layers]).astype(jnp.bfloat16)             # (L, HID, D)
    attn_g = jnp.stack([lp["attn_norm"].reshape(1, DIM) for lp in layers])       # (L, 1, D) f32
    ffn_g = jnp.stack([lp["ffn_norm"].reshape(1, DIM) for lp in layers])         # (L, 1, D) f32
    fin_g = params["norm"].reshape(1, DIM)                                        # f32
    wout = params["output"].astype(jnp.bfloat16)                                  # (D, VOCAB)

    cos_tab, sin_tab = _rope_tables(s, HEAD_DIM, ROPE_THETA)         # (S, HEAD_DIM) each

    def full_spec(shape):
        zeros = (0,) * len(shape)
        return pl.BlockSpec(shape, lambda bb, z=zeros: z)

    logits = pl.pallas_call(
        _transformer_kernel,
        out_shape=jax.ShapeDtypeStruct((b * s, VOCAB), jnp.float32),
        grid=(b,),                               # one sequence per grid step; parallel tiles
        in_specs=[
            pl.BlockSpec((s, DIM), lambda bb: (bb, 0)),   # x rows for this batch
            full_spec((N_LAYERS, 1, DIM)),                # attn norm scales
            full_spec((N_LAYERS, 1, DIM)),                # ffn norm scales
            full_spec((N_LAYERS, DIM, DQKV)),             # fused wq|wk|wv (bf16)
            full_spec((N_LAYERS, DIM, DIM)),              # wo (bf16)
            full_spec((N_LAYERS, DIM, 2 * HID)),          # fused w1|w3 (bf16)
            full_spec((N_LAYERS, HID, DIM)),              # w2 (bf16)
            full_spec((1, DIM)),                          # final norm scale
            full_spec((DIM, VOCAB)),                      # output projection (bf16)
            full_spec((s, HEAD_DIM)),                     # rope cos (S, hd)
            full_spec((s, HEAD_DIM)),                     # rope sin (signed) (S, hd)
        ],
        out_specs=pl.BlockSpec((s, VOCAB), lambda bb: (bb, 0)),
        compiler_params=pltpu.CompilerParams(dimension_semantics=("parallel",)),
    )(h, attn_g, ffn_g, wqkv, wo, w13, w2, fin_g, wout, cos_tab, sin_tab)

    logits = logits.reshape(b, s, VOCAB)
    if targets is None:
        loss = None
    else:
        logp = jax.nn.log_softmax(logits.reshape(-1, VOCAB), axis=-1)
        loss = -jnp.mean(jnp.take_along_axis(logp, targets.reshape(-1, 1), axis=-1))
    return logits, loss


# ============================ pure-JAX reference ============================

def reference_transformer(tokens, params):
    """Mirrors the PyTorch forward; same bf16-at-MXU-boundary numerics as the kernel."""
    b, s = tokens.shape
    x = jnp.take(params["tok_emb"], tokens.reshape(-1), axis=0).reshape(b, s, DIM)

    def rmsnorm(v, g):
        return v * lax.rsqrt(jnp.mean(v * v, axis=-1, keepdims=True) + NORM_EPS) * g

    def bf(t):
        return t.astype(jnp.bfloat16)

    freqs = 1.0 / (ROPE_THETA ** (jnp.arange(0, HEAD_DIM, 2, dtype=jnp.float32) / HEAD_DIM))
    ang = jnp.arange(s, dtype=jnp.float32)[:, None] * freqs[None, :]
    cos, sin = jnp.cos(ang), jnp.sin(ang)

    def rope(t):                                  # (b, s, heads, hd), adjacent-pair convention
        tr = t.reshape(b, s, t.shape[2], HEAD_DIM // 2, 2)
        t0, t1 = tr[..., 0], tr[..., 1]
        c, sn = cos[None, :, None, :], sin[None, :, None, :]
        return jnp.stack([t0 * c - t1 * sn, t0 * sn + t1 * c], axis=-1).reshape(t.shape)

    h = x
    for lp in params["layers"]:
        xn = rmsnorm(h, lp["attn_norm"])
        xq = jnp.einsum("bsd,de->bse", bf(xn), bf(lp["wq"]),
                        preferred_element_type=jnp.float32).reshape(b, s, N_HEADS, HEAD_DIM)
        xk = jnp.einsum("bsd,de->bse", bf(xn), bf(lp["wk"]),
                        preferred_element_type=jnp.float32).reshape(b, s, N_KV_HEADS, HEAD_DIM)
        xv = jnp.einsum("bsd,de->bse", bf(xn), bf(lp["wv"]),
                        preferred_element_type=jnp.float32).reshape(b, s, N_KV_HEADS, HEAD_DIM)
        xq, xk = rope(xq), rope(xk)
        keys = jnp.repeat(xk, N_REP, axis=2)
        values = jnp.repeat(xv, N_REP, axis=2)
        scores = jnp.einsum("bqhd,bkhd->bhqk", bf(xq), bf(keys),
                            preferred_element_type=jnp.float32) / math.sqrt(HEAD_DIM)
        causal = jnp.where(jnp.arange(s)[None, :] <= jnp.arange(s)[:, None], 0.0, -jnp.inf)
        scores = scores + causal[None, None].astype(jnp.float32)
        probs = jax.nn.softmax(scores, axis=-1)
        ctx = jnp.einsum("bhqk,bkhd->bqhd", bf(probs), bf(values),
                         preferred_element_type=jnp.float32).reshape(b, s, DIM)
        h = h + jnp.einsum("bsd,de->bse", bf(ctx), bf(lp["wo"]),
                           preferred_element_type=jnp.float32)
        hn = rmsnorm(h, lp["ffn_norm"])
        a1 = jnp.einsum("bsd,dh->bsh", bf(hn), bf(lp["w1"]), preferred_element_type=jnp.float32)
        a3 = jnp.einsum("bsd,dh->bsh", bf(hn), bf(lp["w3"]), preferred_element_type=jnp.float32)
        h = h + jnp.einsum("bsh,hd->bsd", bf(jax.nn.silu(a1) * a3), bf(lp["w2"]),
                           preferred_element_type=jnp.float32)

    hn = rmsnorm(h, params["norm"])
    return jnp.einsum("bsd,dv->bsv", bf(hn), bf(params["output"]),
                      preferred_element_type=jnp.float32)


# ============================ main ============================

if __name__ == "__main__":
    key = jax.random.PRNGKey(0)
    key, k_emb, k_out, k_tok = jax.random.split(key, 4)

    def linear_w(k, fan_in, fan_out):            # nn.Linear(weight.T) layout: (in, out)
        bound = 1.0 / math.sqrt(fan_in)
        return jax.random.uniform(k, (fan_in, fan_out), jnp.float32, -bound, bound)

    layers = []
    for _ in range(N_LAYERS):
        key, k1, k2, k3, k4, k5, k6, k7 = jax.random.split(key, 8)
        layers.append({
            "wq": linear_w(k1, DIM, DQ),
            "wk": linear_w(k2, DIM, DKV),
            "wv": linear_w(k3, DIM, DKV),
            "wo": linear_w(k4, DQ, DIM),
            "w1": linear_w(k5, DIM, HID),
            "w3": linear_w(k6, DIM, HID),
            "w2": linear_w(k7, HID, DIM),
            "attn_norm": jnp.ones((DIM,), jnp.float32),   # RMSNorm scale init = ones
            "ffn_norm": jnp.ones((DIM,), jnp.float32),
        })

    params = {
        "tok_emb": jax.random.normal(k_emb, (VOCAB, DIM), jnp.float32),
        "layers": layers,
        "norm": jnp.ones((DIM,), jnp.float32),
        "output": linear_w(k_out, DIM, VOCAB),
    }
    tokens = jax.random.randint(k_tok, (BATCH, SEQ), 0, VOCAB, dtype=jnp.int32)

    logits, loss = transformer_forward(tokens, params, start_pos=0, targets=None,
                                       inference=False)
    logits = jax.block_until_ready(logits)
    ref = jax.block_until_ready(reference_transformer(tokens, params))

    assert logits.shape == (BATCH, SEQ, VOCAB) and loss is None
    max_diff = float(jnp.max(jnp.abs(logits - ref)))
    # Both sides use identical bf16-at-MXU-boundary numerics; remaining diffs are the
    # approx EUP reciprocal and ulp-level transcendental differences (~1e-3).
    if not bool(jnp.allclose(logits, ref, rtol=2e-2, atol=2e-2)):
        raise AssertionError(f"Pallas output mismatch vs JAX reference, max_diff={max_diff}")
    print("KERNEL_OK")
</pallas_src>

<mosaic_0001>
module attributes {stable_mosaic.version = 11 : i64} {
  func.func @_transformer_kernel(%arg0: i32, %arg1: memref<8x64xf32, #tpu.memory_space<vmem>>, %arg2: memref<2x1x64xf32, #tpu.memory_space<vmem>>, %arg3: memref<2x1x64xf32, #tpu.memory_space<vmem>>, %arg4: memref<2x64x192xbf16, #tpu.memory_space<vmem>>, %arg5: memref<2x64x64xbf16, #tpu.memory_space<vmem>>, %arg6: memref<2x64x96xbf16, #tpu.memory_space<vmem>>, %arg7: memref<2x48x64xbf16, #tpu.memory_space<vmem>>, %arg8: memref<1x64xf32, #tpu.memory_space<vmem>>, %arg9: memref<64x256xbf16, #tpu.memory_space<vmem>>, %arg10: memref<8x16xf32, #tpu.memory_space<vmem>>, %arg11: memref<8x16xf32, #tpu.memory_space<vmem>>, %arg12: memref<8x256xf32, #tpu.memory_space<vmem>>) attributes {dimension_semantics = [#tpu.dimension_semantics<parallel>], iteration_bounds = array<i64: 2>, scalar_prefetch = 0 : i64, scratch_operands = 0 : i64, tpu.core_type = #tpu.core_type<tc>, window_params = [{transform_indices = @transform_0, window_bounds = array<i64: 8, 64>}, {pipeline_mode = #tpu.pipeline_mode<synchronous>, transform_indices = @transform_1, window_bounds = array<i64: 2, 1, 64>}, {pipeline_mode = #tpu.pipeline_mode<synchronous>, transform_indices = @transform_2, window_bounds = array<i64: 2, 1, 64>}, {pipeline_mode = #tpu.pipeline_mode<synchronous>, transform_indices = @transform_3, window_bounds = array<i64: 2, 64, 192>}, {pipeline_mode = #tpu.pipeline_mode<synchronous>, transform_indices = @transform_4, window_bounds = array<i64: 2, 64, 64>}, {pipeline_mode = #tpu.pipeline_mode<synchronous>, transform_indices = @transform_5, window_bounds = array<i64: 2, 64, 96>}, {pipeline_mode = #tpu.pipeline_mode<synchronous>, transform_indices = @transform_6, window_bounds = array<i64: 2, 48, 64>}, {pipeline_mode = #tpu.pipeline_mode<synchronous>, transform_indices = @transform_7, window_bounds = array<i64: 1, 64>}, {pipeline_mode = #tpu.pipeline_mode<synchronous>, transform_indices = @transform_8, window_bounds = array<i64: 64, 256>}, {pipeline_mode = #tpu.pipeline_mode<synchronous>, transform_indices = @transform_9, window_bounds = array<i64: 8, 16>}, {pipeline_mode = #tpu.pipeline_mode<synchronous>, transform_indices = @transform_10, window_bounds = array<i64: 8, 16>}, {transform_indices = @transform_11, window_bounds = array<i64: 8, 256>}]} {
    %c0 = arith.constant 0 : index
    %c0_0 = arith.constant 0 : index
    %0 = vector.load %arg10[%c0, %c0_0] : memref<8x16xf32, #tpu.memory_space<vmem>>, vector<8x16xf32>
    %1 = tpu.concatenate %0, %0, %0, %0, %0, %0, %0, %0 in 1 : vector<8x16xf32>, vector<8x16xf32>, vector<8x16xf32>, vector<8x16xf32>, vector<8x16xf32>, vector<8x16xf32>, vector<8x16xf32>, vector<8x16xf32> -> vector<8x128xf32>
    %c0_1 = arith.constant 0 : index
    %c0_2 = arith.constant 0 : index
    %2 = vector.load %arg11[%c0_1, %c0_2] : memref<8x16xf32, #tpu.memory_space<vmem>>, vector<8x16xf32>
    %3 = tpu.concatenate %2, %2, %2, %2, %2, %2, %2, %2 in 1 : vector<8x16xf32>, vector<8x16xf32>, vector<8x16xf32>, vector<8x16xf32>, vector<8x16xf32>, vector<8x16xf32>, vector<8x16xf32>, vector<8x16xf32> -> vector<8x128xf32>
    %4 = tpu.iota {dimensions = array<i32: 1>} : vector<8x128xi32>
    %c2_i32 = arith.constant 2 : i32
    %c0_i32 = arith.constant 0 : i32
    %5 = arith.cmpi eq, %c2_i32, %c0_i32 : i32
    %c1_i32 = arith.constant 1 : i32
    %6 = arith.select %5, %c1_i32, %c2_i32 : i32
    %7 = vector.broadcast %6 : i32 to vector<8x128xi32>
    %8 = arith.remsi %4, %7 : vector<8x128xi32>
    %c0_i32_3 = arith.constant 0 : i32
    %9 = vector.broadcast %c0_i32_3 : i32 to vector<8x128xi32>
    %10 = arith.cmpi ne, %8, %9 : vector<8x128xi32>
    %c0_i32_4 = arith.constant 0 : i32
    %11 = vector.broadcast %c0_i32_4 : i32 to vector<8x128xi32>
    %12 = arith.cmpi slt, %8, %11 : vector<8x128xi32>
    %c0_i32_5 = arith.constant 0 : i32
    %13 = arith.cmpi slt, %6, %c0_i32_5 : i32
    %14 = vector.broadcast %13 : i1 to vector<8x128xi1>
    %15 = vector.broadcast %14 : vector<8x128xi1> to vector<8x128xi1>
    %16 = arith.xori %12, %15 : vector<8x128xi1>
    %17 = arith.andi %16, %10 : vector<8x128xi1>
    %18 = vector.broadcast %6 : i32 to vector<8x128xi32>
    %19 = arith.addi %8, %18 : vector<8x128xi32>
    %20 = arith.select %17, %19, %8 : vector<8x128xi1>, vector<8x128xi32>
    %c0_i32_6 = arith.constant 0 : i32
    %21 = vector.broadcast %c0_i32_6 : i32 to vector<8x128xi32>
    %22 = arith.cmpi eq, %20, %21 : vector<8x128xi32>
    %23 = tpu.iota {dimensions = array<i32: 0>} : vector<8x8xi32>
    %24 = tpu.iota {dimensions = array<i32: 1>} : vector<8x8xi32>
    %25 = arith.cmpi sle, %24, %23 : vector<8x8xi32>
    %c0_7 = arith.constant 0 : index
    %c0_8 = arith.constant 0 : index
    %26 = vector.load %arg1[%c0_7, %c0_8] : memref<8x64xf32, #tpu.memory_space<vmem>>, vector<8x64xf32>
    %c0_9 = arith.constant 0 : index
    %c0_10 = arith.constant 0 : index
    %c0_11 = arith.constant 0 : index
    %27 = vector.load %arg2[%c0_9, %c0_10, %c0_11] : memref<2x1x64xf32, #tpu.memory_space<vmem>>, vector<1x1x64xf32>
    %28 = vector.shape_cast %27 : vector<1x1x64xf32> to vector<1x64xf32>
    %29 = arith.mulf %26, %26 : vector<8x64xf32>
    %cst = arith.constant dense<0.000000e+00> : vector<8xf32>
    %30 = vector.multi_reduction <add>, %29, %cst [1] : vector<8x64xf32> to vector<8xf32>
    %31 = vector.shape_cast %30 : vector<8xf32> to vector<8x1xf32>
    %cst_12 = arith.constant 6.400000e+01 : f32
    %32 = vector.broadcast %cst_12 : f32 to vector<8x1xf32>
    %33 = arith.divf %31, %32 : vector<8x1xf32>
    %cst_13 = arith.constant 9.99999974E-6 : f32
    %34 = vector.broadcast %cst_13 : f32 to vector<8x1xf32>
    %35 = arith.addf %33, %34 : vector<8x1xf32>
    %36 = math.rsqrt %35 : vector<8x1xf32>
    %37 = vector.broadcast %36 : vector<8x1xf32> to vector<8x64xf32>
    %38 = arith.mulf %26, %37 : vector<8x64xf32>
    %39 = vector.broadcast %28 : vector<1x64xf32> to vector<8x64xf32>
    %40 = arith.mulf %38, %39 : vector<8x64xf32>
    %c0_14 = arith.constant 0 : index
    %c0_15 = arith.constant 0 : index
    %c0_16 = arith.constant 0 : index
    %41 = vector.load %arg4[%c0_14, %c0_15, %c0_16] : memref<2x64x192xbf16, #tpu.memory_space<vmem>>, vector<1x64x192xbf16>
    %42 = vector.shape_cast %41 : vector<1x64x192xbf16> to vector<64x192xbf16>
    %43 = arith.truncf %40 : vector<8x64xf32> to vector<8x64xbf16>
    %cst_17 = arith.constant dense<0.000000e+00> : vector<8x192xf32>
    %44 = tpu.matmul %43, %42, %cst_17 {dimension_numbers = #tpu.dot_dimension_numbers<[1], [0], [0], [1], [0, 0, 1, 1], [], []>} : vector<8x64xbf16>, vector<64x192xbf16>, vector<8x192xf32> -> vector<8x192xf32>
    %45 = vector.extract_strided_slice %44 {offsets = [0, 0], sizes = [8, 128], strides = [1, 1]} : vector<8x192xf32> to vector<8x128xf32>
    %46 = vector.extract_strided_slice %44 {offsets = [0, 128], sizes = [8, 64], strides = [1, 1]} : vector<8x192xf32> to vector<8x64xf32>
    %c127_i32 = arith.constant 127 : i32
    %47 = tpu.dynamic_rotate %45 by %c127_i32 dim 1 : vector<8x128xf32>, i32 -> vector<8x128xf32>
    %c1_i32_18 = arith.constant 1 : i32
    %48 = tpu.dynamic_rotate %45 by %c1_i32_18 dim 1 : vector<8x128xf32>, i32 -> vector<8x128xf32>
    %49 = arith.select %22, %47, %48 : vector<8x128xi1>, vector<8x128xf32>
    %50 = arith.mulf %45, %1 : vector<8x128xf32>
    %51 = arith.mulf %49, %3 : vector<8x128xf32>
    %52 = arith.addf %50, %51 : vector<8x128xf32>
    %53 = vector.extract_strided_slice %52 {offsets = [0, 0], sizes = [8, 64], strides = [1, 1]} : vector<8x128xf32> to vector<8x64xf32>
    %54 = vector.shape_cast %53 : vector<8x64xf32> to vector<8x4x16xf32>
    %55 = tpu.transpose %54, [1, 0, 2] : vector<8x4x16xf32> -> vector<4x8x16xf32>
    %56 = vector.extract_strided_slice %52 {offsets = [0, 64], sizes = [8, 64], strides = [1, 1]} : vector<8x128xf32> to vector<8x64xf32>
    %57 = vector.shape_cast %56 : vector<8x64xf32> to vector<8x4x16xf32>
    %58 = tpu.transpose %57, [1, 0, 2] : vector<8x4x16xf32> -> vector<4x8x16xf32>
    %59 = vector.shape_cast %46 : vector<8x64xf32> to vector<8x4x16xf32>
    %60 = tpu.transpose %59, [1, 0, 2] : vector<8x4x16xf32> -> vector<4x8x16xf32>
    %61 = arith.truncf %55 : vector<4x8x16xf32> to vector<4x8x16xbf16>
    %62 = arith.truncf %58 : vector<4x8x16xf32> to vector<4x8x16xbf16>
    "tpu.trace_start"() <{level = 10 : i32, message = "hqd,hkd->hqk"}> : () -> ()
    %cst_19 = arith.constant dense<0.000000e+00> : vector<4x8x8xf32>
    %63 = tpu.matmul %61, %62, %cst_19 {dimension_numbers = #tpu.dot_dimension_numbers<[2], [2], [1], [1], [0, 0, 0, 1, 1, 1], [0], [0]>} : vector<4x8x16xbf16>, vector<4x8x16xbf16>, vector<4x8x8xf32> -> vector<4x8x8xf32>
    "tpu.trace_stop"() : () -> ()
    %64 = vector.shape_cast %25 : vector<8x8xi1> to vector<1x8x8xi1>
    %cst_20 = arith.constant 0xFF800000 : f32
    %65 = vector.shape_cast %64 : vector<1x8x8xi1> to vector<1x8x8xi1>
    %66 = vector.broadcast %65 : vector<1x8x8xi1> to vector<4x8x8xi1>
    %67 = vector.broadcast %cst_20 : f32 to vector<4x8x8xf32>
    %68 = arith.select %66, %63, %67 : vector<4x8x8xi1>, vector<4x8x8xf32>
    %cst_21 = arith.constant dense<0xFF800000> : vector<4x8xf32>
    %69 = vector.multi_reduction <maximumf>, %68, %cst_21 [2] : vector<4x8x8xf32> to vector<4x8xf32>
    %70 = vector.shape_cast %69 : vector<4x8xf32> to vector<4x8x1xf32>
    %71 = vector.broadcast %70 : vector<4x8x1xf32> to vector<4x8x8xf32>
    %72 = arith.subf %68, %71 : vector<4x8x8xf32>
    %73 = math.exp %72 : vector<4x8x8xf32>
    %cst_22 = arith.constant dense<0.000000e+00> : vector<4x8xf32>
    %74 = vector.multi_reduction <add>, %73, %cst_22 [2] : vector<4x8x8xf32> to vector<4x8xf32>
    %75 = vector.shape_cast %74 : vector<4x8xf32> to vector<4x8x1xf32>
    %76 = tpu.reciprocal %75 {approx = true} : vector<4x8x1xf32> -> vector<4x8x1xf32>
    %77 = vector.broadcast %76 : vector<4x8x1xf32> to vector<4x8x8xf32>
    %78 = arith.mulf %73, %77 : vector<4x8x8xf32>
    %79 = arith.truncf %78 : vector<4x8x8xf32> to vector<4x8x8xbf16>
    %80 = arith.truncf %60 : vector<4x8x16xf32> to vector<4x8x16xbf16>
    "tpu.trace_start"() <{level = 10 : i32, message = "hqk,hkd->hqd"}> : () -> ()
    %cst_23 = arith.constant dense<0.000000e+00> : vector<4x8x16xf32>
    %81 = tpu.matmul %79, %80, %cst_23 {dimension_numbers = #tpu.dot_dimension_numbers<[2], [1], [1], [2], [0, 0, 0, 1, 1, 2], [0], [0]>} : vector<4x8x8xbf16>, vector<4x8x16xbf16>, vector<4x8x16xf32> -> vector<4x8x16xf32>
    "tpu.trace_stop"() : () -> ()
    %82 = tpu.transpose %81, [1, 0, 2] : vector<4x8x16xf32> -> vector<8x4x16xf32>
    %83 = vector.shape_cast %82 : vector<8x4x16xf32> to vector<8x64xf32>
    %c0_24 = arith.constant 0 : index
    %c0_25 = arith.constant 0 : index
    %c0_26 = arith.constant 0 : index
    %84 = vector.load %arg5[%c0_24, %c0_25, %c0_26] : memref<2x64x64xbf16, #tpu.memory_space<vmem>>, vector<1x64x64xbf16>
    %85 = vector.shape_cast %84 : vector<1x64x64xbf16> to vector<64x64xbf16>
    %86 = arith.truncf %83 : vector<8x64xf32> to vector<8x64xbf16>
    %cst_27 = arith.constant dense<0.000000e+00> : vector<8x64xf32>
    %87 = tpu.matmul %86, %85, %cst_27 {dimension_numbers = #tpu.dot_dimension_numbers<[1], [0], [0], [1], [0, 0, 1, 1], [], []>} : vector<8x64xbf16>, vector<64x64xbf16>, vector<8x64xf32> -> vector<8x64xf32>
    %88 = arith.addf %26, %87 : vector<8x64xf32>
    %c0_28 = arith.constant 0 : index
    %c0_29 = arith.constant 0 : index
    %c0_30 = arith.constant 0 : index
    %89 = vector.load %arg3[%c0_28, %c0_29, %c0_30] : memref<2x1x64xf32, #tpu.memory_space<vmem>>, vector<1x1x64xf32>
    %90 = vector.shape_cast %89 : vector<1x1x64xf32> to vector<1x64xf32>
    %91 = arith.mulf %88, %88 : vector<8x64xf32>
    %cst_31 = arith.constant dense<0.000000e+00> : vector<8xf32>
    %92 = vector.multi_reduction <add>, %91, %cst_31 [1] : vector<8x64xf32> to vector<8xf32>
    %93 = vector.shape_cast %92 : vector<8xf32> to vector<8x1xf32>
    %cst_32 = arith.constant 6.400000e+01 : f32
    %94 = vector.broadcast %cst_32 : f32 to vector<8x1xf32>
    %95 = arith.divf %93, %94 : vector<8x1xf32>
    %cst_33 = arith.constant 9.99999974E-6 : f32
    %96 = vector.broadcast %cst_33 : f32 to vector<8x1xf32>
    %97 = arith.addf %95, %96 : vector<8x1xf32>
    %98 = math.rsqrt %97 : vector<8x1xf32>
    %99 = vector.broadcast %98 : vector<8x1xf32> to vector<8x64xf32>
    %100 = arith.mulf %88, %99 : vector<8x64xf32>
    %101 = vector.broadcast %90 : vector<1x64xf32> to vector<8x64xf32>
    %102 = arith.mulf %100, %101 : vector<8x64xf32>
    %c0_34 = arith.constant 0 : index
    %c0_35 = arith.constant 0 : index
    %c0_36 = arith.constant 0 : index
    %103 = vector.load %arg6[%c0_34, %c0_35, %c0_36] : memref<2x64x96xbf16, #tpu.memory_space<vmem>>, vector<1x64x96xbf16>
    %104 = vector.shape_cast %103 : vector<1x64x96xbf16> to vector<64x96xbf16>
    %105 = arith.truncf %102 : vector<8x64xf32> to vector<8x64xbf16>
    %cst_37 = arith.constant dense<0.000000e+00> : vector<8x96xf32>
    %106 = tpu.matmul %105, %104, %cst_37 {dimension_numbers = #tpu.dot_dimension_numbers<[1], [0], [0], [1], [0, 0, 1, 1], [], []>} : vector<8x64xbf16>, vector<64x96xbf16>, vector<8x96xf32> -> vector<8x96xf32>
    %107 = vector.extract_strided_slice %106 {offsets = [0, 0], sizes = [8, 48], strides = [1, 1]} : vector<8x96xf32> to vector<8x48xf32>
    %108 = vector.extract_strided_slice %106 {offsets = [0, 48], sizes = [8, 48], strides = [1, 1]} : vector<8x96xf32> to vector<8x48xf32>
    %109 = arith.negf %107 : vector<8x48xf32>
    %110 = math.exp %109 : vector<8x48xf32>
    %cst_38 = arith.constant 1.000000e+00 : f32
    %111 = vector.broadcast %cst_38 : f32 to vector<8x48xf32>
    %112 = arith.addf %111, %110 : vector<8x48xf32>
    %113 = arith.divf %111, %112 : vector<8x48xf32>
    %114 = arith.mulf %107, %113 : vector<8x48xf32>
    %115 = arith.mulf %114, %108 : vector<8x48xf32>
    %c0_39 = arith.constant 0 : index
    %c0_40 = arith.constant 0 : index
    %c0_41 = arith.constant 0 : index
    %116 = vector.load %arg7[%c0_39, %c0_40, %c0_41] : memref<2x48x64xbf16, #tpu.memory_space<vmem>>, vector<1x48x64xbf16>
    %117 = vector.shape_cast %116 : vector<1x48x64xbf16> to vector<48x64xbf16>
    %118 = arith.truncf %115 : vector<8x48xf32> to vector<8x48xbf16>
    %cst_42 = arith.constant dense<0.000000e+00> : vector<8x64xf32>
    %119 = tpu.matmul %118, %117, %cst_42 {dimension_numbers = #tpu.dot_dimension_numbers<[1], [0], [0], [1], [0, 0, 1, 1], [], []>} : vector<8x48xbf16>, vector<48x64xbf16>, vector<8x64xf32> -> vector<8x64xf32>
    %120 = arith.addf %88, %119 : vector<8x64xf32>
    %c1 = arith.constant 1 : index
    %c0_43 = arith.constant 0 : index
    %c0_44 = arith.constant 0 : index
    %121 = vector.load %arg2[%c1, %c0_43, %c0_44] : memref<2x1x64xf32, #tpu.memory_space<vmem>>, vector<1x1x64xf32>
    %122 = vector.shape_cast %121 : vector<1x1x64xf32> to vector<1x64xf32>
    %123 = arith.mulf %120, %120 : vector<8x64xf32>
    %cst_45 = arith.constant dense<0.000000e+00> : vector<8xf32>
    %124 = vector.multi_reduction <add>, %123, %cst_45 [1] : vector<8x64xf32> to vector<8xf32>
    %125 = vector.shape_cast %124 : vector<8xf32> to vector<8x1xf32>
    %cst_46 = arith.constant 6.400000e+01 : f32
    %126 = vector.broadcast %cst_46 : f32 to vector<8x1xf32>
    %127 = arith.divf %125, %126 : vector<8x1xf32>
    %cst_47 = arith.constant 9.99999974E-6 : f32
    %128 = vector.broadcast %cst_47 : f32 to vector<8x1xf32>
    %129 = arith.addf %127, %128 : vector<8x1xf32>
    %130 = math.rsqrt %129 : vector<8x1xf32>
    %131 = vector.broadcast %130 : vector<8x1xf32> to vector<8x64xf32>
    %132 = arith.mulf %120, %131 : vector<8x64xf32>
    %133 = vector.broadcast %122 : vector<1x64xf32> to vector<8x64xf32>
    %134 = arith.mulf %132, %133 : vector<8x64xf32>
    %c1_48 = arith.constant 1 : index
    %c0_49 = arith.constant 0 : index
    %c0_50 = arith.constant 0 : index
    %135 = vector.load %arg4[%c1_48, %c0_49, %c0_50] : memref<2x64x192xbf16, #tpu.memory_space<vmem>>, vector<1x64x192xbf16>
    %136 = vector.shape_cast %135 : vector<1x64x192xbf16> to vector<64x192xbf16>
    %137 = arith.truncf %134 : vector<8x64xf32> to vector<8x64xbf16>
    %cst_51 = arith.constant dense<0.000000e+00> : vector<8x192xf32>
    %138 = tpu.matmul %137, %136, %cst_51 {dimension_numbers = #tpu.dot_dimension_numbers<[1], [0], [0], [1], [0, 0, 1, 1], [], []>} : vector<8x64xbf16>, vector<64x192xbf16>, vector<8x192xf32> -> vector<8x192xf32>
    %139 = vector.extract_strided_slice %138 {offsets = [0, 0], sizes = [8, 128], strides = [1, 1]} : vector<8x192xf32> to vector<8x128xf32>
    %140 = vector.extract_strided_slice %138 {offsets = [0, 128], sizes = [8, 64], strides = [1, 1]} : vector<8x192xf32> to vector<8x64xf32>
    %c127_i32_52 = arith.constant 127 : i32
    %141 = tpu.dynamic_rotate %139 by %c127_i32_52 dim 1 : vector<8x128xf32>, i32 -> vector<8x128xf32>
    %c1_i32_53 = arith.constant 1 : i32
    %142 = tpu.dynamic_rotate %139 by %c1_i32_53 dim 1 : vector<8x128xf32>, i32 -> vector<8x128xf32>
    %143 = arith.select %22, %141, %142 : vector<8x128xi1>, vector<8x128xf32>
    %144 = arith.mulf %139, %1 : vector<8x128xf32>
    %145 = arith.mulf %143, %3 : vector<8x128xf32>
    %146 = arith.addf %144, %145 : vector<8x128xf32>
    %147 = vector.extract_strided_slice %146 {offsets = [0, 0], sizes = [8, 64], strides = [1, 1]} : vector<8x128xf32> to vector<8x64xf32>
    %148 = vector.shape_cast %147 : vector<8x64xf32> to vector<8x4x16xf32>
    %149 = tpu.transpose %148, [1, 0, 2] : vector<8x4x16xf32> -> vector<4x8x16xf32>
    %150 = vector.extract_strided_slice %146 {offsets = [0, 64], sizes = [8, 64], strides = [1, 1]} : vector<8x128xf32> to vector<8x64xf32>
    %151 = vector.shape_cast %150 : vector<8x64xf32> to vector<8x4x16xf32>
    %152 = tpu.transpose %151, [1, 0, 2] : vector<8x4x16xf32> -> vector<4x8x16xf32>
    %153 = vector.shape_cast %140 : vector<8x64xf32> to vector<8x4x16xf32>
    %154 = tpu.transpose %153, [1, 0, 2] : vector<8x4x16xf32> -> vector<4x8x16xf32>
    %155 = arith.truncf %149 : vector<4x8x16xf32> to vector<4x8x16xbf16>
    %156 = arith.truncf %152 : vector<4x8x16xf32> to vector<4x8x16xbf16>
    "tpu.trace_start"() <{level = 10 : i32, message = "hqd,hkd->hqk"}> : () -> ()
    %cst_54 = arith.constant dense<0.000000e+00> : vector<4x8x8xf32>
    %157 = tpu.matmul %155, %156, %cst_54 {dimension_numbers = #tpu.dot_dimension_numbers<[2], [2], [1], [1], [0, 0, 0, 1, 1, 1], [0], [0]>} : vector<4x8x16xbf16>, vector<4x8x16xbf16>, vector<4x8x8xf32> -> vector<4x8x8xf32>
    "tpu.trace_stop"() : () -> ()
    %158 = vector.shape_cast %25 : vector<8x8xi1> to vector<1x8x8xi1>
    %cst_55 = arith.constant 0xFF800000 : f32
    %159 = vector.shape_cast %158 : vector<1x8x8xi1> to vector<1x8x8xi1>
    %160 = vector.broadcast %159 : vector<1x8x8xi1> to vector<4x8x8xi1>
    %161 = vector.broadcast %cst_55 : f32 to vector<4x8x8xf32>
    %162 = arith.select %160, %157, %161 : vector<4x8x8xi1>, vector<4x8x8xf32>
    %cst_56 = arith.constant dense<0xFF800000> : vector<4x8xf32>
    %163 = vector.multi_reduction <maximumf>, %162, %cst_56 [2] : vector<4x8x8xf32> to vector<4x8xf32>
    %164 = vector.shape_cast %163 : vector<4x8xf32> to vector<4x8x1xf32>
    %165 = vector.broadcast %164 : vector<4x8x1xf32> to vector<4x8x8xf32>
    %166 = arith.subf %162, %165 : vector<4x8x8xf32>
    %167 = math.exp %166 : vector<4x8x8xf32>
    %cst_57 = arith.constant dense<0.000000e+00> : vector<4x8xf32>
    %168 = vector.multi_reduction <add>, %167, %cst_57 [2] : vector<4x8x8xf32> to vector<4x8xf32>
    %169 = vector.shape_cast %168 : vector<4x8xf32> to vector<4x8x1xf32>
    %170 = tpu.reciprocal %169 {approx = true} : vector<4x8x1xf32> -> vector<4x8x1xf32>
    %171 = vector.broadcast %170 : vector<4x8x1xf32> to vector<4x8x8xf32>
    %172 = arith.mulf %167, %171 : vector<4x8x8xf32>
    %173 = arith.truncf %172 : vector<4x8x8xf32> to vector<4x8x8xbf16>
    %174 = arith.truncf %154 : vector<4x8x16xf32> to vector<4x8x16xbf16>
    "tpu.trace_start"() <{level = 10 : i32, message = "hqk,hkd->hqd"}> : () -> ()
    %cst_58 = arith.constant dense<0.000000e+00> : vector<4x8x16xf32>
    %175 = tpu.matmul %173, %174, %cst_58 {dimension_numbers = #tpu.dot_dimension_numbers<[2], [1], [1], [2], [0, 0, 0, 1, 1, 2], [0], [0]>} : vector<4x8x8xbf16>, vector<4x8x16xbf16>, vector<4x8x16xf32> -> vector<4x8x16xf32>
    "tpu.trace_stop"() : () -> ()
    %176 = tpu.transpose %175, [1, 0, 2] : vector<4x8x16xf32> -> vector<8x4x16xf32>
    %177 = vector.shape_cast %176 : vector<8x4x16xf32> to vector<8x64xf32>
    %c1_59 = arith.constant 1 : index
    %c0_60 = arith.constant 0 : index
    %c0_61 = arith.constant 0 : index
    %178 = vector.load %arg5[%c1_59, %c0_60, %c0_61] : memref<2x64x64xbf16, #tpu.memory_space<vmem>>, vector<1x64x64xbf16>
    %179 = vector.shape_cast %178 : vector<1x64x64xbf16> to vector<64x64xbf16>
    %180 = arith.truncf %177 : vector<8x64xf32> to vector<8x64xbf16>
    %cst_62 = arith.constant dense<0.000000e+00> : vector<8x64xf32>
    %181 = tpu.matmul %180, %179, %cst_62 {dimension_numbers = #tpu.dot_dimension_numbers<[1], [0], [0], [1], [0, 0, 1, 1], [], []>} : vector<8x64xbf16>, vector<64x64xbf16>, vector<8x64xf32> -> vector<8x64xf32>
    %182 = arith.addf %120, %181 : vector<8x64xf32>
    %c1_63 = arith.constant 1 : index
    %c0_64 = arith.constant 0 : index
    %c0_65 = arith.constant 0 : index
    %183 = vector.load %arg3[%c1_63, %c0_64, %c0_65] : memref<2x1x64xf32, #tpu.memory_space<vmem>>, vector<1x1x64xf32>
    %184 = vector.shape_cast %183 : vector<1x1x64xf32> to vector<1x64xf32>
    %185 = arith.mulf %182, %182 : vector<8x64xf32>
    %cst_66 = arith.constant dense<0.000000e+00> : vector<8xf32>
    %186 = vector.multi_reduction <add>, %185, %cst_66 [1] : vector<8x64xf32> to vector<8xf32>
    %187 = vector.shape_cast %186 : vector<8xf32> to vector<8x1xf32>
    %cst_67 = arith.constant 6.400000e+01 : f32
    %188 = vector.broadcast %cst_67 : f32 to vector<8x1xf32>
    %189 = arith.divf %187, %188 : vector<8x1xf32>
    %cst_68 = arith.constant 9.99999974E-6 : f32
    %190 = vector.broadcast %cst_68 : f32 to vector<8x1xf32>
    %191 = arith.addf %189, %190 : vector<8x1xf32>
    %192 = math.rsqrt %191 : vector<8x1xf32>
    %193 = vector.broadcast %192 : vector<8x1xf32> to vector<8x64xf32>
    %194 = arith.mulf %182, %193 : vector<8x64xf32>
    %195 = vector.broadcast %184 : vector<1x64xf32> to vector<8x64xf32>
    %196 = arith.mulf %194, %195 : vector<8x64xf32>
    %c1_69 = arith.constant 1 : index
    %c0_70 = arith.constant 0 : index
    %c0_71 = arith.constant 0 : index
    %197 = vector.load %arg6[%c1_69, %c0_70, %c0_71] : memref<2x64x96xbf16, #tpu.memory_space<vmem>>, vector<1x64x96xbf16>
    %198 = vector.shape_cast %197 : vector<1x64x96xbf16> to vector<64x96xbf16>
    %199 = arith.truncf %196 : vector<8x64xf32> to vector<8x64xbf16>
    %cst_72 = arith.constant dense<0.000000e+00> : vector<8x96xf32>
    %200 = tpu.matmul %199, %198, %cst_72 {dimension_numbers = #tpu.dot_dimension_numbers<[1], [0], [0], [1], [0, 0, 1, 1], [], []>} : vector<8x64xbf16>, vector<64x96xbf16>, vector<8x96xf32> -> vector<8x96xf32>
    %201 = vector.extract_strided_slice %200 {offsets = [0, 0], sizes = [8, 48], strides = [1, 1]} : vector<8x96xf32> to vector<8x48xf32>
    %202 = vector.extract_strided_slice %200 {offsets = [0, 48], sizes = [8, 48], strides = [1, 1]} : vector<8x96xf32> to vector<8x48xf32>
    %203 = arith.negf %201 : vector<8x48xf32>
    %204 = math.exp %203 : vector<8x48xf32>
    %cst_73 = arith.constant 1.000000e+00 : f32
    %205 = vector.broadcast %cst_73 : f32 to vector<8x48xf32>
    %206 = arith.addf %205, %204 : vector<8x48xf32>
    %207 = arith.divf %205, %206 : vector<8x48xf32>
    %208 = arith.mulf %201, %207 : vector<8x48xf32>
    %209 = arith.mulf %208, %202 : vector<8x48xf32>
    %c1_74 = arith.constant 1 : index
    %c0_75 = arith.constant 0 : index
    %c0_76 = arith.constant 0 : index
    %210 = vector.load %arg7[%c1_74, %c0_75, %c0_76] : memref<2x48x64xbf16, #tpu.memory_space<vmem>>, vector<1x48x64xbf16>
    %211 = vector.shape_cast %210 : vector<1x48x64xbf16> to vector<48x64xbf16>
    %212 = arith.truncf %209 : vector<8x48xf32> to vector<8x48xbf16>
    %cst_77 = arith.constant dense<0.000000e+00> : vector<8x64xf32>
    %213 = tpu.matmul %212, %211, %cst_77 {dimension_numbers = #tpu.dot_dimension_numbers<[1], [0], [0], [1], [0, 0, 1, 1], [], []>} : vector<8x48xbf16>, vector<48x64xbf16>, vector<8x64xf32> -> vector<8x64xf32>
    %214 = arith.addf %182, %213 : vector<8x64xf32>
    %c0_78 = arith.constant 0 : index
    %c0_79 = arith.constant 0 : index
    %215 = vector.load %arg8[%c0_78, %c0_79] : memref<1x64xf32, #tpu.memory_space<vmem>>, vector<1x64xf32>
    %216 = arith.mulf %214, %214 : vector<8x64xf32>
    %cst_80 = arith.constant dense<0.000000e+00> : vector<8xf32>
    %217 = vector.multi_reduction <add>, %216, %cst_80 [1] : vector<8x64xf32> to vector<8xf32>
    %218 = vector.shape_cast %217 : vector<8xf32> to vector<8x1xf32>
    %cst_81 = arith.constant 6.400000e+01 : f32
    %219 = vector.broadcast %cst_81 : f32 to vector<8x1xf32>
    %220 = arith.divf %218, %219 : vector<8x1xf32>
    %cst_82 = arith.constant 9.99999974E-6 : f32
    %221 = vector.broadcast %cst_82 : f32 to vector<8x1xf32>
    %222 = arith.addf %220, %221 : vector<8x1xf32>
    %223 = math.rsqrt %222 : vector<8x1xf32>
    %224 = vector.broadcast %223 : vector<8x1xf32> to vector<8x64xf32>
    %225 = arith.mulf %214, %224 : vector<8x64xf32>
    %226 = vector.broadcast %215 : vector<1x64xf32> to vector<8x64xf32>
    %227 = arith.mulf %225, %226 : vector<8x64xf32>
    %c0_83 = arith.constant 0 : index
    %c0_84 = arith.constant 0 : index
    %228 = vector.load %arg9[%c0_83, %c0_84] : memref<64x256xbf16, #tpu.memory_space<vmem>>, vector<64x256xbf16>
    %229 = arith.truncf %227 : vector<8x64xf32> to vector<8x64xbf16>
    %cst_85 = arith.constant dense<0.000000e+00> : vector<8x256xf32>
    %230 = tpu.matmul %229, %228, %cst_85 {dimension_numbers = #tpu.dot_dimension_numbers<[1], [0], [0], [1], [0, 0, 1, 1], [], []>} : vector<8x64xbf16>, vector<64x256xbf16>, vector<8x256xf32> -> vector<8x256xf32>
    %c0_86 = arith.constant 0 : index
    %c0_87 = arith.constant 0 : index
    %231 = vector.load %arg12[%c0_86, %c0_87] : memref<8x256xf32, #tpu.memory_space<vmem>>, vector<8x256xf32>
    tpu.vector_store %arg12[%c0_86, %c0_87], %230 {strides = array<i32>} : memref<8x256xf32, #tpu.memory_space<vmem>>, vector<8x256xf32>,
    return
  }
  func.func @transform_0(%arg0: i32) -> (i32, i32) {
    %c0_i32 = arith.constant 0 : i32
    %c0_i32_0 = arith.constant 0 : i32
    return %arg0, %c0_i32 : i32, i32
  }
  func.func @transform_1(%arg0: i32) -> (i32, i32, i32) {
    %c0_i32 = arith.constant 0 : i32
    %c0_i32_0 = arith.constant 0 : i32
    %c0_i32_1 = arith.constant 0 : i32
    %c0_i32_2 = arith.constant 0 : i32
    return %c0_i32, %c0_i32_0, %c0_i32_1 : i32, i32, i32
  }
  func.func @transform_2(%arg0: i32) -> (i32, i32, i32) {
    %c0_i32 = arith.constant 0 : i32
    %c0_i32_0 = arith.constant 0 : i32
    %c0_i32_1 = arith.constant 0 : i32
    %c0_i32_2 = arith.constant 0 : i32
    return %c0_i32, %c0_i32_0, %c0_i32_1 : i32, i32, i32
  }
  func.func @transform_3(%arg0: i32) -> (i32, i32, i32) {
    %c0_i32 = arith.constant 0 : i32
    %c0_i32_0 = arith.constant 0 : i32
    %c0_i32_1 = arith.constant 0 : i32
    %c0_i32_2 = arith.constant 0 : i32
    return %c0_i32, %c0_i32_0, %c0_i32_1 : i32, i32, i32
  }
  func.func @transform_4(%arg0: i32) -> (i32, i32, i32) {
    %c0_i32 = arith.constant 0 : i32
    %c0_i32_0 = arith.constant 0 : i32
    %c0_i32_1 = arith.constant 0 : i32
    %c0_i32_2 = arith.constant 0 : i32
    return %c0_i32, %c0_i32_0, %c0_i32_1 : i32, i32, i32
  }
  func.func @transform_5(%arg0: i32) -> (i32, i32, i32) {
    %c0_i32 = arith.constant 0 : i32
    %c0_i32_0 = arith.constant 0 : i32
    %c0_i32_1 = arith.constant 0 : i32
    %c0_i32_2 = arith.constant 0 : i32
    return %c0_i32, %c0_i32_0, %c0_i32_1 : i32, i32, i32
  }
  func.func @transform_6(%arg0: i32) -> (i32, i32, i32) {
    %c0_i32 = arith.constant 0 : i32
    %c0_i32_0 = arith.constant 0 : i32
    %c0_i32_1 = arith.constant 0 : i32
    %c0_i32_2 = arith.constant 0 : i32
    return %c0_i32, %c0_i32_0, %c0_i32_1 : i32, i32, i32
  }
  func.func @transform_7(%arg0: i32) -> (i32, i32) {
    %c0_i32 = arith.constant 0 : i32
    %c0_i32_0 = arith.constant 0 : i32
    %c0_i32_1 = arith.constant 0 : i32
    return %c0_i32, %c0_i32_0 : i32, i32
  }
  func.func @transform_8(%arg0: i32) -> (i32, i32) {
    %c0_i32 = arith.constant 0 : i32
    %c0_i32_0 = arith.constant 0 : i32
    %c0_i32_1 = arith.constant 0 : i32
    return %c0_i32, %c0_i32_0 : i32, i32
  }
  func.func @transform_9(%arg0: i32) -> (i32, i32) {
    %c0_i32 = arith.constant 0 : i32
    %c0_i32_0 = arith.constant 0 : i32
    %c0_i32_1 = arith.constant 0 : i32
    return %c0_i32, %c0_i32_0 : i32, i32
  }
  func.func @transform_10(%arg0: i32) -> (i32, i32) {
    %c0_i32 = arith.constant 0 : i32
    %c0_i32_0 = arith.constant 0 : i32
    %c0_i32_1 = arith.constant 0 : i32
    return %c0_i32, %c0_i32_0 : i32, i32
  }
  func.func @transform_11(%arg0: i32) -> (i32, i32) {
    %c0_i32 = arith.constant 0 : i32
    %c0_i32_0 = arith.constant 0 : i32
    return %arg0, %c0_i32 : i32, i32
  }
}

</mosaic_0001>

<llo_original>
// kernel: tpu_custom_call.1
$region0: #{tpu_custom_call.1}
  #allocation0 [shape = 'u32[]', space=smem, size = 0x4, offset = 0x4, fixed_abs, tag = 'smem constant byte address 0x4 - core index']
  #allocation1 [shape = 'u32[144,128]{1,0:T(1,128)}', space=vmem, size = 0x12000, scoped, tag = 'internal scratch']
  %s0 = inlined_call_operand.hbm [shape: f32[16,64], index: 0, kind: input, shape index: {}]
  %s1 = inlined_call_operand.vmem [shape: f32[2,1,64], index: 1, kind: input, shape index: {}]
  %s2 = inlined_call_operand.hbm [shape: f32[2,1,64], index: 2, kind: input, shape index: {}]
  %s3 = inlined_call_operand.hbm [shape: bf16[2,64,192], index: 3, kind: input, shape index: {}]
  %s4 = inlined_call_operand.hbm [shape: bf16[2,64,64], index: 4, kind: input, shape index: {}]
  %s5 = inlined_call_operand.hbm [shape: bf16[2,64,96], index: 5, kind: input, shape index: {}]
  %s6 = inlined_call_operand.hbm [shape: bf16[2,48,64], index: 6, kind: input, shape index: {}]
  %s7 = inlined_call_operand.vmem [shape: f32[1,64], index: 7, kind: input, shape index: {}]
  %s8 = inlined_call_operand.hbm [shape: bf16[64,256], index: 8, kind: input, shape index: {}]
  %s9 = inlined_call_operand.vmem [shape: f32[8,16], index: 9, kind: input, shape index: {}]
  %s10 = inlined_call_operand.vmem [shape: f32[8,16], index: 10, kind: input, shape index: {}]
  %s11 = inlined_call_operand.hbm [shape: f32[16,256], index: 11, kind: output, shape index: {}]
  %s12 = sld [smem:[#allocation0]]
  $region105: #{tpu_custom_call.1} parent=0
    _
  %s14 = ssub.s32 1, %s12
  %s15 = scalar_select 0, %s14, %s12
  $region1: #{tpu_custom_call.1} parent=0
    #allocation2 [shape = 'u8[8192]{0}', space=vmem, size = 0x2000, scoped, tag = 'input window, operand 0']
    #allocation3 [shape = 's32[2]{0}', space=sflag, size = 0x8, scoped, tag = 'scoped memory for tpu_custom_call.1']
    #allocation4 [shape = 's32[2]{0}', space=sflag, size = 0x8, scoped, tag = 'scoped memory for tpu_custom_call.1']
    #allocation5 [shape = 'u8[1024]{0}', space=vmem, size = 0x400, scoped, tag = 'input window, operand 2, single buffered']
    #allocation6 [shape = 's32[1]{0}', space=sflag, size = 0x4, scoped, tag = 'scoped memory for tpu_custom_call.1']
    #allocation7 [shape = 'u8[65536]{0}', space=vmem, size = 0x10000, scoped, tag = 'input window, operand 3, single buffered']
    #allocation8 [shape = 'u8[32768]{0}', space=vmem, size = 0x8000, scoped, tag = 'input window, operand 4, single buffered']
    #allocation9 [shape = 's32[1]{0}', space=sflag, size = 0x4, scoped, tag = 'scoped memory for tpu_custom_call.1']
    #allocation10 [shape = 'u8[32768]{0}', space=vmem, size = 0x8000, scoped, tag = 'input window, operand 5, single buffered']
    #allocation11 [shape = 'u8[24576]{0}', space=vmem, size = 0x6000, scoped, tag = 'input window, operand 6, single buffered']
    #allocation12 [shape = 's32[1]{0}', space=sflag, size = 0x4, scoped, tag = 'scoped memory for tpu_custom_call.1']
    #allocation13 [shape = 'u8[32768]{0}', space=vmem, size = 0x8000, scoped, tag = 'input window, operand 8, single buffered']
    #allocation14 [shape = 'u8[16384]{0}', space=vmem, size = 0x4000, scoped, tag = 'output window, operand 0']
    %16 = vsyncpa [#allocation3], 0
    %s17 = scalar_lea.sflag [#allocation3], 1
    %18 = vsyncpa %s17, 0
    %19 = vsyncpa [#allocation6], 0
    %20 = vsyncpa [#allocation9], 0
    %21 = vsyncpa [#allocation12], 0
    %22 = vsyncpa [#allocation4], 0
    %s23 = scalar_lea.sflag [#allocation4], 1
    %24 = vsyncpa %s23, 0
    loop: start=0, step=1, limit=4
    $region2: #{tpu_custom_call.1} parent=1 // loop_pre_header
      _
    $region3: #{tpu_custom_call.1} parent=1 // loop_header
      %s26 = sphi 0, %s30
      %p27 = scmp.ge.s32.totalorder %s26, 4
      %s36 = sphi 0, %s38
      %s39 = sphi 0, %s36
      %s40 = sphi 0, %s39
      %s56 = sphi 0, %s40
      %s60 = sphi 0, %s60
      %s62 = sphi 0, %s60
      %s63 = sphi 0, %s62
      %s77 = sphi 0, %s63
      %s81 = sphi 0, %s81
      %s83 = sphi 0, %s81
      %s84 = sphi 0, %s83
      %s98 = sphi 0, %s84
      %s102 = sphi 0, %s102
      %s104 = sphi 0, %s102
      %s105 = sphi 0, %s104
      %s119 = sphi 0, %s105
      %s123 = sphi 0, %s123
      %s125 = sphi 0, %s123
      %s126 = sphi 0, %s125
      %s140 = sphi 0, %s126
      %s144 = sphi 0, %s144
      %s146 = sphi 0, %s144
      %s147 = sphi 0, %s146
      %s161 = sphi 0, %s147
      %s165 = sphi 0, %s165
      %s167 = sphi 0, %s165
      %s168 = sphi 0, %s167
      %s182 = sphi 0, %s168
      %s186 = sphi 0, %s186
      %s188 = sphi 0, %s186
      %s189 = sphi 0, %s188
      %s203 = sphi 0, %s189
      %s207 = sphi 0, %s207
      %s209 = sphi 0, %s207
      %s210 = sphi 0, %s209
      %s224 = sphi 0, %s210
      %s228 = sphi 0, %s228
      %s230 = sphi 0, %s228
      %s231 = sphi 0, %s230
      %s245 = sphi 0, %s231
      %s249 = sphi 0, %s249
      %s251 = sphi 0, %s249
      %s252 = sphi 0, %s251
      %s266 = sphi 0, %s252
      %s272 = sphi 0, %s274
      %s275 = sphi 0, %s272
      %s276 = sphi 0, %s275
      %s292 = sphi 0, %s276
    $region4: #{tpu_custom_call.1} parent=1 // loop_header_branch
      %29 = sbr.rel (%p27) target = $region8
    $region5: #{tpu_custom_call.1} parent=1 // loop_body
      %s31 = ssub.s32 %s26, 1
      %s32 = ssub.s32 %s26, 2
      %s33 = sadd.s32 %s26, 1
      %s34 = ssub.s32 %s26, %s33
      %p35 = scmp.eq.s32.totalorder %s34, 0
      %s37 = sadd.s32 %s36, 1
      %s38 = scalar_select %p35, %s36, %s37
      %p41 = pneg %p35
      %p42 = scmp.eq.s32.totalorder %s26, 1
      %p43 = por %p41, %p42
      %p44 = scmp.ne.s32.totalorder %s36, %s39
      %p45 = scmp.eq.s32.totalorder %s26, 0
      %p46 = por %p44, %p45
      %p47 = scmp.ne.s32.totalorder %s36, %s39
      %p48 = scmp.eq.s32.totalorder %s31, 1
      %p49 = por %p47, %p48
      %p50 = scmp.ne.s32.totalorder %s39, %s40
      %p51 = scmp.eq.s32.totalorder %s31, 0
      %p52 = por %p50, %p51
      %p53 = scmp.ne.s32.totalorder %s39, %s40
      %p54 = scmp.eq.s32.totalorder %s32, 1
      %p55 = por %p53, %p54
      %p57 = scmp.ne.s32.totalorder %s40, %s56
      %p58 = scmp.eq.s32.totalorder %s32, 0
      %p59 = por %p57, %p58
      %s61 = sadd.s32 %s60, 1
      %p64 = scmp.eq.s32.totalorder %s26, 1
      %p65 = scmp.ne.s32.totalorder %s60, %s62
      %p66 = scmp.eq.s32.totalorder %s26, 0
      %p67 = por %p65, %p66
      %p68 = scmp.ne.s32.totalorder %s60, %s62
      %p69 = scmp.eq.s32.totalorder %s31, 1
      %p70 = por %p68, %p69
      %p71 = scmp.ne.s32.totalorder %s62, %s63
      %p72 = scmp.eq.s32.totalorder %s31, 0
      %p73 = por %p71, %p72
      %p74 = scmp.ne.s32.totalorder %s62, %s63
      %p75 = scmp.eq.s32.totalorder %s32, 1
      %p76 = por %p74, %p75
      %p78 = scmp.ne.s32.totalorder %s63, %s77
      %p79 = scmp.eq.s32.totalorder %s32, 0
      %p80 = por %p78, %p79
      %s82 = sadd.s32 %s81, 1
      %p85 = scmp.eq.s32.totalorder %s26, 1
      %p86 = scmp.ne.s32.totalorder %s81, %s83
      %p87 = scmp.eq.s32.totalorder %s26, 0
      %p88 = por %p86, %p87
      %p89 = scmp.ne.s32.totalorder %s81, %s83
      %p90 = scmp.eq.s32.totalorder %s31, 1
      %p91 = por %p89, %p90
      %p92 = scmp.ne.s32.totalorder %s83, %s84
      %p93 = scmp.eq.s32.totalorder %s31, 0
      %p94 = por %p92, %p93
      %p95 = scmp.ne.s32.totalorder %s83, %s84
      %p96 = scmp.eq.s32.totalorder %s32, 1
      %p97 = por %p95, %p96
      %p99 = scmp.ne.s32.totalorder %s84, %s98
      %p100 = scmp.eq.s32.totalorder %s32, 0
      %p101 = por %p99, %p100
      %s103 = sadd.s32 %s102, 1
      %p106 = scmp.eq.s32.totalorder %s26, 1
      %p107 = scmp.ne.s32.totalorder %s102, %s104
      %p108 = scmp.eq.s32.totalorder %s26, 0
      %p109 = por %p107, %p108
      %p110 = scmp.ne.s32.totalorder %s102, %s104
      %p111 = scmp.eq.s32.totalorder %s31, 1
      %p112 = por %p110, %p111
      %p113 = scmp.ne.s32.totalorder %s104, %s105
      %p114 = scmp.eq.s32.totalorder %s31, 0
      %p115 = por %p113, %p114
      %p116 = scmp.ne.s32.totalorder %s104, %s105
      %p117 = scmp.eq.s32.totalorder %s32, 1
      %p118 = por %p116, %p117
      %p120 = scmp.ne.s32.totalorder %s105, %s119
      %p121 = scmp.eq.s32.totalorder %s32, 0
      %p122 = por %p120, %p121
      %s124 = sadd.s32 %s123, 1
      %p127 = scmp.eq.s32.totalorder %s26, 1
      %p128 = scmp.ne.s32.totalorder %s123, %s125
      %p129 = scmp.eq.s32.totalorder %s26, 0
      %p130 = por %p128, %p129
      %p131 = scmp.ne.s32.totalorder %s123, %s125
      %p132 = scmp.eq.s32.totalorder %s31, 1
      %p133 = por %p131, %p132
      %p134 = scmp.ne.s32.totalorder %s125, %s126
      %p135 = scmp.eq.s32.totalorder %s31, 0
      %p136 = por %p134, %p135
      %p137 = scmp.ne.s32.totalorder %s125, %s126
      %p138 = scmp.eq.s32.totalorder %s32, 1
      %p139 = por %p137, %p138
      %p141 = scmp.ne.s32.totalorder %s126, %s140
      %p142 = scmp.eq.s32.totalorder %s32, 0
      %p143 = por %p141, %p142
      %s145 = sadd.s32 %s144, 1
      %p148 = scmp.eq.s32.totalorder %s26, 1
      %p149 = scmp.ne.s32.totalorder %s144, %s146
      %p150 = scmp.eq.s32.totalorder %s26, 0
      %p151 = por %p149, %p150
      %p152 = scmp.ne.s32.totalorder %s144, %s146
      %p153 = scmp.eq.s32.totalorder %s31, 1
      %p154 = por %p152, %p153
      %p155 = scmp.ne.s32.totalorder %s146, %s147
      %p156 = scmp.eq.s32.totalorder %s31, 0
      %p157 = por %p155, %p156
      %p158 = scmp.ne.s32.totalorder %s146, %s147
      %p159 = scmp.eq.s32.totalorder %s32, 1
      %p160 = por %p158, %p159
      %p162 = scmp.ne.s32.totalorder %s147, %s161
      %p163 = scmp.eq.s32.totalorder %s32, 0
      %p164 = por %p162, %p163
      %s166 = sadd.s32 %s165, 1
      %p169 = scmp.eq.s32.totalorder %s26, 1
      %p170 = scmp.ne.s32.totalorder %s165, %s167
      %p171 = scmp.eq.s32.totalorder %s26, 0
      %p172 = por %p170, %p171
      %p173 = scmp.ne.s32.totalorder %s165, %s167
      %p174 = scmp.eq.s32.totalorder %s31, 1
      %p175 = por %p173, %p174
      %p176 = scmp.ne.s32.totalorder %s167, %s168
      %p177 = scmp.eq.s32.totalorder %s31, 0
      %p178 = por %p176, %p177
      %p179 = scmp.ne.s32.totalorder %s167, %s168
      %p180 = scmp.eq.s32.totalorder %s32, 1
      %p181 = por %p179, %p180
      %p183 = scmp.ne.s32.totalorder %s168, %s182
      %p184 = scmp.eq.s32.totalorder %s32, 0
      %p185 = por %p183, %p184
      %s187 = sadd.s32 %s186, 1
      %p190 = scmp.eq.s32.totalorder %s26, 1
      %p191 = scmp.ne.s32.totalorder %s186, %s188
      %p192 = scmp.eq.s32.totalorder %s26, 0
      %p193 = por %p191, %p192
      %p194 = scmp.ne.s32.totalorder %s186, %s188
      %p195 = scmp.eq.s32.totalorder %s31, 1
      %p196 = por %p194, %p195
      %p197 = scmp.ne.s32.totalorder %s188, %s189
      %p198 = scmp.eq.s32.totalorder %s31, 0
      %p199 = por %p197, %p198
      %p200 = scmp.ne.s32.totalorder %s188, %s189
      %p201 = scmp.eq.s32.totalorder %s32, 1
      %p202 = por %p200, %p201
      %p204 = scmp.ne.s32.totalorder %s189, %s203
      %p205 = scmp.eq.s32.totalorder %s32, 0
      %p206 = por %p204, %p205
      %s208 = sadd.s32 %s207, 1
      %p211 = scmp.eq.s32.totalorder %s26, 1
      %p212 = scmp.ne.s32.totalorder %s207, %s209
      %p213 = scmp.eq.s32.totalorder %s26, 0
      %p214 = por %p212, %p213
      %p215 = scmp.ne.s32.totalorder %s207, %s209
      %p216 = scmp.eq.s32.totalorder %s31, 1
      %p217 = por %p215, %p216
      %p218 = scmp.ne.s32.totalorder %s209, %s210
      %p219 = scmp.eq.s32.totalorder %s31, 0
      %p220 = por %p218, %p219
      %p221 = scmp.ne.s32.totalorder %s209, %s210
      %p222 = scmp.eq.s32.totalorder %s32, 1
      %p223 = por %p221, %p222
      %p225 = scmp.ne.s32.totalorder %s210, %s224
      %p226 = scmp.eq.s32.totalorder %s32, 0
      %p227 = por %p225, %p226
      %s229 = sadd.s32 %s228, 1
      %p232 = scmp.eq.s32.totalorder %s26, 1
      %p233 = scmp.ne.s32.totalorder %s228, %s230
      %p234 = scmp.eq.s32.totalorder %s26, 0
      %p235 = por %p233, %p234
      %p236 = scmp.ne.s32.totalorder %s228, %s230
      %p237 = scmp.eq.s32.totalorder %s31, 1
      %p238 = por %p236, %p237
      %p239 = scmp.ne.s32.totalorder %s230, %s231
      %p240 = scmp.eq.s32.totalorder %s31, 0
      %p241 = por %p239, %p240
      %p242 = scmp.ne.s32.totalorder %s230, %s231
      %p243 = scmp.eq.s32.totalorder %s32, 1
      %p244 = por %p242, %p243
      %p246 = scmp.ne.s32.totalorder %s231, %s245
      %p247 = scmp.eq.s32.totalorder %s32, 0
      %p248 = por %p246, %p247
      %s250 = sadd.s32 %s249, 1
      %p253 = scmp.eq.s32.totalorder %s26, 1
      %p254 = scmp.ne.s32.totalorder %s249, %s251
      %p255 = scmp.eq.s32.totalorder %s26, 0
      %p256 = por %p254, %p255
      %p257 = scmp.ne.s32.totalorder %s249, %s251
      %p258 = scmp.eq.s32.totalorder %s31, 1
      %p259 = por %p257, %p258
      %p260 = scmp.ne.s32.totalorder %s251, %s252
      %p261 = scmp.eq.s32.totalorder %s31, 0
      %p262 = por %p260, %p261
      %p263 = scmp.ne.s32.totalorder %s251, %s252
      %p264 = scmp.eq.s32.totalorder %s32, 1
      %p265 = por %p263, %p264
      %p267 = scmp.ne.s32.totalorder %s252, %s266
      %p268 = scmp.eq.s32.totalorder %s32, 0
      %p269 = por %p267, %p268
      %s270 = ssub.s32 %s26, %s33
      %p271 = scmp.eq.s32.totalorder %s270, 0
      %s273 = sadd.s32 %s272, 1
      %s274 = scalar_select %p271, %s272, %s273
      %p277 = pneg %p271
      %p278 = scmp.eq.s32.totalorder %s26, 1
      %p279 = por %p277, %p278
      %p280 = scmp.ne.s32.totalorder %s272, %s275
      %p281 = scmp.eq.s32.totalorder %s26, 0
      %p282 = por %p280, %p281
      %p283 = scmp.ne.s32.totalorder %s272, %s275
      %p284 = scmp.eq.s32.totalorder %s31, 1
      %p285 = por %p283, %p284
      %p286 = scmp.ne.s32.totalorder %s275, %s276
      %p287 = scmp.eq.s32.totalorder %s31, 0
      %p288 = por %p286, %p287
      %p289 = scmp.ne.s32.totalorder %s275, %s276
      %p290 = scmp.eq.s32.totalorder %s32, 1
      %p291 = por %p289, %p290
      %p293 = scmp.ne.s32.totalorder %s276, %s292
      %p294 = scmp.eq.s32.totalorder %s32, 0
      %p295 = por %p293, %p294
      %p296 = scmp.le.s32.totalorder 1, %s26
      %p297 = scmp.lt.s32.totalorder %s26, 3
      %p298 = pnand %p296, %p297
      %p299 = pneg %p298
      // Predicated region
      $region9: #{tpu_custom_call.1} parent=5 // pred_check
        _
      $region10: #{tpu_custom_call.1} parent=5 // pred_check_branch
        %301 = sbr.rel (%p298) target = $region12
      $region11: #{tpu_custom_call.1} parent=5 // pred_region
        %s302 = ssub.s32 %s26, 1
        // Predicated region
        $region13: #{tpu_custom_call.1} parent=11 // pred_check
          %p303 = pneg %p73
        $region14: #{tpu_custom_call.1} parent=11 // pred_check_branch
          %305 = sbr.rel (%p303) target = $region16
        $region15: #{tpu_custom_call.1} parent=11 // pred_region
          _
        $region16: #{tpu_custom_call.1} parent=11 // pred_fallthru
          _
        // Predicated region
        $region17: #{tpu_custom_call.1} parent=11 // pred_check
          %p306 = pneg %p94
        $region18: #{tpu_custom_call.1} parent=11 // pred_check_branch
          %308 = sbr.rel (%p306) target = $region20
        $region19: #{tpu_custom_call.1} parent=11 // pred_region
          %s310 = ssub.s32 32, 32
          %311 = vsyncadd [#allocation6], %s310
          %s312 = sshll.u32 [#allocation5], 4
          %s313 = int_to_ptr.vmem [resolvable:$true] %s312
          %318 = dma.hbm_to_vmem [thread:$0]  %s2, 32, %s313, [#allocation6], 16, 16, 1
        $region20: #{tpu_custom_call.1} parent=11 // pred_fallthru
          _
        // Predicated region
        $region21: #{tpu_custom_call.1} parent=11 // pred_check
          %p319 = pneg %p115
        $region22: #{tpu_custom_call.1} parent=11 // pred_check_branch
          %321 = sbr.rel (%p319) target = $region24
        $region23: #{tpu_custom_call.1} parent=11 // pred_region
          %s323 = ssub.s32 2048, 2048
          %324 = vsyncadd [#allocation6], %s323
          %s325 = sshll.u32 [#allocation7], 4
          %s326 = int_to_ptr.vmem [resolvable:$true] %s325
          %331 = dma.hbm_to_vmem [thread:$0]  %s3, 2048, %s326, [#allocation6], 128, 128, 8
        $region24: #{tpu_custom_call.1} parent=11 // pred_fallthru
          _
        // Predicated region
        $region25: #{tpu_custom_call.1} parent=11 // pred_check
          %p332 = pneg %p136
        $region26: #{tpu_custom_call.1} parent=11 // pred_check_branch
          %334 = sbr.rel (%p332) target = $region28
        $region27: #{tpu_custom_call.1} parent=11 // pred_region
          %s336 = ssub.s32 1024, 1024
          %337 = vsyncadd [#allocation9], %s336
          %s338 = sshll.u32 [#allocation8], 4
          %s339 = int_to_ptr.vmem [resolvable:$true] %s338
          %344 = dma.hbm_to_vmem [thread:$0]  %s4, 1024, %s339, [#allocation9], 64, 64, 4
        $region28: #{tpu_custom_call.1} parent=11 // pred_fallthru
          _
        // Predicated region
        $region29: #{tpu_custom_call.1} parent=11 // pred_check
          %p345 = pneg %p157
        $region30: #{tpu_custom_call.1} parent=11 // pred_check_branch
          %347 = sbr.rel (%p345) target = $region32
        $region31: #{tpu_custom_call.1} parent=11 // pred_region
          %s349 = ssub.s32 1024, 1024
          %350 = vsyncadd [#allocation9], %s349
          %s351 = sshll.u32 [#allocation10], 4
          %s352 = int_to_ptr.vmem [resolvable:$true] %s351
          %357 = dma.hbm_to_vmem [thread:$0]  %s5, 1024, %s352, [#allocation9], 64, 64, 4
        $region32: #{tpu_custom_call.1} parent=11 // pred_fallthru
          _
        // Predicated region
        $region33: #{tpu_custom_call.1} parent=11 // pred_check
          %p358 = pneg %p178
        $region34: #{tpu_custom_call.1} parent=11 // pred_check_branch
          %360 = sbr.rel (%p358) target = $region36
        $region35: #{tpu_custom_call.1} parent=11 // pred_region
          %s362 = ssub.s32 768, 768
          %363 = vsyncadd [#allocation12], %s362
          %s364 = sshll.u32 [#allocation11], 4
          %s365 = int_to_ptr.vmem [resolvable:$true] %s364
          %370 = dma.hbm_to_vmem [thread:$0]  %s6, 768, %s365, [#allocation12], 64, 64, 4
        $region36: #{tpu_custom_call.1} parent=11 // pred_fallthru
          _
        // Predicated region
        $region37: #{tpu_custom_call.1} parent=11 // pred_check
          %p371 = pneg %p199
        $region38: #{tpu_custom_call.1} parent=11 // pred_check_branch
          %373 = sbr.rel (%p371) target = $region40
        $region39: #{tpu_custom_call.1} parent=11 // pred_region
          _
        $region40: #{tpu_custom_call.1} parent=11 // pred_fallthru
          _
        // Predicated region
        $region41: #{tpu_custom_call.1} parent=11 // pred_check
          %p374 = pneg %p220
        $region42: #{tpu_custom_call.1} parent=11 // pred_check_branch
          %376 = sbr.rel (%p374) target = $region44
        $region43: #{tpu_custom_call.1} parent=11 // pred_region
          %s378 = ssub.s32 1024, 1024
          %379 = vsyncadd [#allocation12], %s378
          %s380 = sshll.u32 [#allocation13], 4
          %s381 = int_to_ptr.vmem [resolvable:$true] %s380
          %386 = dma.hbm_to_vmem [thread:$0]  %s8, 1024, %s381, [#allocation12], 128, 128, 8
        $region44: #{tpu_custom_call.1} parent=11 // pred_fallthru
          _
        // Predicated region
        $region45: #{tpu_custom_call.1} parent=11 // pred_check
          %p387 = pneg %p241
        $region46: #{tpu_custom_call.1} parent=11 // pred_check_branch
          %389 = sbr.rel (%p387) target = $region48
        $region47: #{tpu_custom_call.1} parent=11 // pred_region
          _
        $region48: #{tpu_custom_call.1} parent=11 // pred_fallthru
          _
        // Predicated region
        $region49: #{tpu_custom_call.1} parent=11 // pred_check
          %p390 = pneg %p262
        $region50: #{tpu_custom_call.1} parent=11 // pred_check_branch
          %392 = sbr.rel (%p390) target = $region52
        $region51: #{tpu_custom_call.1} parent=11 // pred_region
          _
        $region52: #{tpu_custom_call.1} parent=11 // pred_fallthru
          _
      $region12: #{tpu_custom_call.1} parent=5 // pred_fallthru
        _
      %p393 = scmp.lt.s32.totalorder %s26, 2
      // Predicated region
      $region53: #{tpu_custom_call.1} parent=5 // pred_check
        %p394 = pneg %p393
      $region54: #{tpu_custom_call.1} parent=5 // pred_check_branch
        %396 = sbr.rel (%p394) target = $region56
      $region55: #{tpu_custom_call.1} parent=5 // pred_region
        // Predicated region
        $region57: #{tpu_custom_call.1} parent=55 // pred_check
          %p397 = pneg %p46
        $region58: #{tpu_custom_call.1} parent=55 // pred_check_branch
          %399 = sbr.rel (%p397) target = $region60
        $region59: #{tpu_custom_call.1} parent=55 // pred_region
          %s400 = sand.u32 %s36, 1
          %s401 = scalar_lea.sflag [#allocation3], %s400
          %s402 = sand.u32 %s36, 1
          %s403 = smul.addr %s402, 8
          %s404 = scalar_lea.vmem [#allocation2], %s403
          %s406 = ssub.s32 128, 128
          %407 = vsyncadd %s401, %s406
          %s408 = smul.addr %s26, 128
          %s409 = scalar_lea.hbm %s0, %s408
          %s411 = sshll.u32 %s404, 4
          %s412 = int_to_ptr.vmem [resolvable:$true] %s411
          %414 = dma.hbm_to_vmem [thread:$0]  %s409, 128, %s412, %s401
        $region60: #{tpu_custom_call.1} parent=55 // pred_fallthru
          _
      $region56: #{tpu_custom_call.1} parent=5 // pred_fallthru
        _
      %p415 = scmp.le.s32.totalorder 1, %s26
      %p416 = scmp.lt.s32.totalorder %s26, 3
      %p417 = pnand %p415, %p416
      %p418 = pneg %p417
      // Predicated region
      $region61: #{tpu_custom_call.1} parent=5 // pred_check
        _
      $region62: #{tpu_custom_call.1} parent=5 // pred_check_branch
        %420 = sbr.rel (%p417) target = $region64
      $region63: #{tpu_custom_call.1} parent=5 // pred_region
        %s421 = ssub.s32 %s26, 1
        %s422 = sand.u32 %s39, 1
        %s423 = scalar_lea.sflag [#allocation3], %s422
        %s424 = sand.u32 %s39, 1
        %s425 = smul.addr %s424, 8
        %s426 = scalar_lea.vmem [#allocation2], %s425
        // Predicated region
        $region65: #{tpu_custom_call.1} parent=63 // pred_check
          %p427 = pneg %p52
        $region66: #{tpu_custom_call.1} parent=63 // pred_check_branch
          %429 = sbr.rel (%p427) target = $region68
        $region67: #{tpu_custom_call.1} parent=63 // pred_region
          %430 = dma.done %s423, 128
        $region68: #{tpu_custom_call.1} parent=63 // pred_fallthru
          _
        // Predicated region
        $region69: #{tpu_custom_call.1} parent=63 // pred_check
          %p431 = pneg %p94
        $region70: #{tpu_custom_call.1} parent=63 // pred_check_branch
          %433 = sbr.rel (%p431) target = $region72
        $region71: #{tpu_custom_call.1} parent=63 // pred_region
          %434 = dma.done [#allocation6], 32
        $region72: #{tpu_custom_call.1} parent=63 // pred_fallthru
          _
        // Predicated region
        $region73: #{tpu_custom_call.1} parent=63 // pred_check
          %p435 = pneg %p115
        $region74: #{tpu_custom_call.1} parent=63 // pred_check_branch
          %437 = sbr.rel (%p435) target = $region76
        $region75: #{tpu_custom_call.1} parent=63 // pred_region
          %438 = dma.done [#allocation6], 2048
        $region76: #{tpu_custom_call.1} parent=63 // pred_fallthru
          _
        // Predicated region
        $region77: #{tpu_custom_call.1} parent=63 // pred_check
          %p439 = pneg %p136
        $region78: #{tpu_custom_call.1} parent=63 // pred_check_branch
          %441 = sbr.rel (%p439) target = $region80
        $region79: #{tpu_custom_call.1} parent=63 // pred_region
          %442 = dma.done [#allocation9], 1024
        $region80: #{tpu_custom_call.1} parent=63 // pred_fallthru
          _
        // Predicated region
        $region81: #{tpu_custom_call.1} parent=63 // pred_check
          %p443 = pneg %p157
        $region82: #{tpu_custom_call.1} parent=63 // pred_check_branch
          %445 = sbr.rel (%p443) target = $region84
        $region83: #{tpu_custom_call.1} parent=63 // pred_region
          %446 = dma.done [#allocation9], 1024
        $region84: #{tpu_custom_call.1} parent=63 // pred_fallthru
          _
        // Predicated region
        $region85: #{tpu_custom_call.1} parent=63 // pred_check
          %p447 = pneg %p178
        $region86: #{tpu_custom_call.1} parent=63 // pred_check_branch
          %449 = sbr.rel (%p447) target = $region88
        $region87: #{tpu_custom_call.1} parent=63 // pred_region
          %450 = dma.done [#allocation12], 768
        $region88: #{tpu_custom_call.1} parent=63 // pred_fallthru
          _
        // Predicated region
        $region89: #{tpu_custom_call.1} parent=63 // pred_check
          %p451 = pneg %p220
        $region90: #{tpu_custom_call.1} parent=63 // pred_check_branch
          %453 = sbr.rel (%p451) target = $region92
        $region91: #{tpu_custom_call.1} parent=63 // pred_region
          %454 = dma.done [#allocation12], 1024
        $region92: #{tpu_custom_call.1} parent=63 // pred_fallthru
          _
        %s455 = sand.u32 %s39, 1
        %s456 = scalar_lea.sflag [#allocation3], %s455
        %s457 = sand.u32 %s39, 1
        %s458 = smul.addr %s457, 8
        %s459 = scalar_lea.vmem [#allocation2], %s458
        %p460 = pneg %p52
        %p461 = pneg %p49
        %p462 = pneg %p73
        %p463 = pneg %p70
        %p464 = pneg %p94
        %p465 = pneg %p91
        %p466 = pneg %p115
        %p467 = pneg %p112
        %p468 = pneg %p136
        %p469 = pneg %p133
        %p470 = pneg %p157
        %p471 = pneg %p154
        %p472 = pneg %p178
        %p473 = pneg %p175
        %p474 = pneg %p199
        %p475 = pneg %p196
        %p476 = pneg %p220
        %p477 = pneg %p217
        %p478 = pneg %p241
        %p479 = pneg %p238
        %p480 = pneg %p262
        %p481 = pneg %p259
        %p482 = pneg %p288
        %p483 = pneg %p285
        %s484 = sand.u32 %s275, 1
        %s485 = scalar_lea.sflag [#allocation4], %s484
        %s486 = sand.u32 %s275, 1
        %s487 = smul.addr %s486, 16
        %s488 = scalar_lea.vmem [#allocation14], %s487
        %v490 = vld [vmem:[%s9] sm:$0xff]
        %492 = vrot.lane.b32.xlu0 %v490, 16
        %v493 = vpop.permute.xlu0 %492
        %495 = vrot.lane.b32.xlu0 %v490, 32
        %v496 = vpop.permute.xlu0 %495
        %498 = vrot.lane.b32.xlu0 %v490, 48
        %v499 = vpop.permute.xlu0 %498
        %501 = vrot.lane.b32.xlu0 %v490, 64
        %v502 = vpop.permute.xlu0 %501
        %504 = vrot.lane.b32.xlu0 %v490, 80
        %v505 = vpop.permute.xlu0 %504
        %507 = vrot.lane.b32.xlu0 %v490, 96
        %v508 = vpop.permute.xlu0 %507
        %510 = vrot.lane.b32.xlu0 %v490, 112
        %v511 = vpop.permute.xlu0 %510
        %vm513 = vcmask 130048
        %v514 = vsel %vm513, %v490, %v493
        %vm515 = vcmask 261120
        %v516 = vsel %vm515, %v514, %v496
        %vm517 = vcmask 392192
        %v518 = vsel %vm517, %v516, %v499
        %vm519 = vcmask 523264
        %v520 = vsel %vm519, %v518, %v502
        %vm521 = vcmask 654336
        %v522 = vsel %vm521, %v520, %v505
        %vm523 = vcmask 785408
        %v524 = vsel %vm523, %v522, %v508
        %vm525 = vcmask 916480
        %v526 = vsel %vm525, %v524, %v511
        %v527 = vld [vmem:[%s10] sm:$0xff]
        %529 = vrot.lane.b32.xlu0 %v527, 16
        %v530 = vpop.permute.xlu0 %529
        %532 = vrot.lane.b32.xlu0 %v527, 32
        %v533 = vpop.permute.xlu0 %532
        %535 = vrot.lane.b32.xlu0 %v527, 48
        %v536 = vpop.permute.xlu0 %535
        %538 = vrot.lane.b32.xlu0 %v527, 64
        %v539 = vpop.permute.xlu0 %538
        %541 = vrot.lane.b32.xlu0 %v527, 80
        %v542 = vpop.permute.xlu0 %541
        %544 = vrot.lane.b32.xlu0 %v527, 96
        %v545 = vpop.permute.xlu0 %544
        %547 = vrot.lane.b32.xlu0 %v527, 112
        %v548 = vpop.permute.xlu0 %547
        %v550 = vsel %vm513, %v527, %v530
        %v551 = vsel %vm515, %v550, %v533
        %v552 = vsel %vm517, %v551, %v536
        %v553 = vsel %vm519, %v552, %v539
        %v554 = vsel %vm521, %v553, %v542
        %v555 = vsel %vm523, %v554, %v545
        %v556 = vsel %vm525, %v555, %v548
        %v557 = vlaneseq
        %v558 = vand.u32 %v557, 127
        %vm559 = vcmp.lt.s32.totalorder %v558, 0
        %v560 = vsub.s32 0, %v558
        %v561 = vsel %vm559, %v560, %v558
        %v562 = vshrl.u32 %v561, 1
        %v563 = vand.u32 %v561, 1
        %v564 = vsub.s32 0, %v563
        %v565 = vsel %vm559, %v564, %v563
        %vm566 = vcmp.ne.s32.totalorder %v565, 0
        %vm567 = vcmp.lt.s32.totalorder %v565, 0
        %vm568 = vmand %vm567, %vm566
        %v569 = vadd.s32 %v565, 2
        %v570 = vsel %vm568, %v569, %v565
        %vm571 = vcmp.eq.s32.totalorder %v570, 0
        %v572 = vlaneseq
        %v573 = vshrl.u32 %v572, 7
        %vm574 = vcmp.le.s32.totalorder %v558, %v573
        %v575 = vld [vmem:[%s426] sm:$0xff]
        %v576 = vld [vmem:[%s1] sm:$0x1]
        %v577 = vmul.f32 %v575, %v575
        %v578 = vsel %vm519, %v577, 0.0
        %579 = vadd.xlane.f32.xlu0 %v578
        %v580 = vpop.xlane.xlu0 %579
        %v581 = vrcp.pop 64.0
        %v582 = vmul.f32 %v580, %v581
        %v583 = vadd.f32 %v582, 1e-05
        %v584 = vrsqrt.pop %v583
        %v585 = vmul.f32 %v575, %v584
        %v587 = vlaneseq
        %v588 = vshrl.u32 %v587, 7
        %v589 = vsub.s32 0, %v588
        %v590 = vrot.slane %v576, %v589
        %v592 = vmul.f32 %v585, %v590
        %v593 = vld [vmem:[#allocation7] sm:$0xff]
        %v594 = vld [vmem:[#allocation7 + $0x8] sm:$0xff]
        %v595 = vld [vmem:[#allocation7 + $0x10] sm:$0xff]
        %v596 = vld [vmem:[#allocation7 + $0x18] sm:$0xff]
        %v597 = vld [vmem:[#allocation7 + $0x20] sm:$0xff]
        %v598 = vld [vmem:[#allocation7 + $0x28] sm:$0xff]
        %v599 = vld [vmem:[#allocation7 + $0x30] sm:$0xff]
        %v600 = vld [vmem:[#allocation7 + $0x38] sm:$0xff]
        %v601 = vpack.c.bf16 %v592, %v592
        %v610 = vunpack.c.l.b16 %v593
        %v611 = vunpack.c.h.b16 %v593
        %v612 = vunpack.c.l.b16 %v594
        %v613 = vunpack.c.h.b16 %v594
        %v614 = vunpack.c.l.b16 %v595
        %v615 = vunpack.c.h.b16 %v595
        %v616 = vunpack.c.l.b16 %v596
        %v617 = vunpack.c.h.b16 %v596
        %v618 = vunpack.c.l.b16 %v597
        %v619 = vunpack.c.h.b16 %v597
        %v620 = vunpack.c.l.b16 %v598
        %v621 = vunpack.c.h.b16 %v598
        %v622 = vunpack.c.l.b16 %v599
        %v623 = vunpack.c.h.b16 %v599
        %v624 = vunpack.c.l.b16 %v600
        %v625 = vunpack.c.h.b16 %v600
        %v626 = vpack.c.b16 %v612, %v610
        %v627 = vpack.c.b16 %v613, %v611
        %v628 = vpack.c.b16 %v616, %v614
        %v629 = vpack.c.b16 %v617, %v615
        %v630 = vpack.c.b16 %v620, %v618
        %v631 = vpack.c.b16 %v621, %v619
        %v632 = vpack.c.b16 %v624, %v622
        %v633 = vpack.c.b16 %v625, %v623
        %v643 = vsel %vm519, %v601, 0
        %645 = vmatprep.subr.bf16.mxu0 %v627
        %646 = vmatpush1.bf16.msra.mxu0 %v626
        %647 = vmatprep.subr.bf16.mxu0 %v629
        %648 = vmatpush1.bf16.msra.mxu0 %v628
        %649 = vmatprep.subr.bf16.mxu0 %v631
        %650 = vmatpush1.bf16.msra.mxu0 %v630
        %651 = vmatprep.subr.bf16.mxu0 %v633
        %652 = vmatpush1.bf16.msra.mxu0 %v632
        %653 = vmatprep.subr.bf16.mxu0 0
        %654 = vmatpush1.bf16.msra.mxu0 0
        %655 = vmatprep.subr.bf16.mxu0 0
        %656 = vmatpush1.bf16.msra.mxu0 0
        %657 = vmatprep.subr.bf16.mxu0 0
        %658 = vmatpush1.bf16.msra.mxu0 0
        %659 = vmatprep.subr.bf16.mxu0 0
        %660 = vmatpush1.bf16.msra.mxu0 0
        %661 = vmatprep.subr.bf16.mxu0 0
        %662 = vmatpush1.bf16.msra.mxu0 0
        %663 = vmatprep.subr.bf16.mxu0 0
        %664 = vmatpush1.bf16.msra.mxu0 0
        %665 = vmatprep.subr.bf16.mxu0 0
        %666 = vmatpush1.bf16.msra.mxu0 0
        %667 = vmatprep.subr.bf16.mxu0 0
        %668 = vmatpush1.bf16.msra.mxu0 0
        %669 = vmatprep.subr.bf16.mxu0 0
        %670 = vmatpush1.bf16.msra.mxu0 0
        %671 = vmatprep.subr.bf16.mxu0 0
        %672 = vmatpush1.bf16.msra.mxu0 0
        %673 = vmatprep.subr.bf16.mxu0 0
        %674 = vmatpush1.bf16.msra.mxu0 0
        %675 = vmatprep.subr.bf16.mxu0 0
        %676 = vmatpush1.bf16.msra.mxu0 0
        %677 = vmatprep.mubr.bf16.mxu0 0
        %678 = vmatmul.mubr.bf16.gmra.mrb[0].mxu0 %v643
        %v679 = vpop.f32.mrb[0].mxu0
        %v680 = vadd.f32 0.0, %v679
        %v681 = vpop.f32.mrb[0].mxu0
        %v682 = vadd.f32 0.0, %v681
        %v683 = vpop.f32.mrb[0].mxu0
        %v684 = vpop.f32.mrb[0].mxu0
        %685 = vdwg.mxu0
        %686 = vrot.lane.b32.xlu0 %v680, 127
        %v687 = vpop.permute.xlu0 %686
        %688 = vrot.lane.b32.xlu0 %v680, 1
        %v689 = vpop.permute.xlu0 %688
        %v690 = vsel %vm571, %v687, %v689
        %v691 = vmul.f32 %v680, %v526
        %v692 = vmul.f32 %v690, %v556
        %v693 = vadd.f32 %v691, %v692
        %695 = vrot.lane.b32.xlu0 %v693, 112
        %v696 = vpop.permute.xlu0 %695
        %698 = vrot.lane.b32.xlu0 %v693, 96
        %v699 = vpop.permute.xlu0 %698
        %701 = vrot.lane.b32.xlu0 %v693, 80
        %v702 = vpop.permute.xlu0 %701
        %v704 = vcombine.low %v693, %v699
        %v705 = vcombine.high %v693, %v699
        %v707 = vunpack.c.l.s4 1983009808
        %v708 = vunpack.c.0.s8 %v707
        %v709 = vlaneseq
        %v710 = vshrl.u32 %v709, 7
        %v711 = vsub.s32 %v708, %v710
        %v712 = vrot.slane %v704, %v711
        %v714 = vunpack.c.l.s4 1983009808
        %v715 = vunpack.c.0.s8 %v714
        %v716 = vlaneseq
        %v717 = vshrl.u32 %v716, 7
        %v718 = vsub.s32 %v715, %v717
        %v719 = vrot.slane %v705, %v718
        %v720 = vcombine.low %v696, %v702
        %v721 = vcombine.high %v696, %v702
        %v723 = vunpack.c.l.s4 1983009808
        %v724 = vunpack.c.0.s8 %v723
        %v725 = vlaneseq
        %v726 = vshrl.u32 %v725, 7
        %v727 = vsub.s32 %v724, %v726
        %v728 = vrot.slane %v720, %v727
        %v730 = vunpack.c.l.s4 1983009808
        %v731 = vunpack.c.0.s8 %v730
        %v732 = vlaneseq
        %v733 = vshrl.u32 %v732, 7
        %v734 = vsub.s32 %v731, %v733
        %v735 = vrot.slane %v721, %v734
        %v736 = vcombine.low %v712, %v728
        %v737 = vcombine.high %v712, %v728
        %v739 = vunpack.c.l.s4 1934713408
        %v740 = vunpack.c.0.s8 %v739
        %v741 = vlaneseq
        %v742 = vshrl.u32 %v741, 7
        %v743 = vsub.s32 %v740, %v742
        %v744 = vrot.slane %v736, %v743
        %v746 = vunpack.c.l.s4 1934713408
        %v747 = vunpack.c.0.s8 %v746
        %v748 = vlaneseq
        %v749 = vshrl.u32 %v748, 7
        %v750 = vsub.s32 %v747, %v749
        %v751 = vrot.slane %v737, %v750
        %v752 = vcombine.low %v719, %v735
        %v753 = vcombine.high %v719, %v735
        %v755 = vunpack.c.l.s4 1934713408
        %v756 = vunpack.c.0.s8 %v755
        %v757 = vlaneseq
        %v758 = vshrl.u32 %v757, 7
        %v759 = vsub.s32 %v756, %v758
        %v760 = vrot.slane %v752, %v759
        %v762 = vunpack.c.l.s4 1934713408
        %v763 = vunpack.c.0.s8 %v762
        %v764 = vlaneseq
        %v765 = vshrl.u32 %v764, 7
        %v766 = vsub.s32 %v763, %v765
        %v767 = vrot.slane %v753, %v766
        %v768 = vcombine.high %v744, 0.0
        %v769 = vcombine.high %v751, 0.0
        %v770 = vcombine.high %v760, 0.0
        %v771 = vcombine.high %v767, 0.0
        %v772 = vcombine.low %v744, %v751
        %v774 = vunpack.c.l.s4 1983009808
        %v775 = vunpack.c.0.s8 %v774
        %v776 = vlaneseq
        %v777 = vshrl.u32 %v776, 7
        %v778 = vsub.s32 %v775, %v777
        %v779 = vrot.slane %v772, %v778
        %v780 = vcombine.low %v768, %v769
        %v782 = vunpack.c.l.s4 1983009808
        %v783 = vunpack.c.0.s8 %v782
        %v784 = vlaneseq
        %v785 = vshrl.u32 %v784, 7
        %v786 = vsub.s32 %v783, %v785
        %v787 = vrot.slane %v780, %v786
        %v788 = vcombine.low %v760, %v767
        %v790 = vunpack.c.l.s4 1983009808
        %v791 = vunpack.c.0.s8 %v790
        %v792 = vlaneseq
        %v793 = vshrl.u32 %v792, 7
        %v794 = vsub.s32 %v791, %v793
        %v795 = vrot.slane %v788, %v794
        %v796 = vcombine.low %v770, %v771
        %v798 = vunpack.c.l.s4 1983009808
        %v799 = vunpack.c.0.s8 %v798
        %v800 = vlaneseq
        %v801 = vshrl.u32 %v800, 7
        %v802 = vsub.s32 %v799, %v801
        %v803 = vrot.slane %v796, %v802
        %v804 = vcombine.low %v779, %v787
        %v805 = vcombine.high %v779, %v787
        %v807 = vunpack.c.l.s4 1934713408
        %v808 = vunpack.c.0.s8 %v807
        %v809 = vlaneseq
        %v810 = vshrl.u32 %v809, 7
        %v811 = vsub.s32 %v808, %v810
        %v812 = vrot.slane %v804, %v811
        %v814 = vunpack.c.l.s4 1934713408
        %v815 = vunpack.c.0.s8 %v814
        %v816 = vlaneseq
        %v817 = vshrl.u32 %v816, 7
        %v818 = vsub.s32 %v815, %v817
        %v819 = vrot.slane %v805, %v818
        %v820 = vcombine.low %v795, %v803
        %v821 = vcombine.high %v795, %v803
        %v823 = vunpack.c.l.s4 1934713408
        %v824 = vunpack.c.0.s8 %v823
        %v825 = vlaneseq
        %v826 = vshrl.u32 %v825, 7
        %v827 = vsub.s32 %v824, %v826
        %v828 = vrot.slane %v820, %v827
        %v830 = vunpack.c.l.s4 1934713408
        %v831 = vunpack.c.0.s8 %v830
        %v832 = vlaneseq
        %v833 = vshrl.u32 %v832, 7
        %v834 = vsub.s32 %v831, %v833
        %v835 = vrot.slane %v821, %v834
        %v836 = vcombine.low %v812, %v828
        %v837 = vcombine.high %v812, %v828
        %v838 = vcombine.low %v819, %v835
        %v839 = vcombine.high %v819, %v835
        %840 = vrot.lane.b32.xlu0 %v693, 64
        %v841 = vpop.permute.xlu0 %840
        %842 = vrot.lane.b32.xlu0 %v696, 64
        %v843 = vpop.permute.xlu0 %842
        %844 = vrot.lane.b32.xlu0 %v699, 64
        %v845 = vpop.permute.xlu0 %844
        %846 = vrot.lane.b32.xlu0 %v702, 64
        %v847 = vpop.permute.xlu0 %846
        %v852 = vcombine.low %v841, %v845
        %v853 = vcombine.high %v841, %v845
        %v855 = vunpack.c.l.s4 1983009808
        %v856 = vunpack.c.0.s8 %v855
        %v857 = vlaneseq
        %v858 = vshrl.u32 %v857, 7
        %v859 = vsub.s32 %v856, %v858
        %v860 = vrot.slane %v852, %v859
        %v862 = vunpack.c.l.s4 1983009808
        %v863 = vunpack.c.0.s8 %v862
        %v864 = vlaneseq
        %v865 = vshrl.u32 %v864, 7
        %v866 = vsub.s32 %v863, %v865
        %v867 = vrot.slane %v853, %v866
        %v868 = vcombine.low %v843, %v847
        %v869 = vcombine.high %v843, %v847
        %v871 = vunpack.c.l.s4 1983009808
        %v872 = vunpack.c.0.s8 %v871
        %v873 = vlaneseq
        %v874 = vshrl.u32 %v873, 7
        %v875 = vsub.s32 %v872, %v874
        %v876 = vrot.slane %v868, %v875
        %v878 = vunpack.c.l.s4 1983009808
        %v879 = vunpack.c.0.s8 %v878
        %v880 = vlaneseq
        %v881 = vshrl.u32 %v880, 7
        %v882 = vsub.s32 %v879, %v881
        %v883 = vrot.slane %v869, %v882
        %v884 = vcombine.low %v860, %v876
        %v885 = vcombine.high %v860, %v876
        %v887 = vunpack.c.l.s4 1934713408
        %v888 = vunpack.c.0.s8 %v887
        %v889 = vlaneseq
        %v890 = vshrl.u32 %v889, 7
        %v891 = vsub.s32 %v888, %v890
        %v892 = vrot.slane %v884, %v891
        %v894 = vunpack.c.l.s4 1934713408
        %v895 = vunpack.c.0.s8 %v894
        %v896 = vlaneseq
        %v897 = vshrl.u32 %v896, 7
        %v898 = vsub.s32 %v895, %v897
        %v899 = vrot.slane %v885, %v898
        %v900 = vcombine.low %v867, %v883
        %v901 = vcombine.high %v867, %v883
        %v903 = vunpack.c.l.s4 1934713408
        %v904 = vunpack.c.0.s8 %v903
        %v905 = vlaneseq
        %v906 = vshrl.u32 %v905, 7
        %v907 = vsub.s32 %v904, %v906
        %v908 = vrot.slane %v900, %v907
        %v910 = vunpack.c.l.s4 1934713408
        %v911 = vunpack.c.0.s8 %v910
        %v912 = vlaneseq
        %v913 = vshrl.u32 %v912, 7
        %v914 = vsub.s32 %v911, %v913
        %v915 = vrot.slane %v901, %v914
        %v916 = vcombine.high %v892, 0.0
        %v917 = vcombine.high %v899, 0.0
        %v918 = vcombine.high %v908, 0.0
        %v919 = vcombine.high %v915, 0.0
        %v920 = vcombine.low %v892, %v899
        %v922 = vunpack.c.l.s4 1983009808
        %v923 = vunpack.c.0.s8 %v922
        %v924 = vlaneseq
        %v925 = vshrl.u32 %v924, 7
        %v926 = vsub.s32 %v923, %v925
        %v927 = vrot.slane %v920, %v926
        %v928 = vcombine.low %v916, %v917
        %v930 = vunpack.c.l.s4 1983009808
        %v931 = vunpack.c.0.s8 %v930
        %v932 = vlaneseq
        %v933 = vshrl.u32 %v932, 7
        %v934 = vsub.s32 %v931, %v933
        %v935 = vrot.slane %v928, %v934
        %v936 = vcombine.low %v908, %v915
        %v938 = vunpack.c.l.s4 1983009808
        %v939 = vunpack.c.0.s8 %v938
        %v940 = vlaneseq
        %v941 = vshrl.u32 %v940, 7
        %v942 = vsub.s32 %v939, %v941
        %v943 = vrot.slane %v936, %v942
        %v944 = vcombine.low %v918, %v919
        %v946 = vunpack.c.l.s4 1983009808
        %v947 = vunpack.c.0.s8 %v946
        %v948 = vlaneseq
        %v949 = vshrl.u32 %v948, 7
        %v950 = vsub.s32 %v947, %v949
        %v951 = vrot.slane %v944, %v950
        %v952 = vcombine.low %v927, %v935
        %v953 = vcombine.high %v927, %v935
        %v955 = vunpack.c.l.s4 1934713408
        %v956 = vunpack.c.0.s8 %v955
        %v957 = vlaneseq
        %v958 = vshrl.u32 %v957, 7
        %v959 = vsub.s32 %v956, %v958
        %v960 = vrot.slane %v952, %v959
        %v962 = vunpack.c.l.s4 1934713408
        %v963 = vunpack.c.0.s8 %v962
        %v964 = vlaneseq
        %v965 = vshrl.u32 %v964, 7
        %v966 = vsub.s32 %v963, %v965
        %v967 = vrot.slane %v953, %v966
        %v968 = vcombine.low %v943, %v951
        %v969 = vcombine.high %v943, %v951
        %v971 = vunpack.c.l.s4 1934713408
        %v972 = vunpack.c.0.s8 %v971
        %v973 = vlaneseq
        %v974 = vshrl.u32 %v973, 7
        %v975 = vsub.s32 %v972, %v974
        %v976 = vrot.slane %v968, %v975
        %v978 = vunpack.c.l.s4 1934713408
        %v979 = vunpack.c.0.s8 %v978
        %v980 = vlaneseq
        %v981 = vshrl.u32 %v980, 7
        %v982 = vsub.s32 %v979, %v981
        %v983 = vrot.slane %v969, %v982
        %v984 = vcombine.low %v960, %v976
        %v985 = vcombine.high %v960, %v976
        %v986 = vcombine.low %v967, %v983
        %v987 = vcombine.high %v967, %v983
        %989 = vrot.lane.b32.xlu0 %v682, 112
        %v990 = vpop.permute.xlu0 %989
        %992 = vrot.lane.b32.xlu0 %v682, 96
        %v993 = vpop.permute.xlu0 %992
        %995 = vrot.lane.b32.xlu0 %v682, 80
        %v996 = vpop.permute.xlu0 %995
        %v998 = vcombine.low %v682, %v993
        %v999 = vcombine.high %v682, %v993
        %v1001 = vunpack.c.l.s4 1983009808
        %v1002 = vunpack.c.0.s8 %v1001
        %v1003 = vlaneseq
        %v1004 = vshrl.u32 %v1003, 7
        %v1005 = vsub.s32 %v1002, %v1004
        %v1006 = vrot.slane %v998, %v1005
        %v1008 = vunpack.c.l.s4 1983009808
        %v1009 = vunpack.c.0.s8 %v1008
        %v1010 = vlaneseq
        %v1011 = vshrl.u32 %v1010, 7
        %v1012 = vsub.s32 %v1009, %v1011
        %v1013 = vrot.slane %v999, %v1012
        %v1014 = vcombine.low %v990, %v996
        %v1015 = vcombine.high %v990, %v996
        %v1017 = vunpack.c.l.s4 1983009808
        %v1018 = vunpack.c.0.s8 %v1017
        %v1019 = vlaneseq
        %v1020 = vshrl.u32 %v1019, 7
        %v1021 = vsub.s32 %v1018, %v1020
        %v1022 = vrot.slane %v1014, %v1021
        %v1024 = vunpack.c.l.s4 1983009808
        %v1025 = vunpack.c.0.s8 %v1024
        %v1026 = vlaneseq
        %v1027 = vshrl.u32 %v1026, 7
        %v1028 = vsub.s32 %v1025, %v1027
        %v1029 = vrot.slane %v1015, %v1028
        %v1030 = vcombine.low %v1006, %v1022
        %v1031 = vcombine.high %v1006, %v1022
        %v1033 = vunpack.c.l.s4 1934713408
        %v1034 = vunpack.c.0.s8 %v1033
        %v1035 = vlaneseq
        %v1036 = vshrl.u32 %v1035, 7
        %v1037 = vsub.s32 %v1034, %v1036
        %v1038 = vrot.slane %v1030, %v1037
        %v1040 = vunpack.c.l.s4 1934713408
        %v1041 = vunpack.c.0.s8 %v1040
        %v1042 = vlaneseq
        %v1043 = vshrl.u32 %v1042, 7
        %v1044 = vsub.s32 %v1041, %v1043
        %v1045 = vrot.slane %v1031, %v1044
        %v1046 = vcombine.low %v1013, %v1029
        %v1047 = vcombine.high %v1013, %v1029
        %v1049 = vunpack.c.l.s4 1934713408
        %v1050 = vunpack.c.0.s8 %v1049
        %v1051 = vlaneseq
        %v1052 = vshrl.u32 %v1051, 7
        %v1053 = vsub.s32 %v1050, %v1052
        %v1054 = vrot.slane %v1046, %v1053
        %v1056 = vunpack.c.l.s4 1934713408
        %v1057 = vunpack.c.0.s8 %v1056
        %v1058 = vlaneseq
        %v1059 = vshrl.u32 %v1058, 7
        %v1060 = vsub.s32 %v1057, %v1059
        %v1061 = vrot.slane %v1047, %v1060
        %v1062 = vcombine.high %v1038, 0.0
        %v1063 = vcombine.high %v1045, 0.0
        %v1064 = vcombine.high %v1054, 0.0
        %v1065 = vcombine.high %v1061, 0.0
        %v1066 = vcombine.low %v1038, %v1045
        %v1068 = vunpack.c.l.s4 1983009808
        %v1069 = vunpack.c.0.s8 %v1068
        %v1070 = vlaneseq
        %v1071 = vshrl.u32 %v1070, 7
        %v1072 = vsub.s32 %v1069, %v1071
        %v1073 = vrot.slane %v1066, %v1072
        %v1074 = vcombine.low %v1062, %v1063
        %v1076 = vunpack.c.l.s4 1983009808
        %v1077 = vunpack.c.0.s8 %v1076
        %v1078 = vlaneseq
        %v1079 = vshrl.u32 %v1078, 7
        %v1080 = vsub.s32 %v1077, %v1079
        %v1081 = vrot.slane %v1074, %v1080
        %v1082 = vcombine.low %v1054, %v1061
        %v1084 = vunpack.c.l.s4 1983009808
        %v1085 = vunpack.c.0.s8 %v1084
        %v1086 = vlaneseq
        %v1087 = vshrl.u32 %v1086, 7
        %v1088 = vsub.s32 %v1085, %v1087
        %v1089 = vrot.slane %v1082, %v1088
        %v1090 = vcombine.low %v1064, %v1065
        %v1092 = vunpack.c.l.s4 1983009808
        %v1093 = vunpack.c.0.s8 %v1092
        %v1094 = vlaneseq
        %v1095 = vshrl.u32 %v1094, 7
        %v1096 = vsub.s32 %v1093, %v1095
        %v1097 = vrot.slane %v1090, %v1096
        %v1098 = vcombine.low %v1073, %v1081
        %v1099 = vcombine.high %v1073, %v1081
        %v1101 = vunpack.c.l.s4 1934713408
        %v1102 = vunpack.c.0.s8 %v1101
        %v1103 = vlaneseq
        %v1104 = vshrl.u32 %v1103, 7
        %v1105 = vsub.s32 %v1102, %v1104
        %v1106 = vrot.slane %v1098, %v1105
        %v1108 = vunpack.c.l.s4 1934713408
        %v1109 = vunpack.c.0.s8 %v1108
        %v1110 = vlaneseq
        %v1111 = vshrl.u32 %v1110, 7
        %v1112 = vsub.s32 %v1109, %v1111
        %v1113 = vrot.slane %v1099, %v1112
        %v1114 = vcombine.low %v1089, %v1097
        %v1115 = vcombine.high %v1089, %v1097
        %v1117 = vunpack.c.l.s4 1934713408
        %v1118 = vunpack.c.0.s8 %v1117
        %v1119 = vlaneseq
        %v1120 = vshrl.u32 %v1119, 7
        %v1121 = vsub.s32 %v1118, %v1120
        %v1122 = vrot.slane %v1114, %v1121
        %v1124 = vunpack.c.l.s4 1934713408
        %v1125 = vunpack.c.0.s8 %v1124
        %v1126 = vlaneseq
        %v1127 = vshrl.u32 %v1126, 7
        %v1128 = vsub.s32 %v1125, %v1127
        %v1129 = vrot.slane %v1115, %v1128
        %v1130 = vcombine.low %v1106, %v1122
        %v1131 = vcombine.high %v1106, %v1122
        %v1132 = vcombine.low %v1113, %v1129
        %v1133 = vcombine.high %v1113, %v1129
        %v1134 = vpack.c.bf16 %v836, %v836
        %v1135 = vpack.c.bf16 %v837, %v837
        %v1136 = vpack.c.bf16 %v838, %v838
        %v1137 = vpack.c.bf16 %v839, %v839
        %v1138 = vpack.c.bf16 %v984, %v984
        %v1139 = vpack.c.bf16 %v985, %v985
        %v1140 = vpack.c.bf16 %v986, %v986
        %v1141 = vpack.c.bf16 %v987, %v987
        %v1143 = vsel %vm513, %v1134, 0
        %v1146 = vsel %vm513, %v1138, 0
        %1148 = vmatprep.subr.bf16.mxu0 0
        %1149 = vmatpush1.bf16.xpose.msra.mxu0 %v1146
        %1150 = vmatprep.subr.bf16.mxu0 0
        %1151 = vmatpush1.bf16.xpose.msra.mxu0 0
        %1152 = vmatprep.subr.bf16.mxu0 0
        %1153 = vmatpush1.bf16.xpose.msra.mxu0 0
        %1154 = vmatprep.subr.bf16.mxu0 0
        %1155 = vmatpush1.bf16.xpose.msra.mxu0 0
        %1156 = vmatprep.subr.bf16.mxu0 0
        %1157 = vmatpush1.bf16.xpose.msra.mxu0 0
        %1158 = vmatprep.subr.bf16.mxu0 0
        %1159 = vmatpush1.bf16.xpose.msra.mxu0 0
        %1160 = vmatprep.subr.bf16.mxu0 0
        %1161 = vmatpush1.bf16.xpose.msra.mxu0 0
        %1162 = vmatprep.subr.bf16.mxu0 0
        %1163 = vmatpush1.bf16.xpose.msra.mxu0 0
        %1164 = vmatprep.subr.bf16.mxu0 0
        %1165 = vmatpush1.bf16.xpose.msra.mxu0 0
        %1166 = vmatprep.subr.bf16.mxu0 0
        %1167 = vmatpush1.bf16.xpose.msra.mxu0 0
        %1168 = vmatprep.subr.bf16.mxu0 0
        %1169 = vmatpush1.bf16.xpose.msra.mxu0 0
        %1170 = vmatprep.subr.bf16.mxu0 0
        %1171 = vmatpush1.bf16.xpose.msra.mxu0 0
        %1172 = vmatprep.subr.bf16.mxu0 0
        %1173 = vmatpush1.bf16.xpose.msra.mxu0 0
        %1174 = vmatprep.subr.bf16.mxu0 0
        %1175 = vmatpush1.bf16.xpose.msra.mxu0 0
        %1176 = vmatprep.subr.bf16.mxu0 0
        %1177 = vmatpush1.bf16.xpose.msra.mxu0 0
        %1178 = vmatprep.subr.bf16.mxu0 0
        %1179 = vmatpush1.bf16.xpose.msra.mxu0 0
        %1180 = vmatprep.mubr.bf16.mxu0 0
        %1181 = vmatmul.mubr.bf16.gmra.mrb[0].mxu0 %v1143
        %v1182 = vpop.f32.mrb[0].mxu0
        %v1183 = vadd.f32 0.0, %v1182
        %v1184 = vpop.f32.mrb[0].mxu0
        %v1185 = vpop.f32.mrb[0].mxu0
        %v1186 = vpop.f32.mrb[0].mxu0
        %1187 = vdwg.mxu0
        %v1189 = vsel %vm513, %v1135, 0
        %v1192 = vsel %vm513, %v1139, 0
        %1194 = vmatprep.subr.bf16.mxu0 0
        %1195 = vmatpush1.bf16.xpose.msra.mxu0 %v1192
        %1196 = vmatprep.subr.bf16.mxu0 0
        %1197 = vmatpush1.bf16.xpose.msra.mxu0 0
        %1198 = vmatprep.subr.bf16.mxu0 0
        %1199 = vmatpush1.bf16.xpose.msra.mxu0 0
        %1200 = vmatprep.subr.bf16.mxu0 0
        %1201 = vmatpush1.bf16.xpose.msra.mxu0 0
        %1202 = vmatprep.subr.bf16.mxu0 0
        %1203 = vmatpush1.bf16.xpose.msra.mxu0 0
        %1204 = vmatprep.subr.bf16.mxu0 0
        %1205 = vmatpush1.bf16.xpose.msra.mxu0 0
        %1206 = vmatprep.subr.bf16.mxu0 0
        %1207 = vmatpush1.bf16.xpose.msra.mxu0 0
        %1208 = vmatprep.subr.bf16.mxu0 0
        %1209 = vmatpush1.bf16.xpose.msra.mxu0 0
        %1210 = vmatprep.subr.bf16.mxu0 0
        %1211 = vmatpush1.bf16.xpose.msra.mxu0 0
        %1212 = vmatprep.subr.bf16.mxu0 0
        %1213 = vmatpush1.bf16.xpose.msra.mxu0 0
        %1214 = vmatprep.subr.bf16.mxu0 0
        %1215 = vmatpush1.bf16.xpose.msra.mxu0 0
        %1216 = vmatprep.subr.bf16.mxu0 0
        %1217 = vmatpush1.bf16.xpose.msra.mxu0 0
        %1218 = vmatprep.subr.bf16.mxu0 0
        %1219 = vmatpush1.bf16.xpose.msra.mxu0 0
        %1220 = vmatprep.subr.bf16.mxu0 0
        %1221 = vmatpush1.bf16.xpose.msra.mxu0 0
        %1222 = vmatprep.subr.bf16.mxu0 0
        %1223 = vmatpush1.bf16.xpose.msra.mxu0 0
        %1224 = vmatprep.subr.bf16.mxu0 0
        %1225 = vmatpush1.bf16.xpose.msra.mxu0 0
        %1226 = vmatprep.mubr.bf16.mxu0 0
        %1227 = vmatmul.mubr.bf16.gmra.mrb[0].mxu0 %v1189
        %v1228 = vpop.f32.mrb[0].mxu0
        %v1229 = vadd.f32 0.0, %v1228
        %v1230 = vpop.f32.mrb[0].mxu0
        %v1231 = vpop.f32.mrb[0].mxu0
        %v1232 = vpop.f32.mrb[0].mxu0
        %1233 = vdwg.mxu0
        %v1235 = vsel %vm513, %v1136, 0
        %v1238 = vsel %vm513, %v1140, 0
        %1240 = vmatprep.subr.bf16.mxu0 0
        %1241 = vmatpush1.bf16.xpose.msra.mxu0 %v1238
        %1242 = vmatprep.subr.bf16.mxu0 0
        %1243 = vmatpush1.bf16.xpose.msra.mxu0 0
        %1244 = vmatprep.subr.bf16.mxu0 0
        %1245 = vmatpush1.bf16.xpose.msra.mxu0 0
        %1246 = vmatprep.subr.bf16.mxu0 0
        %1247 = vmatpush1.bf16.xpose.msra.mxu0 0
        %1248 = vmatprep.subr.bf16.mxu0 0
        %1249 = vmatpush1.bf16.xpose.msra.mxu0 0
        %1250 = vmatprep.subr.bf16.mxu0 0
        %1251 = vmatpush1.bf16.xpose.msra.mxu0 0
        %1252 = vmatprep.subr.bf16.mxu0 0
        %1253 = vmatpush1.bf16.xpose.msra.mxu0 0
        %1254 = vmatprep.subr.bf16.mxu0 0
        %1255 = vmatpush1.bf16.xpose.msra.mxu0 0
        %1256 = vmatprep.subr.bf16.mxu0 0
        %1257 = vmatpush1.bf16.xpose.msra.mxu0 0
        %1258 = vmatprep.subr.bf16.mxu0 0
        %1259 = vmatpush1.bf16.xpose.msra.mxu0 0
        %1260 = vmatprep.subr.bf16.mxu0 0
        %1261 = vmatpush1.bf16.xpose.msra.mxu0 0
        %1262 = vmatprep.subr.bf16.mxu0 0
        %1263 = vmatpush1.bf16.xpose.msra.mxu0 0
        %1264 = vmatprep.subr.bf16.mxu0 0
        %1265 = vmatpush1.bf16.xpose.msra.mxu0 0
        %1266 = vmatprep.subr.bf16.mxu0 0
        %1267 = vmatpush1.bf16.xpose.msra.mxu0 0
        %1268 = vmatprep.subr.bf16.mxu0 0
        %1269 = vmatpush1.bf16.xpose.msra.mxu0 0
        %1270 = vmatprep.subr.bf16.mxu0 0
        %1271 = vmatpush1.bf16.xpose.msra.mxu0 0
        %1272 = vmatprep.mubr.bf16.mxu0 0
        %1273 = vmatmul.mubr.bf16.gmra.mrb[0].mxu0 %v1235
        %v1274 = vpop.f32.mrb[0].mxu0
        %v1275 = vadd.f32 0.0, %v1274
        %v1276 = vpop.f32.mrb[0].mxu0
        %v1277 = vpop.f32.mrb[0].mxu0
        %v1278 = vpop.f32.mrb[0].mxu0
        %1279 = vdwg.mxu0
        %v1281 = vsel %vm513, %v1137, 0
        %v1284 = vsel %vm513, %v1141, 0
        %1286 = vmatprep.subr.bf16.mxu0 0
        %1287 = vmatpush1.bf16.xpose.msra.mxu0 %v1284
        %1288 = vmatprep.subr.bf16.mxu0 0
        %1289 = vmatpush1.bf16.xpose.msra.mxu0 0
        %1290 = vmatprep.subr.bf16.mxu0 0
        %1291 = vmatpush1.bf16.xpose.msra.mxu0 0
        %1292 = vmatprep.subr.bf16.mxu0 0
        %1293 = vmatpush1.bf16.xpose.msra.mxu0 0
        %1294 = vmatprep.subr.bf16.mxu0 0
        %1295 = vmatpush1.bf16.xpose.msra.mxu0 0
        %1296 = vmatprep.subr.bf16.mxu0 0
        %1297 = vmatpush1.bf16.xpose.msra.mxu0 0
        %1298 = vmatprep.subr.bf16.mxu0 0
        %1299 = vmatpush1.bf16.xpose.msra.mxu0 0
        %1300 = vmatprep.subr.bf16.mxu0 0
        %1301 = vmatpush1.bf16.xpose.msra.mxu0 0
        %1302 = vmatprep.subr.bf16.mxu0 0
        %1303 = vmatpush1.bf16.xpose.msra.mxu0 0
        %1304 = vmatprep.subr.bf16.mxu0 0
        %1305 = vmatpush1.bf16.xpose.msra.mxu0 0
        %1306 = vmatprep.subr.bf16.mxu0 0
        %1307 = vmatpush1.bf16.xpose.msra.mxu0 0
        %1308 = vmatprep.subr.bf16.mxu0 0
        %1309 = vmatpush1.bf16.xpose.msra.mxu0 0
        %1310 = vmatprep.subr.bf16.mxu0 0
        %1311 = vmatpush1.bf16.xpose.msra.mxu0 0
        %1312 = vmatprep.subr.bf16.mxu0 0
        %1313 = vmatpush1.bf16.xpose.msra.mxu0 0
        %1314 = vmatprep.subr.bf16.mxu0 0
        %1315 = vmatpush1.bf16.xpose.msra.mxu0 0
        %1316 = vmatprep.subr.bf16.mxu0 0
        %1317 = vmatpush1.bf16.xpose.msra.mxu0 0
        %1318 = vmatprep.mubr.bf16.mxu0 0
        %1319 = vmatmul.mubr.bf16.gmra.mrb[0].mxu0 %v1281
        %v1320 = vpop.f32.mrb[0].mxu0
        %v1321 = vadd.f32 0.0, %v1320
        %v1322 = vpop.f32.mrb[0].mxu0
        %v1323 = vpop.f32.mrb[0].mxu0
        %v1324 = vpop.f32.mrb[0].mxu0
        %1325 = vdwg.mxu0
        %v1326 = vsel %vm574, 1, 0
        %vm1327 = vcmp.eq.s32.totalorder %v1326, 1
        %v1328 = vsel %vm1327, %v1183, -inf
        %v1329 = vsel %vm1327, %v1229, -inf
        %v1330 = vsel %vm1327, %v1275, -inf
        %v1331 = vsel %vm1327, %v1321, -inf
        %vm1332 = vcmask 64512
        %v1333 = vsel %vm1332, %v1328, -inf
        %1334 = vmax.xlane.f32.xlu0 %v1333
        %v1335 = vpop.xlane.xlu0 %1334
        %v1336 = vsel %vm1332, %v1329, -inf
        %1337 = vmax.xlane.f32.xlu0 %v1336
        %v1338 = vpop.xlane.xlu0 %1337
        %v1339 = vsel %vm1332, %v1330, -inf
        %1340 = vmax.xlane.f32.xlu0 %v1339
        %v1341 = vpop.xlane.xlu0 %1340
        %v1342 = vsel %vm1332, %v1331, -inf
        %1343 = vmax.xlane.f32.xlu0 %v1342
        %v1344 = vpop.xlane.xlu0 %1343
        %v1345 = vsub.f32 %v1328, %v1335
        %v1346 = vsub.f32 %v1329, %v1338
        %v1347 = vsub.f32 %v1330, %v1341
        %v1348 = vsub.f32 %v1331, %v1344
        %v1349 = vmul.f32 %v1345, 1.442695
        %v1350 = vpow.pop %v1349
        %v1351 = vmul.f32 %v1346, 1.442695
        %v1352 = vpow.pop %v1351
        %v1353 = vmul.f32 %v1347, 1.442695
        %v1354 = vpow.pop %v1353
        %v1355 = vmul.f32 %v1348, 1.442695
        %v1356 = vpow.pop %v1355
        %v1357 = vsel %vm1332, %v1350, 0.0
        %1358 = vadd.xlane.f32.xlu0 %v1357
        %v1359 = vpop.xlane.xlu0 %1358
        %v1360 = vsel %vm1332, %v1352, 0.0
        %1361 = vadd.xlane.f32.xlu0 %v1360
        %v1362 = vpop.xlane.xlu0 %1361
        %v1363 = vsel %vm1332, %v1354, 0.0
        %1364 = vadd.xlane.f32.xlu0 %v1363
        %v1365 = vpop.xlane.xlu0 %1364
        %v1366 = vsel %vm1332, %v1356, 0.0
        %1367 = vadd.xlane.f32.xlu0 %v1366
        %v1368 = vpop.xlane.xlu0 %1367
        %v1369 = vrcp.pop %v1359
        %v1370 = vrcp.pop %v1362
        %v1371 = vrcp.pop %v1365
        %v1372 = vrcp.pop %v1368
        %v1373 = vmul.f32 %v1350, %v1369
        %v1374 = vmul.f32 %v1352, %v1370
        %v1375 = vmul.f32 %v1354, %v1371
        %v1376 = vmul.f32 %v1356, %v1372
        %v1377 = vpack.c.bf16 %v1373, %v1373
        %v1378 = vpack.c.bf16 %v1374, %v1374
        %v1379 = vpack.c.bf16 %v1375, %v1375
        %v1380 = vpack.c.bf16 %v1376, %v1376
        %v1381 = vpack.c.bf16 %v1130, %v1130
        %v1382 = vpack.c.bf16 %v1131, %v1131
        %v1383 = vpack.c.bf16 %v1132, %v1132
        %v1384 = vpack.c.bf16 %v1133, %v1133
        %v1386 = vsel %vm1332, %v1377, 0
        %vm1388 = vcmask 1043456
        %v1390 = vsel %vm1388, %v1381, 0
        %1392 = vmatprep.subr.bf16.mxu0 0
        %1393 = vmatpush1.bf16.msra.mxu0 %v1390
        %1394 = vmatprep.subr.bf16.mxu0 0
        %1395 = vmatpush1.bf16.msra.mxu0 0
        %1396 = vmatprep.subr.bf16.mxu0 0
        %1397 = vmatpush1.bf16.msra.mxu0 0
        %1398 = vmatprep.subr.bf16.mxu0 0
        %1399 = vmatpush1.bf16.msra.mxu0 0
        %1400 = vmatprep.subr.bf16.mxu0 0
        %1401 = vmatpush1.bf16.msra.mxu0 0
        %1402 = vmatprep.subr.bf16.mxu0 0
        %1403 = vmatpush1.bf16.msra.mxu0 0
        %1404 = vmatprep.subr.bf16.mxu0 0
        %1405 = vmatpush1.bf16.msra.mxu0 0
        %1406 = vmatprep.subr.bf16.mxu0 0
        %1407 = vmatpush1.bf16.msra.mxu0 0
        %1408 = vmatprep.subr.bf16.mxu0 0
        %1409 = vmatpush1.bf16.msra.mxu0 0
        %1410 = vmatprep.subr.bf16.mxu0 0
        %1411 = vmatpush1.bf16.msra.mxu0 0
        %1412 = vmatprep.subr.bf16.mxu0 0
        %1413 = vmatpush1.bf16.msra.mxu0 0
        %1414 = vmatprep.subr.bf16.mxu0 0
        %1415 = vmatpush1.bf16.msra.mxu0 0
        %1416 = vmatprep.subr.bf16.mxu0 0
        %1417 = vmatpush1.bf16.msra.mxu0 0
        %1418 = vmatprep.subr.bf16.mxu0 0
        %1419 = vmatpush1.bf16.msra.mxu0 0
        %1420 = vmatprep.subr.bf16.mxu0 0
        %1421 = vmatpush1.bf16.msra.mxu0 0
        %1422 = vmatprep.subr.bf16.mxu0 0
        %1423 = vmatpush1.bf16.msra.mxu0 0
        %1424 = vmatprep.mubr.bf16.mxu0 0
        %1425 = vmatmul.mubr.bf16.gmra.mrb[0].mxu0 %v1386
        %v1426 = vpop.f32.mrb[0].mxu0
        %v1427 = vadd.f32 0.0, %v1426
        %v1428 = vpop.f32.mrb[0].mxu0
        %v1429 = vpop.f32.mrb[0].mxu0
        %v1430 = vpop.f32.mrb[0].mxu0
        %1431 = vdwg.mxu0
        %v1433 = vsel %vm1332, %v1378, 0
        %v1436 = vsel %vm1388, %v1382, 0
        %1438 = vmatprep.subr.bf16.mxu0 0
        %1439 = vmatpush1.bf16.msra.mxu0 %v1436
        %1440 = vmatprep.subr.bf16.mxu0 0
        %1441 = vmatpush1.bf16.msra.mxu0 0
        %1442 = vmatprep.subr.bf16.mxu0 0
        %1443 = vmatpush1.bf16.msra.mxu0 0
        %1444 = vmatprep.subr.bf16.mxu0 0
        %1445 = vmatpush1.bf16.msra.mxu0 0
        %1446 = vmatprep.subr.bf16.mxu0 0
        %1447 = vmatpush1.bf16.msra.mxu0 0
        %1448 = vmatprep.subr.bf16.mxu0 0
        %1449 = vmatpush1.bf16.msra.mxu0 0
        %1450 = vmatprep.subr.bf16.mxu0 0
        %1451 = vmatpush1.bf16.msra.mxu0 0
        %1452 = vmatprep.subr.bf16.mxu0 0
        %1453 = vmatpush1.bf16.msra.mxu0 0
        %1454 = vmatprep.subr.bf16.mxu0 0
        %1455 = vmatpush1.bf16.msra.mxu0 0
        %1456 = vmatprep.subr.bf16.mxu0 0
        %1457 = vmatpush1.bf16.msra.mxu0 0
        %1458 = vmatprep.subr.bf16.mxu0 0
        %1459 = vmatpush1.bf16.msra.mxu0 0
        %1460 = vmatprep.subr.bf16.mxu0 0
        %1461 = vmatpush1.bf16.msra.mxu0 0
        %1462 = vmatprep.subr.bf16.mxu0 0
        %1463 = vmatpush1.bf16.msra.mxu0 0
        %1464 = vmatprep.subr.bf16.mxu0 0
        %1465 = vmatpush1.bf16.msra.mxu0 0
        %1466 = vmatprep.subr.bf16.mxu0 0
        %1467 = vmatpush1.bf16.msra.mxu0 0
        %1468 = vmatprep.subr.bf16.mxu0 0
        %1469 = vmatpush1.bf16.msra.mxu0 0
        %1470 = vmatprep.mubr.bf16.mxu0 0
        %1471 = vmatmul.mubr.bf16.gmra.mrb[0].mxu0 %v1433
        %v1472 = vpop.f32.mrb[0].mxu0
        %v1473 = vadd.f32 0.0, %v1472
        %v1474 = vpop.f32.mrb[0].mxu0
        %v1475 = vpop.f32.mrb[0].mxu0
        %v1476 = vpop.f32.mrb[0].mxu0
        %1477 = vdwg.mxu0
        %v1479 = vsel %vm1332, %v1379, 0
        %v1482 = vsel %vm1388, %v1383, 0
        %1484 = vmatprep.subr.bf16.mxu0 0
        %1485 = vmatpush1.bf16.msra.mxu0 %v1482
        %1486 = vmatprep.subr.bf16.mxu0 0
        %1487 = vmatpush1.bf16.msra.mxu0 0
        %1488 = vmatprep.subr.bf16.mxu0 0
        %1489 = vmatpush1.bf16.msra.mxu0 0
        %1490 = vmatprep.subr.bf16.mxu0 0
        %1491 = vmatpush1.bf16.msra.mxu0 0
        %1492 = vmatprep.subr.bf16.mxu0 0
        %1493 = vmatpush1.bf16.msra.mxu0 0
        %1494 = vmatprep.subr.bf16.mxu0 0
        %1495 = vmatpush1.bf16.msra.mxu0 0
        %1496 = vmatprep.subr.bf16.mxu0 0
        %1497 = vmatpush1.bf16.msra.mxu0 0
        %1498 = vmatprep.subr.bf16.mxu0 0
        %1499 = vmatpush1.bf16.msra.mxu0 0
        %1500 = vmatprep.subr.bf16.mxu0 0
        %1501 = vmatpush1.bf16.msra.mxu0 0
        %1502 = vmatprep.subr.bf16.mxu0 0
        %1503 = vmatpush1.bf16.msra.mxu0 0
        %1504 = vmatprep.subr.bf16.mxu0 0
        %1505 = vmatpush1.bf16.msra.mxu0 0
        %1506 = vmatprep.subr.bf16.mxu0 0
        %1507 = vmatpush1.bf16.msra.mxu0 0
        %1508 = vmatprep.subr.bf16.mxu0 0
        %1509 = vmatpush1.bf16.msra.mxu0 0
        %1510 = vmatprep.subr.bf16.mxu0 0
        %1511 = vmatpush1.bf16.msra.mxu0 0
        %1512 = vmatprep.subr.bf16.mxu0 0
        %1513 = vmatpush1.bf16.msra.mxu0 0
        %1514 = vmatprep.subr.bf16.mxu0 0
        %1515 = vmatpush1.bf16.msra.mxu0 0
        %1516 = vmatprep.mubr.bf16.mxu0 0
        %1517 = vmatmul.mubr.bf16.gmra.mrb[0].mxu0 %v1479
        %v1518 = vpop.f32.mrb[0].mxu0
        %v1519 = vadd.f32 0.0, %v1518
        %v1520 = vpop.f32.mrb[0].mxu0
        %v1521 = vpop.f32.mrb[0].mxu0
        %v1522 = vpop.f32.mrb[0].mxu0
        %1523 = vdwg.mxu0
        %v1525 = vsel %vm1332, %v1380, 0
        %v1528 = vsel %vm1388, %v1384, 0
        %1530 = vmatprep.subr.bf16.mxu0 0
        %1531 = vmatpush1.bf16.msra.mxu0 %v1528
        %1532 = vmatprep.subr.bf16.mxu0 0
        %1533 = vmatpush1.bf16.msra.mxu0 0
        %1534 = vmatprep.subr.bf16.mxu0 0
        %1535 = vmatpush1.bf16.msra.mxu0 0
        %1536 = vmatprep.subr.bf16.mxu0 0
        %1537 = vmatpush1.bf16.msra.mxu0 0
        %1538 = vmatprep.subr.bf16.mxu0 0
        %1539 = vmatpush1.bf16.msra.mxu0 0
        %1540 = vmatprep.subr.bf16.mxu0 0
        %1541 = vmatpush1.bf16.msra.mxu0 0
        %1542 = vmatprep.subr.bf16.mxu0 0
        %1543 = vmatpush1.bf16.msra.mxu0 0
        %1544 = vmatprep.subr.bf16.mxu0 0
        %1545 = vmatpush1.bf16.msra.mxu0 0
        %1546 = vmatprep.subr.bf16.mxu0 0
        %1547 = vmatpush1.bf16.msra.mxu0 0
        %1548 = vmatprep.subr.bf16.mxu0 0
        %1549 = vmatpush1.bf16.msra.mxu0 0
        %1550 = vmatprep.subr.bf16.mxu0 0
        %1551 = vmatpush1.bf16.msra.mxu0 0
        %1552 = vmatprep.subr.bf16.mxu0 0
        %1553 = vmatpush1.bf16.msra.mxu0 0
        %1554 = vmatprep.subr.bf16.mxu0 0
        %1555 = vmatpush1.bf16.msra.mxu0 0
        %1556 = vmatprep.subr.bf16.mxu0 0
        %1557 = vmatpush1.bf16.msra.mxu0 0
        %1558 = vmatprep.subr.bf16.mxu0 0
        %1559 = vmatpush1.bf16.msra.mxu0 0
        %1560 = vmatprep.subr.bf16.mxu0 0
        %1561 = vmatpush1.bf16.msra.mxu0 0
        %1562 = vmatprep.mubr.bf16.mxu0 0
        %1563 = vmatmul.mubr.bf16.gmra.mrb[0].mxu0 %v1525
        %v1564 = vpop.f32.mrb[0].mxu0
        %v1565 = vadd.f32 0.0, %v1564
        %v1566 = vpop.f32.mrb[0].mxu0
        %v1567 = vpop.f32.mrb[0].mxu0
        %v1568 = vpop.f32.mrb[0].mxu0
        %1569 = vdwg.mxu0
        %v1570 = vcombine.low %v1427, %v1519
        %v1571 = vcombine.high %v1427, %v1519
        %v1573 = vunpack.c.l.s4 1983009808
        %v1574 = vunpack.c.0.s8 %v1573
        %v1575 = vlaneseq
        %v1576 = vshrl.u32 %v1575, 7
        %v1577 = vsub.s32 %v1574, %v1576
        %v1578 = vrot.slane %v1570, %v1577
        %v1580 = vunpack.c.l.s4 1983009808
        %v1581 = vunpack.c.0.s8 %v1580
        %v1582 = vlaneseq
        %v1583 = vshrl.u32 %v1582, 7
        %v1584 = vsub.s32 %v1581, %v1583
        %v1585 = vrot.slane %v1571, %v1584
        %v1586 = vcombine.low %v1473, %v1565
        %v1587 = vcombine.high %v1473, %v1565
        %v1589 = vunpack.c.l.s4 1983009808
        %v1590 = vunpack.c.0.s8 %v1589
        %v1591 = vlaneseq
        %v1592 = vshrl.u32 %v1591, 7
        %v1593 = vsub.s32 %v1590, %v1592
        %v1594 = vrot.slane %v1586, %v1593
        %v1596 = vunpack.c.l.s4 1983009808
        %v1597 = vunpack.c.0.s8 %v1596
        %v1598 = vlaneseq
        %v1599 = vshrl.u32 %v1598, 7
        %v1600 = vsub.s32 %v1597, %v1599
        %v1601 = vrot.slane %v1587, %v1600
        %v1602 = vcombine.low %v1578, %v1594
        %v1603 = vcombine.high %v1578, %v1594
        %v1605 = vunpack.c.l.s4 1934713408
        %v1606 = vunpack.c.0.s8 %v1605
        %v1607 = vlaneseq
        %v1608 = vshrl.u32 %v1607, 7
        %v1609 = vsub.s32 %v1606, %v1608
        %v1610 = vrot.slane %v1602, %v1609
        %v1612 = vunpack.c.l.s4 1934713408
        %v1613 = vunpack.c.0.s8 %v1612
        %v1614 = vlaneseq
        %v1615 = vshrl.u32 %v1614, 7
        %v1616 = vsub.s32 %v1613, %v1615
        %v1617 = vrot.slane %v1603, %v1616
        %v1618 = vcombine.low %v1585, %v1601
        %v1619 = vcombine.high %v1585, %v1601
        %v1621 = vunpack.c.l.s4 1934713408
        %v1622 = vunpack.c.0.s8 %v1621
        %v1623 = vlaneseq
        %v1624 = vshrl.u32 %v1623, 7
        %v1625 = vsub.s32 %v1622, %v1624
        %v1626 = vrot.slane %v1618, %v1625
        %v1628 = vunpack.c.l.s4 1934713408
        %v1629 = vunpack.c.0.s8 %v1628
        %v1630 = vlaneseq
        %v1631 = vshrl.u32 %v1630, 7
        %v1632 = vsub.s32 %v1629, %v1631
        %v1633 = vrot.slane %v1619, %v1632
        %v1634 = vcombine.high %v1610, 0.0
        %v1635 = vcombine.high %v1617, 0.0
        %v1636 = vcombine.high %v1626, 0.0
        %v1637 = vcombine.high %v1633, 0.0
        %v1638 = vcombine.low %v1610, %v1617
        %v1640 = vunpack.c.l.s4 1983009808
        %v1641 = vunpack.c.0.s8 %v1640
        %v1642 = vlaneseq
        %v1643 = vshrl.u32 %v1642, 7
        %v1644 = vsub.s32 %v1641, %v1643
        %v1645 = vrot.slane %v1638, %v1644
        %v1646 = vcombine.low %v1634, %v1635
        %v1648 = vunpack.c.l.s4 1983009808
        %v1649 = vunpack.c.0.s8 %v1648
        %v1650 = vlaneseq
        %v1651 = vshrl.u32 %v1650, 7
        %v1652 = vsub.s32 %v1649, %v1651
        %v1653 = vrot.slane %v1646, %v1652
        %v1654 = vcombine.low %v1626, %v1633
        %v1656 = vunpack.c.l.s4 1983009808
        %v1657 = vunpack.c.0.s8 %v1656
        %v1658 = vlaneseq
        %v1659 = vshrl.u32 %v1658, 7
        %v1660 = vsub.s32 %v1657, %v1659
        %v1661 = vrot.slane %v1654, %v1660
        %v1662 = vcombine.low %v1636, %v1637
        %v1664 = vunpack.c.l.s4 1983009808
        %v1665 = vunpack.c.0.s8 %v1664
        %v1666 = vlaneseq
        %v1667 = vshrl.u32 %v1666, 7
        %v1668 = vsub.s32 %v1665, %v1667
        %v1669 = vrot.slane %v1662, %v1668
        %v1670 = vcombine.low %v1645, %v1653
        %v1671 = vcombine.high %v1645, %v1653
        %v1673 = vunpack.c.l.s4 1934713408
        %v1674 = vunpack.c.0.s8 %v1673
        %v1675 = vlaneseq
        %v1676 = vshrl.u32 %v1675, 7
        %v1677 = vsub.s32 %v1674, %v1676
        %v1678 = vrot.slane %v1670, %v1677
        %v1680 = vunpack.c.l.s4 1934713408
        %v1681 = vunpack.c.0.s8 %v1680
        %v1682 = vlaneseq
        %v1683 = vshrl.u32 %v1682, 7
        %v1684 = vsub.s32 %v1681, %v1683
        %v1685 = vrot.slane %v1671, %v1684
        %v1686 = vcombine.low %v1661, %v1669
        %v1687 = vcombine.high %v1661, %v1669
        %v1689 = vunpack.c.l.s4 1934713408
        %v1690 = vunpack.c.0.s8 %v1689
        %v1691 = vlaneseq
        %v1692 = vshrl.u32 %v1691, 7
        %v1693 = vsub.s32 %v1690, %v1692
        %v1694 = vrot.slane %v1686, %v1693
        %v1696 = vunpack.c.l.s4 1934713408
        %v1697 = vunpack.c.0.s8 %v1696
        %v1698 = vlaneseq
        %v1699 = vshrl.u32 %v1698, 7
        %v1700 = vsub.s32 %v1697, %v1699
        %v1701 = vrot.slane %v1687, %v1700
        %v1702 = vcombine.low %v1678, %v1694
        %v1703 = vcombine.high %v1678, %v1694
        %v1704 = vcombine.low %v1685, %v1701
        %v1705 = vcombine.high %v1685, %v1701
        %1707 = vrot.lane.b32.xlu0 %v1703, 16
        %v1708 = vpop.permute.xlu0 %1707
        %1711 = vrot.lane.b32.xlu0 %v1704, 32
        %v1712 = vpop.permute.xlu0 %1711
        %1715 = vrot.lane.b32.xlu0 %v1705, 48
        %v1716 = vpop.permute.xlu0 %1715
        %v1718 = vsel %vm513, %v1702, %v1708
        %v1719 = vsel %vm515, %v1718, %v1712
        %v1720 = vsel %vm517, %v1719, %v1716
        %v1721 = vld [vmem:[#allocation8] sm:$0xf]
        %v1722 = vld [vmem:[#allocation8 + $0x4] sm:$0xf]
        %v1723 = vld [vmem:[#allocation8 + $0x8] sm:$0xf]
        %v1724 = vld [vmem:[#allocation8 + $0xc] sm:$0xf]
        %v1725 = vld [vmem:[#allocation8 + $0x10] sm:$0xf]
        %v1726 = vld [vmem:[#allocation8 + $0x14] sm:$0xf]
        %v1727 = vld [vmem:[#allocation8 + $0x18] sm:$0xf]
        %v1728 = vld [vmem:[#allocation8 + $0x1c] sm:$0xf]
        %v1729 = vpack.c.bf16 %v1720, %v1720
        %v1738 = vunpack.c.l.b16 %v1721
        %v1739 = vunpack.c.l.b16 %v1722
        %v1740 = vunpack.c.l.b16 %v1723
        %v1741 = vunpack.c.l.b16 %v1724
        %v1742 = vunpack.c.l.b16 %v1725
        %v1743 = vunpack.c.l.b16 %v1726
        %v1744 = vunpack.c.l.b16 %v1727
        %v1745 = vunpack.c.l.b16 %v1728
        %v1746 = vpack.c.b16 %v1739, %v1738
        %v1747 = vpack.c.b16 %v1741, %v1740
        %v1748 = vpack.c.b16 %v1743, %v1742
        %v1749 = vpack.c.b16 %v1745, %v1744
        %v1755 = vsel %vm519, %v1729, 0
        %1757 = vmatprep.subr.bf16.mxu0 0
        %1758 = vmatpush1.bf16.msra.mxu0 %v1746
        %1759 = vmatprep.subr.bf16.mxu0 0
        %1760 = vmatpush1.bf16.msra.mxu0 %v1747
        %1761 = vmatprep.subr.bf16.mxu0 0
        %1762 = vmatpush1.bf16.msra.mxu0 %v1748
        %1763 = vmatprep.subr.bf16.mxu0 0
        %1764 = vmatpush1.bf16.msra.mxu0 %v1749
        %1765 = vmatprep.subr.bf16.mxu0 0
        %1766 = vmatpush1.bf16.msra.mxu0 0
        %1767 = vmatprep.subr.bf16.mxu0 0
        %1768 = vmatpush1.bf16.msra.mxu0 0
        %1769 = vmatprep.subr.bf16.mxu0 0
        %1770 = vmatpush1.bf16.msra.mxu0 0
        %1771 = vmatprep.subr.bf16.mxu0 0
        %1772 = vmatpush1.bf16.msra.mxu0 0
        %1773 = vmatprep.subr.bf16.mxu0 0
        %1774 = vmatpush1.bf16.msra.mxu0 0
        %1775 = vmatprep.subr.bf16.mxu0 0
        %1776 = vmatpush1.bf16.msra.mxu0 0
        %1777 = vmatprep.subr.bf16.mxu0 0
        %1778 = vmatpush1.bf16.msra.mxu0 0
        %1779 = vmatprep.subr.bf16.mxu0 0
        %1780 = vmatpush1.bf16.msra.mxu0 0
        %1781 = vmatprep.subr.bf16.mxu0 0
        %1782 = vmatpush1.bf16.msra.mxu0 0
        %1783 = vmatprep.subr.bf16.mxu0 0
        %1784 = vmatpush1.bf16.msra.mxu0 0
        %1785 = vmatprep.subr.bf16.mxu0 0
        %1786 = vmatpush1.bf16.msra.mxu0 0
        %1787 = vmatprep.subr.bf16.mxu0 0
        %1788 = vmatpush1.bf16.msra.mxu0 0
        %1789 = vmatprep.mubr.bf16.mxu0 0
        %1790 = vmatmul.mubr.bf16.gmra.mrb[0].mxu0 %v1755
        %v1791 = vpop.f32.mrb[0].mxu0
        %v1792 = vadd.f32 0.0, %v1791
        %v1793 = vpop.f32.mrb[0].mxu0
        %v1794 = vpop.f32.mrb[0].mxu0
        %v1795 = vpop.f32.mrb[0].mxu0
        %1796 = vdwg.mxu0
        %v1797 = vadd.f32 %v575, %v1792
        %v1798 = vld [vmem:[#allocation5] sm:$0x1]
        %v1799 = vmul.f32 %v1797, %v1797
        %v1800 = vsel %vm519, %v1799, 0.0
        %1801 = vadd.xlane.f32.xlu0 %v1800
        %v1802 = vpop.xlane.xlu0 %1801
        %v1803 = vmul.f32 %v1802, %v581
        %v1804 = vadd.f32 %v1803, 1e-05
        %v1805 = vrsqrt.pop %v1804
        %v1806 = vmul.f32 %v1797, %v1805
        %v1808 = vlaneseq
        %v1809 = vshrl.u32 %v1808, 7
        %v1810 = vsub.s32 0, %v1809
        %v1811 = vrot.slane %v1798, %v1810
        %v1813 = vmul.f32 %v1806, %v1811
        %v1814 = vld [vmem:[#allocation10] sm:$0xf]
        %v1815 = vld [vmem:[#allocation10 + $0x4] sm:$0xf]
        %v1816 = vld [vmem:[#allocation10 + $0x8] sm:$0xf]
        %v1817 = vld [vmem:[#allocation10 + $0xc] sm:$0xf]
        %v1818 = vld [vmem:[#allocation10 + $0x10] sm:$0xf]
        %v1819 = vld [vmem:[#allocation10 + $0x14] sm:$0xf]
        %v1820 = vld [vmem:[#allocation10 + $0x18] sm:$0xf]
        %v1821 = vld [vmem:[#allocation10 + $0x1c] sm:$0xf]
        %v1822 = vpack.c.bf16 %v1813, %v1813
        %v1831 = vunpack.c.l.b16 %v1814
        %v1832 = vunpack.c.l.b16 %v1815
        %v1833 = vunpack.c.l.b16 %v1816
        %v1834 = vunpack.c.l.b16 %v1817
        %v1835 = vunpack.c.l.b16 %v1818
        %v1836 = vunpack.c.l.b16 %v1819
        %v1837 = vunpack.c.l.b16 %v1820
        %v1838 = vunpack.c.l.b16 %v1821
        %v1839 = vpack.c.b16 %v1832, %v1831
        %v1840 = vpack.c.b16 %v1834, %v1833
        %v1841 = vpack.c.b16 %v1836, %v1835
        %v1842 = vpack.c.b16 %v1838, %v1837
        %v1848 = vsel %vm519, %v1822, 0
        %1850 = vmatprep.subr.bf16.mxu0 0
        %1851 = vmatpush1.bf16.msra.mxu0 %v1839
        %1852 = vmatprep.subr.bf16.mxu0 0
        %1853 = vmatpush1.bf16.msra.mxu0 %v1840
        %1854 = vmatprep.subr.bf16.mxu0 0
        %1855 = vmatpush1.bf16.msra.mxu0 %v1841
        %1856 = vmatprep.subr.bf16.mxu0 0
        %1857 = vmatpush1.bf16.msra.mxu0 %v1842
        %1858 = vmatprep.subr.bf16.mxu0 0
        %1859 = vmatpush1.bf16.msra.mxu0 0
        %1860 = vmatprep.subr.bf16.mxu0 0
        %1861 = vmatpush1.bf16.msra.mxu0 0
        %1862 = vmatprep.subr.bf16.mxu0 0
        %1863 = vmatpush1.bf16.msra.mxu0 0
        %1864 = vmatprep.subr.bf16.mxu0 0
        %1865 = vmatpush1.bf16.msra.mxu0 0
        %1866 = vmatprep.subr.bf16.mxu0 0
        %1867 = vmatpush1.bf16.msra.mxu0 0
        %1868 = vmatprep.subr.bf16.mxu0 0
        %1869 = vmatpush1.bf16.msra.mxu0 0
        %1870 = vmatprep.subr.bf16.mxu0 0
        %1871 = vmatpush1.bf16.msra.mxu0 0
        %1872 = vmatprep.subr.bf16.mxu0 0
        %1873 = vmatpush1.bf16.msra.mxu0 0
        %1874 = vmatprep.subr.bf16.mxu0 0
        %1875 = vmatpush1.bf16.msra.mxu0 0
        %1876 = vmatprep.subr.bf16.mxu0 0
        %1877 = vmatpush1.bf16.msra.mxu0 0
        %1878 = vmatprep.subr.bf16.mxu0 0
        %1879 = vmatpush1.bf16.msra.mxu0 0
        %1880 = vmatprep.subr.bf16.mxu0 0
        %1881 = vmatpush1.bf16.msra.mxu0 0
        %1882 = vmatprep.mubr.bf16.mxu0 0
        %1883 = vmatmul.mubr.bf16.gmra.mrb[0].mxu0 %v1848
        %v1884 = vpop.f32.mrb[0].mxu0
        %v1885 = vadd.f32 0.0, %v1884
        %v1886 = vpop.f32.mrb[0].mxu0
        %v1887 = vpop.f32.mrb[0].mxu0
        %v1888 = vpop.f32.mrb[0].mxu0
        %1889 = vdwg.mxu0
        %v1890 = vxor.u32 %v1885, 2147483648
        %v1891 = vmul.f32 %v1890, 1.442695
        %v1892 = vpow.pop %v1891
        %v1893 = vadd.f32 %v1892, 1.0
        %v1894 = vrcp.pop %v1893
        %v1895 = vmul.f32 1.0, %v1894
        %v1896 = vmul.f32 %v1885, %v1895
        %1898 = vrot.lane.b32.xlu0 %v1885, 80
        %v1899 = vpop.permute.xlu0 %1898
        %v1901 = vmul.f32 %v1896, %v1899
        %v1902 = vld [vmem:[#allocation11] sm:$0xf]
        %v1903 = vld [vmem:[#allocation11 + $0x4] sm:$0xf]
        %v1904 = vld [vmem:[#allocation11 + $0x8] sm:$0xf]
        %v1905 = vld [vmem:[#allocation11 + $0xc] sm:$0xf]
        %v1906 = vld [vmem:[#allocation11 + $0x10] sm:$0xf]
        %v1907 = vld [vmem:[#allocation11 + $0x14] sm:$0xf]
        %v1908 = vpack.c.bf16 %v1901, %v1901
        %v1915 = vunpack.c.l.b16 %v1902
        %v1916 = vunpack.c.l.b16 %v1903
        %v1917 = vunpack.c.l.b16 %v1904
        %v1918 = vunpack.c.l.b16 %v1905
        %v1919 = vunpack.c.l.b16 %v1906
        %v1920 = vunpack.c.l.b16 %v1907
        %v1921 = vpack.c.b16 %v1916, %v1915
        %v1922 = vpack.c.b16 %v1918, %v1917
        %v1923 = vpack.c.b16 %v1920, %v1919
        %v1928 = vsel %vm517, %v1908, 0
        %1930 = vmatprep.subr.bf16.mxu0 0
        %1931 = vmatpush1.bf16.msra.mxu0 %v1921
        %1932 = vmatprep.subr.bf16.mxu0 0
        %1933 = vmatpush1.bf16.msra.mxu0 %v1922
        %1934 = vmatprep.subr.bf16.mxu0 0
        %1935 = vmatpush1.bf16.msra.mxu0 %v1923
        %1936 = vmatprep.subr.bf16.mxu0 0
        %1937 = vmatpush1.bf16.msra.mxu0 0
        %1938 = vmatprep.subr.bf16.mxu0 0
        %1939 = vmatpush1.bf16.msra.mxu0 0
        %1940 = vmatprep.subr.bf16.mxu0 0
        %1941 = vmatpush1.bf16.msra.mxu0 0
        %1942 = vmatprep.subr.bf16.mxu0 0
        %1943 = vmatpush1.bf16.msra.mxu0 0
        %1944 = vmatprep.subr.bf16.mxu0 0
        %1945 = vmatpush1.bf16.msra.mxu0 0
        %1946 = vmatprep.subr.bf16.mxu0 0
        %1947 = vmatpush1.bf16.msra.mxu0 0
        %1948 = vmatprep.subr.bf16.mxu0 0
        %1949 = vmatpush1.bf16.msra.mxu0 0
        %1950 = vmatprep.subr.bf16.mxu0 0
        %1951 = vmatpush1.bf16.msra.mxu0 0
        %1952 = vmatprep.subr.bf16.mxu0 0
        %1953 = vmatpush1.bf16.msra.mxu0 0
        %1954 = vmatprep.subr.bf16.mxu0 0
        %1955 = vmatpush1.bf16.msra.mxu0 0
        %1956 = vmatprep.subr.bf16.mxu0 0
        %1957 = vmatpush1.bf16.msra.mxu0 0
        %1958 = vmatprep.subr.bf16.mxu0 0
        %1959 = vmatpush1.bf16.msra.mxu0 0
        %1960 = vmatprep.subr.bf16.mxu0 0
        %1961 = vmatpush1.bf16.msra.mxu0 0
        %1962 = vmatprep.mubr.bf16.mxu0 0
        %1963 = vmatmul.mubr.bf16.gmra.mrb[0].mxu0 %v1928
        %v1964 = vpop.f32.mrb[0].mxu0
        %v1965 = vadd.f32 0.0, %v1964
        %v1966 = vpop.f32.mrb[0].mxu0
        %v1967 = vpop.f32.mrb[0].mxu0
        %v1968 = vpop.f32.mrb[0].mxu0
        %1969 = vdwg.mxu0
        %v1970 = vadd.f32 %v1797, %v1965
        %s1971 = scalar_lea.vmem %s1, 1
        %v1972 = vld [vmem:[%s1971] sm:$0x1]
        %v1973 = vmul.f32 %v1970, %v1970
        %v1974 = vsel %vm519, %v1973, 0.0
        %1975 = vadd.xlane.f32.xlu0 %v1974
        %v1976 = vpop.xlane.xlu0 %1975
        %v1977 = vmul.f32 %v1976, %v581
        %v1978 = vadd.f32 %v1977, 1e-05
        %v1979 = vrsqrt.pop %v1978
        %v1980 = vmul.f32 %v1970, %v1979
        %v1982 = vlaneseq
        %v1983 = vshrl.u32 %v1982, 7
        %v1984 = vsub.s32 0, %v1983
        %v1985 = vrot.slane %v1972, %v1984
        %v1987 = vmul.f32 %v1980, %v1985
        %s1988 = scalar_lea.vmem [#allocation7], 64
        %v1989 = vld [vmem:[%s1988] sm:$0xff]
        %v1990 = vld [vmem:[%s1988 + $0x8] sm:$0xff]
        %v1991 = vld [vmem:[%s1988 + $0x10] sm:$0xff]
        %v1992 = vld [vmem:[%s1988 + $0x18] sm:$0xff]
        %v1993 = vld [vmem:[%s1988 + $0x20] sm:$0xff]
        %v1994 = vld [vmem:[%s1988 + $0x28] sm:$0xff]
        %v1995 = vld [vmem:[%s1988 + $0x30] sm:$0xff]
        %v1996 = vld [vmem:[%s1988 + $0x38] sm:$0xff]
        %v1997 = vpack.c.bf16 %v1987, %v1987
        %v2006 = vunpack.c.l.b16 %v1989
        %v2007 = vunpack.c.h.b16 %v1989
        %v2008 = vunpack.c.l.b16 %v1990
        %v2009 = vunpack.c.h.b16 %v1990
        %v2010 = vunpack.c.l.b16 %v1991
        %v2011 = vunpack.c.h.b16 %v1991
        %v2012 = vunpack.c.l.b16 %v1992
        %v2013 = vunpack.c.h.b16 %v1992
        %v2014 = vunpack.c.l.b16 %v1993
        %v2015 = vunpack.c.h.b16 %v1993
        %v2016 = vunpack.c.l.b16 %v1994
        %v2017 = vunpack.c.h.b16 %v1994
        %v2018 = vunpack.c.l.b16 %v1995
        %v2019 = vunpack.c.h.b16 %v1995
        %v2020 = vunpack.c.l.b16 %v1996
        %v2021 = vunpack.c.h.b16 %v1996
        %v2022 = vpack.c.b16 %v2008, %v2006
        %v2023 = vpack.c.b16 %v2009, %v2007
        %v2024 = vpack.c.b16 %v2012, %v2010
        %v2025 = vpack.c.b16 %v2013, %v2011
        %v2026 = vpack.c.b16 %v2016, %v2014
        %v2027 = vpack.c.b16 %v2017, %v2015
        %v2028 = vpack.c.b16 %v2020, %v2018
        %v2029 = vpack.c.b16 %v2021, %v2019
        %v2039 = vsel %vm519, %v1997, 0
        %2041 = vmatprep.subr.bf16.mxu0 %v2023
        %2042 = vmatpush1.bf16.msra.mxu0 %v2022
        %2043 = vmatprep.subr.bf16.mxu0 %v2025
        %2044 = vmatpush1.bf16.msra.mxu0 %v2024
        %2045 = vmatprep.subr.bf16.mxu0 %v2027
        %2046 = vmatpush1.bf16.msra.mxu0 %v2026
        %2047 = vmatprep.subr.bf16.mxu0 %v2029
        %2048 = vmatpush1.bf16.msra.mxu0 %v2028
        %2049 = vmatprep.subr.bf16.mxu0 0
        %2050 = vmatpush1.bf16.msra.mxu0 0
        %2051 = vmatprep.subr.bf16.mxu0 0
        %2052 = vmatpush1.bf16.msra.mxu0 0
        %2053 = vmatprep.subr.bf16.mxu0 0
        %2054 = vmatpush1.bf16.msra.mxu0 0
        %2055 = vmatprep.subr.bf16.mxu0 0
        %2056 = vmatpush1.bf16.msra.mxu0 0
        %2057 = vmatprep.subr.bf16.mxu0 0
        %2058 = vmatpush1.bf16.msra.mxu0 0
        %2059 = vmatprep.subr.bf16.mxu0 0
        %2060 = vmatpush1.bf16.msra.mxu0 0
        %2061 = vmatprep.subr.bf16.mxu0 0
        %2062 = vmatpush1.bf16.msra.mxu0 0
        %2063 = vmatprep.subr.bf16.mxu0 0
        %2064 = vmatpush1.bf16.msra.mxu0 0
        %2065 = vmatprep.subr.bf16.mxu0 0
        %2066 = vmatpush1.bf16.msra.mxu0 0
        %2067 = vmatprep.subr.bf16.mxu0 0
        %2068 = vmatpush1.bf16.msra.mxu0 0
        %2069 = vmatprep.subr.bf16.mxu0 0
        %2070 = vmatpush1.bf16.msra.mxu0 0
        %2071 = vmatprep.subr.bf16.mxu0 0
        %2072 = vmatpush1.bf16.msra.mxu0 0
        %2073 = vmatprep.mubr.bf16.mxu0 0
        %2074 = vmatmul.mubr.bf16.gmra.mrb[0].mxu0 %v2039
        %v2075 = vpop.f32.mrb[0].mxu0
        %v2076 = vadd.f32 0.0, %v2075
        %v2077 = vpop.f32.mrb[0].mxu0
        %v2078 = vadd.f32 0.0, %v2077
        %v2079 = vpop.f32.mrb[0].mxu0
        %v2080 = vpop.f32.mrb[0].mxu0
        %2081 = vdwg.mxu0
        %2082 = vrot.lane.b32.xlu0 %v2076, 127
        %v2083 = vpop.permute.xlu0 %2082
        %2084 = vrot.lane.b32.xlu0 %v2076, 1
        %v2085 = vpop.permute.xlu0 %2084
        %v2086 = vsel %vm571, %v2083, %v2085
        %v2087 = vmul.f32 %v2076, %v526
        %v2088 = vmul.f32 %v2086, %v556
        %v2089 = vadd.f32 %v2087, %v2088
        %2091 = vrot.lane.b32.xlu0 %v2089, 112
        %v2092 = vpop.permute.xlu0 %2091
        %2094 = vrot.lane.b32.xlu0 %v2089, 96
        %v2095 = vpop.permute.xlu0 %2094
        %2097 = vrot.lane.b32.xlu0 %v2089, 80
        %v2098 = vpop.permute.xlu0 %2097
        %v2100 = vcombine.low %v2089, %v2095
        %v2101 = vcombine.high %v2089, %v2095
        %v2103 = vunpack.c.l.s4 1983009808
        %v2104 = vunpack.c.0.s8 %v2103
        %v2105 = vlaneseq
        %v2106 = vshrl.u32 %v2105, 7
        %v2107 = vsub.s32 %v2104, %v2106
        %v2108 = vrot.slane %v2100, %v2107
        %v2110 = vunpack.c.l.s4 1983009808
        %v2111 = vunpack.c.0.s8 %v2110
        %v2112 = vlaneseq
        %v2113 = vshrl.u32 %v2112, 7
        %v2114 = vsub.s32 %v2111, %v2113
        %v2115 = vrot.slane %v2101, %v2114
        %v2116 = vcombine.low %v2092, %v2098
        %v2117 = vcombine.high %v2092, %v2098
        %v2119 = vunpack.c.l.s4 1983009808
        %v2120 = vunpack.c.0.s8 %v2119
        %v2121 = vlaneseq
        %v2122 = vshrl.u32 %v2121, 7
        %v2123 = vsub.s32 %v2120, %v2122
        %v2124 = vrot.slane %v2116, %v2123
        %v2126 = vunpack.c.l.s4 1983009808
        %v2127 = vunpack.c.0.s8 %v2126
        %v2128 = vlaneseq
        %v2129 = vshrl.u32 %v2128, 7
        %v2130 = vsub.s32 %v2127, %v2129
        %v2131 = vrot.slane %v2117, %v2130
        %v2132 = vcombine.low %v2108, %v2124
        %v2133 = vcombine.high %v2108, %v2124
        %v2135 = vunpack.c.l.s4 1934713408
        %v2136 = vunpack.c.0.s8 %v2135
        %v2137 = vlaneseq
        %v2138 = vshrl.u32 %v2137, 7
        %v2139 = vsub.s32 %v2136, %v2138
        %v2140 = vrot.slane %v2132, %v2139
        %v2142 = vunpack.c.l.s4 1934713408
        %v2143 = vunpack.c.0.s8 %v2142
        %v2144 = vlaneseq
        %v2145 = vshrl.u32 %v2144, 7
        %v2146 = vsub.s32 %v2143, %v2145
        %v2147 = vrot.slane %v2133, %v2146
        %v2148 = vcombine.low %v2115, %v2131
        %v2149 = vcombine.high %v2115, %v2131
        %v2151 = vunpack.c.l.s4 1934713408
        %v2152 = vunpack.c.0.s8 %v2151
        %v2153 = vlaneseq
        %v2154 = vshrl.u32 %v2153, 7
        %v2155 = vsub.s32 %v2152, %v2154
        %v2156 = vrot.slane %v2148, %v2155
        %v2158 = vunpack.c.l.s4 1934713408
        %v2159 = vunpack.c.0.s8 %v2158
        %v2160 = vlaneseq
        %v2161 = vshrl.u32 %v2160, 7
        %v2162 = vsub.s32 %v2159, %v2161
        %v2163 = vrot.slane %v2149, %v2162
        %v2164 = vcombine.high %v2140, 0.0
        %v2165 = vcombine.high %v2147, 0.0
        %v2166 = vcombine.high %v2156, 0.0
        %v2167 = vcombine.high %v2163, 0.0
        %v2168 = vcombine.low %v2140, %v2147
        %v2170 = vunpack.c.l.s4 1983009808
        %v2171 = vunpack.c.0.s8 %v2170
        %v2172 = vlaneseq
        %v2173 = vshrl.u32 %v2172, 7
        %v2174 = vsub.s32 %v2171, %v2173
        %v2175 = vrot.slane %v2168, %v2174
        %v2176 = vcombine.low %v2164, %v2165
        %v2178 = vunpack.c.l.s4 1983009808
        %v2179 = vunpack.c.0.s8 %v2178
        %v2180 = vlaneseq
        %v2181 = vshrl.u32 %v2180, 7
        %v2182 = vsub.s32 %v2179, %v2181
        %v2183 = vrot.slane %v2176, %v2182
        %v2184 = vcombine.low %v2156, %v2163
        %v2186 = vunpack.c.l.s4 1983009808
        %v2187 = vunpack.c.0.s8 %v2186
        %v2188 = vlaneseq
        %v2189 = vshrl.u32 %v2188, 7
        %v2190 = vsub.s32 %v2187, %v2189
        %v2191 = vrot.slane %v2184, %v2190
        %v2192 = vcombine.low %v2166, %v2167
        %v2194 = vunpack.c.l.s4 1983009808
        %v2195 = vunpack.c.0.s8 %v2194
        %v2196 = vlaneseq
        %v2197 = vshrl.u32 %v2196, 7
        %v2198 = vsub.s32 %v2195, %v2197
        %v2199 = vrot.slane %v2192, %v2198
        %v2200 = vcombine.low %v2175, %v2183
        %v2201 = vcombine.high %v2175, %v2183
        %v2203 = vunpack.c.l.s4 1934713408
        %v2204 = vunpack.c.0.s8 %v2203
        %v2205 = vlaneseq
        %v2206 = vshrl.u32 %v2205, 7
        %v2207 = vsub.s32 %v2204, %v2206
        %v2208 = vrot.slane %v2200, %v2207
        %v2210 = vunpack.c.l.s4 1934713408
        %v2211 = vunpack.c.0.s8 %v2210
        %v2212 = vlaneseq
        %v2213 = vshrl.u32 %v2212, 7
        %v2214 = vsub.s32 %v2211, %v2213
        %v2215 = vrot.slane %v2201, %v2214
        %v2216 = vcombine.low %v2191, %v2199
        %v2217 = vcombine.high %v2191, %v2199
        %v2219 = vunpack.c.l.s4 1934713408
        %v2220 = vunpack.c.0.s8 %v2219
        %v2221 = vlaneseq
        %v2222 = vshrl.u32 %v2221, 7
        %v2223 = vsub.s32 %v2220, %v2222
        %v2224 = vrot.slane %v2216, %v2223
        %v2226 = vunpack.c.l.s4 1934713408
        %v2227 = vunpack.c.0.s8 %v2226
        %v2228 = vlaneseq
        %v2229 = vshrl.u32 %v2228, 7
        %v2230 = vsub.s32 %v2227, %v2229
        %v2231 = vrot.slane %v2217, %v2230
        %v2232 = vcombine.low %v2208, %v2224
        %v2233 = vcombine.high %v2208, %v2224
        %v2234 = vcombine.low %v2215, %v2231
        %v2235 = vcombine.high %v2215, %v2231
        %2236 = vrot.lane.b32.xlu0 %v2089, 64
        %v2237 = vpop.permute.xlu0 %2236
        %2238 = vrot.lane.b32.xlu0 %v2092, 64
        %v2239 = vpop.permute.xlu0 %2238
        %2240 = vrot.lane.b32.xlu0 %v2095, 64
        %v2241 = vpop.permute.xlu0 %2240
        %2242 = vrot.lane.b32.xlu0 %v2098, 64
        %v2243 = vpop.permute.xlu0 %2242
        %v2248 = vcombine.low %v2237, %v2241
        %v2249 = vcombine.high %v2237, %v2241
        %v2251 = vunpack.c.l.s4 1983009808
        %v2252 = vunpack.c.0.s8 %v2251
        %v2253 = vlaneseq
        %v2254 = vshrl.u32 %v2253, 7
        %v2255 = vsub.s32 %v2252, %v2254
        %v2256 = vrot.slane %v2248, %v2255
        %v2258 = vunpack.c.l.s4 1983009808
        %v2259 = vunpack.c.0.s8 %v2258
        %v2260 = vlaneseq
        %v2261 = vshrl.u32 %v2260, 7
        %v2262 = vsub.s32 %v2259, %v2261
        %v2263 = vrot.slane %v2249, %v2262
        %v2264 = vcombine.low %v2239, %v2243
        %v2265 = vcombine.high %v2239, %v2243
        %v2267 = vunpack.c.l.s4 1983009808
        %v2268 = vunpack.c.0.s8 %v2267
        %v2269 = vlaneseq
        %v2270 = vshrl.u32 %v2269, 7
        %v2271 = vsub.s32 %v2268, %v2270
        %v2272 = vrot.slane %v2264, %v2271
        %v2274 = vunpack.c.l.s4 1983009808
        %v2275 = vunpack.c.0.s8 %v2274
        %v2276 = vlaneseq
        %v2277 = vshrl.u32 %v2276, 7
        %v2278 = vsub.s32 %v2275, %v2277
        %v2279 = vrot.slane %v2265, %v2278
        %v2280 = vcombine.low %v2256, %v2272
        %v2281 = vcombine.high %v2256, %v2272
        %v2283 = vunpack.c.l.s4 1934713408
        %v2284 = vunpack.c.0.s8 %v2283
        %v2285 = vlaneseq
        %v2286 = vshrl.u32 %v2285, 7
        %v2287 = vsub.s32 %v2284, %v2286
        %v2288 = vrot.slane %v2280, %v2287
        %v2290 = vunpack.c.l.s4 1934713408
        %v2291 = vunpack.c.0.s8 %v2290
        %v2292 = vlaneseq
        %v2293 = vshrl.u32 %v2292, 7
        %v2294 = vsub.s32 %v2291, %v2293
        %v2295 = vrot.slane %v2281, %v2294
        %v2296 = vcombine.low %v2263, %v2279
        %v2297 = vcombine.high %v2263, %v2279
        %v2299 = vunpack.c.l.s4 1934713408
        %v2300 = vunpack.c.0.s8 %v2299
        %v2301 = vlaneseq
        %v2302 = vshrl.u32 %v2301, 7
        %v2303 = vsub.s32 %v2300, %v2302
        %v2304 = vrot.slane %v2296, %v2303
        %v2306 = vunpack.c.l.s4 1934713408
        %v2307 = vunpack.c.0.s8 %v2306
        %v2308 = vlaneseq
        %v2309 = vshrl.u32 %v2308, 7
        %v2310 = vsub.s32 %v2307, %v2309
        %v2311 = vrot.slane %v2297, %v2310
        %v2312 = vcombine.high %v2288, 0.0
        %v2313 = vcombine.high %v2295, 0.0
        %v2314 = vcombine.high %v2304, 0.0
        %v2315 = vcombine.high %v2311, 0.0
        %v2316 = vcombine.low %v2288, %v2295
        %v2318 = vunpack.c.l.s4 1983009808
        %v2319 = vunpack.c.0.s8 %v2318
        %v2320 = vlaneseq
        %v2321 = vshrl.u32 %v2320, 7
        %v2322 = vsub.s32 %v2319, %v2321
        %v2323 = vrot.slane %v2316, %v2322
        %v2324 = vcombine.low %v2312, %v2313
        %v2326 = vunpack.c.l.s4 1983009808
        %v2327 = vunpack.c.0.s8 %v2326
        %v2328 = vlaneseq
        %v2329 = vshrl.u32 %v2328, 7
        %v2330 = vsub.s32 %v2327, %v2329
        %v2331 = vrot.slane %v2324, %v2330
        %v2332 = vcombine.low %v2304, %v2311
        %v2334 = vunpack.c.l.s4 1983009808
        %v2335 = vunpack.c.0.s8 %v2334
        %v2336 = vlaneseq
        %v2337 = vshrl.u32 %v2336, 7
        %v2338 = vsub.s32 %v2335, %v2337
        %v2339 = vrot.slane %v2332, %v2338
        %v2340 = vcombine.low %v2314, %v2315
        %v2342 = vunpack.c.l.s4 1983009808
        %v2343 = vunpack.c.0.s8 %v2342
        %v2344 = vlaneseq
        %v2345 = vshrl.u32 %v2344, 7
        %v2346 = vsub.s32 %v2343, %v2345
        %v2347 = vrot.slane %v2340, %v2346
        %v2348 = vcombine.low %v2323, %v2331
        %v2349 = vcombine.high %v2323, %v2331
        %v2351 = vunpack.c.l.s4 1934713408
        %v2352 = vunpack.c.0.s8 %v2351
        %v2353 = vlaneseq
        %v2354 = vshrl.u32 %v2353, 7
        %v2355 = vsub.s32 %v2352, %v2354
        %v2356 = vrot.slane %v2348, %v2355
        %v2358 = vunpack.c.l.s4 1934713408
        %v2359 = vunpack.c.0.s8 %v2358
        %v2360 = vlaneseq
        %v2361 = vshrl.u32 %v2360, 7
        %v2362 = vsub.s32 %v2359, %v2361
        %v2363 = vrot.slane %v2349, %v2362
        %v2364 = vcombine.low %v2339, %v2347
        %v2365 = vcombine.high %v2339, %v2347
        %v2367 = vunpack.c.l.s4 1934713408
        %v2368 = vunpack.c.0.s8 %v2367
        %v2369 = vlaneseq
        %v2370 = vshrl.u32 %v2369, 7
        %v2371 = vsub.s32 %v2368, %v2370
        %v2372 = vrot.slane %v2364, %v2371
        %v2374 = vunpack.c.l.s4 1934713408
        %v2375 = vunpack.c.0.s8 %v2374
        %v2376 = vlaneseq
        %v2377 = vshrl.u32 %v2376, 7
        %v2378 = vsub.s32 %v2375, %v2377
        %v2379 = vrot.slane %v2365, %v2378
        %v2380 = vcombine.low %v2356, %v2372
        %v2381 = vcombine.high %v2356, %v2372
        %v2382 = vcombine.low %v2363, %v2379
        %v2383 = vcombine.high %v2363, %v2379
        %2385 = vrot.lane.b32.xlu0 %v2078, 112
        %v2386 = vpop.permute.xlu0 %2385
        %2388 = vrot.lane.b32.xlu0 %v2078, 96
        %v2389 = vpop.permute.xlu0 %2388
        %2391 = vrot.lane.b32.xlu0 %v2078, 80
        %v2392 = vpop.permute.xlu0 %2391
        %v2394 = vcombine.low %v2078, %v2389
        %v2395 = vcombine.high %v2078, %v2389
        %v2397 = vunpack.c.l.s4 1983009808
        %v2398 = vunpack.c.0.s8 %v2397
        %v2399 = vlaneseq
        %v2400 = vshrl.u32 %v2399, 7
        %v2401 = vsub.s32 %v2398, %v2400
        %v2402 = vrot.slane %v2394, %v2401
        %v2404 = vunpack.c.l.s4 1983009808
        %v2405 = vunpack.c.0.s8 %v2404
        %v2406 = vlaneseq
        %v2407 = vshrl.u32 %v2406, 7
        %v2408 = vsub.s32 %v2405, %v2407
        %v2409 = vrot.slane %v2395, %v2408
        %v2410 = vcombine.low %v2386, %v2392
        %v2411 = vcombine.high %v2386, %v2392
        %v2413 = vunpack.c.l.s4 1983009808
        %v2414 = vunpack.c.0.s8 %v2413
        %v2415 = vlaneseq
        %v2416 = vshrl.u32 %v2415, 7
        %v2417 = vsub.s32 %v2414, %v2416
        %v2418 = vrot.slane %v2410, %v2417
        %v2420 = vunpack.c.l.s4 1983009808
        %v2421 = vunpack.c.0.s8 %v2420
        %v2422 = vlaneseq
        %v2423 = vshrl.u32 %v2422, 7
        %v2424 = vsub.s32 %v2421, %v2423
        %v2425 = vrot.slane %v2411, %v2424
        %v2426 = vcombine.low %v2402, %v2418
        %v2427 = vcombine.high %v2402, %v2418
        %v2429 = vunpack.c.l.s4 1934713408
        %v2430 = vunpack.c.0.s8 %v2429
        %v2431 = vlaneseq
        %v2432 = vshrl.u32 %v2431, 7
        %v2433 = vsub.s32 %v2430, %v2432
        %v2434 = vrot.slane %v2426, %v2433
        %v2436 = vunpack.c.l.s4 1934713408
        %v2437 = vunpack.c.0.s8 %v2436
        %v2438 = vlaneseq
        %v2439 = vshrl.u32 %v2438, 7
        %v2440 = vsub.s32 %v2437, %v2439
        %v2441 = vrot.slane %v2427, %v2440
        %v2442 = vcombine.low %v2409, %v2425
        %v2443 = vcombine.high %v2409, %v2425
        %v2445 = vunpack.c.l.s4 1934713408
        %v2446 = vunpack.c.0.s8 %v2445
        %v2447 = vlaneseq
        %v2448 = vshrl.u32 %v2447, 7
        %v2449 = vsub.s32 %v2446, %v2448
        %v2450 = vrot.slane %v2442, %v2449
        %v2452 = vunpack.c.l.s4 1934713408
        %v2453 = vunpack.c.0.s8 %v2452
        %v2454 = vlaneseq
        %v2455 = vshrl.u32 %v2454, 7
        %v2456 = vsub.s32 %v2453, %v2455
        %v2457 = vrot.slane %v2443, %v2456
        %v2458 = vcombine.high %v2434, 0.0
        %v2459 = vcombine.high %v2441, 0.0
        %v2460 = vcombine.high %v2450, 0.0
        %v2461 = vcombine.high %v2457, 0.0
        %v2462 = vcombine.low %v2434, %v2441
        %v2464 = vunpack.c.l.s4 1983009808
        %v2465 = vunpack.c.0.s8 %v2464
        %v2466 = vlaneseq
        %v2467 = vshrl.u32 %v2466, 7
        %v2468 = vsub.s32 %v2465, %v2467
        %v2469 = vrot.slane %v2462, %v2468
        %v2470 = vcombine.low %v2458, %v2459
        %v2472 = vunpack.c.l.s4 1983009808
        %v2473 = vunpack.c.0.s8 %v2472
        %v2474 = vlaneseq
        %v2475 = vshrl.u32 %v2474, 7
        %v2476 = vsub.s32 %v2473, %v2475
        %v2477 = vrot.slane %v2470, %v2476
        %v2478 = vcombine.low %v2450, %v2457
        %v2480 = vunpack.c.l.s4 1983009808
        %v2481 = vunpack.c.0.s8 %v2480
        %v2482 = vlaneseq
        %v2483 = vshrl.u32 %v2482, 7
        %v2484 = vsub.s32 %v2481, %v2483
        %v2485 = vrot.slane %v2478, %v2484
        %v2486 = vcombine.low %v2460, %v2461
        %v2488 = vunpack.c.l.s4 1983009808
        %v2489 = vunpack.c.0.s8 %v2488
        %v2490 = vlaneseq
        %v2491 = vshrl.u32 %v2490, 7
        %v2492 = vsub.s32 %v2489, %v2491
        %v2493 = vrot.slane %v2486, %v2492
        %v2494 = vcombine.low %v2469, %v2477
        %v2495 = vcombine.high %v2469, %v2477
        %v2497 = vunpack.c.l.s4 1934713408
        %v2498 = vunpack.c.0.s8 %v2497
        %v2499 = vlaneseq
        %v2500 = vshrl.u32 %v2499, 7
        %v2501 = vsub.s32 %v2498, %v2500
        %v2502 = vrot.slane %v2494, %v2501
        %v2504 = vunpack.c.l.s4 1934713408
        %v2505 = vunpack.c.0.s8 %v2504
        %v2506 = vlaneseq
        %v2507 = vshrl.u32 %v2506, 7
        %v2508 = vsub.s32 %v2505, %v2507
        %v2509 = vrot.slane %v2495, %v2508
        %v2510 = vcombine.low %v2485, %v2493
        %v2511 = vcombine.high %v2485, %v2493
        %v2513 = vunpack.c.l.s4 1934713408
        %v2514 = vunpack.c.0.s8 %v2513
        %v2515 = vlaneseq
        %v2516 = vshrl.u32 %v2515, 7
        %v2517 = vsub.s32 %v2514, %v2516
        %v2518 = vrot.slane %v2510, %v2517
        %v2520 = vunpack.c.l.s4 1934713408
        %v2521 = vunpack.c.0.s8 %v2520
        %v2522 = vlaneseq
        %v2523 = vshrl.u32 %v2522, 7
        %v2524 = vsub.s32 %v2521, %v2523
        %v2525 = vrot.slane %v2511, %v2524
        %v2526 = vcombine.low %v2502, %v2518
        %v2527 = vcombine.high %v2502, %v2518
        %v2528 = vcombine.low %v2509, %v2525
        %v2529 = vcombine.high %v2509, %v2525
        %v2530 = vpack.c.bf16 %v2232, %v2232
        %v2531 = vpack.c.bf16 %v2233, %v2233
        %v2532 = vpack.c.bf16 %v2234, %v2234
        %v2533 = vpack.c.bf16 %v2235, %v2235
        %v2534 = vpack.c.bf16 %v2380, %v2380
        %v2535 = vpack.c.bf16 %v2381, %v2381
        %v2536 = vpack.c.bf16 %v2382, %v2382
        %v2537 = vpack.c.bf16 %v2383, %v2383
        %v2539 = vsel %vm513, %v2530, 0
        %v2542 = vsel %vm513, %v2534, 0
        %2544 = vmatprep.subr.bf16.mxu0 0
        %2545 = vmatpush1.bf16.xpose.msra.mxu0 %v2542
        %2546 = vmatprep.subr.bf16.mxu0 0
        %2547 = vmatpush1.bf16.xpose.msra.mxu0 0
        %2548 = vmatprep.subr.bf16.mxu0 0
        %2549 = vmatpush1.bf16.xpose.msra.mxu0 0
        %2550 = vmatprep.subr.bf16.mxu0 0
        %2551 = vmatpush1.bf16.xpose.msra.mxu0 0
        %2552 = vmatprep.subr.bf16.mxu0 0
        %2553 = vmatpush1.bf16.xpose.msra.mxu0 0
        %2554 = vmatprep.subr.bf16.mxu0 0
        %2555 = vmatpush1.bf16.xpose.msra.mxu0 0
        %2556 = vmatprep.subr.bf16.mxu0 0
        %2557 = vmatpush1.bf16.xpose.msra.mxu0 0
        %2558 = vmatprep.subr.bf16.mxu0 0
        %2559 = vmatpush1.bf16.xpose.msra.mxu0 0
        %2560 = vmatprep.subr.bf16.mxu0 0
        %2561 = vmatpush1.bf16.xpose.msra.mxu0 0
        %2562 = vmatprep.subr.bf16.mxu0 0
        %2563 = vmatpush1.bf16.xpose.msra.mxu0 0
        %2564 = vmatprep.subr.bf16.mxu0 0
        %2565 = vmatpush1.bf16.xpose.msra.mxu0 0
        %2566 = vmatprep.subr.bf16.mxu0 0
        %2567 = vmatpush1.bf16.xpose.msra.mxu0 0
        %2568 = vmatprep.subr.bf16.mxu0 0
        %2569 = vmatpush1.bf16.xpose.msra.mxu0 0
        %2570 = vmatprep.subr.bf16.mxu0 0
        %2571 = vmatpush1.bf16.xpose.msra.mxu0 0
        %2572 = vmatprep.subr.bf16.mxu0 0
        %2573 = vmatpush1.bf16.xpose.msra.mxu0 0
        %2574 = vmatprep.subr.bf16.mxu0 0
        %2575 = vmatpush1.bf16.xpose.msra.mxu0 0
        %2576 = vmatprep.mubr.bf16.mxu0 0
        %2577 = vmatmul.mubr.bf16.gmra.mrb[0].mxu0 %v2539
        %v2578 = vpop.f32.mrb[0].mxu0
        %v2579 = vadd.f32 0.0, %v2578
        %v2580 = vpop.f32.mrb[0].mxu0
        %v2581 = vpop.f32.mrb[0].mxu0
        %v2582 = vpop.f32.mrb[0].mxu0
        %2583 = vdwg.mxu0
        %v2585 = vsel %vm513, %v2531, 0
        %v2588 = vsel %vm513, %v2535, 0
        %2590 = vmatprep.subr.bf16.mxu0 0
        %2591 = vmatpush1.bf16.xpose.msra.mxu0 %v2588
        %2592 = vmatprep.subr.bf16.mxu0 0
        %2593 = vmatpush1.bf16.xpose.msra.mxu0 0
        %2594 = vmatprep.subr.bf16.mxu0 0
        %2595 = vmatpush1.bf16.xpose.msra.mxu0 0
        %2596 = vmatprep.subr.bf16.mxu0 0
        %2597 = vmatpush1.bf16.xpose.msra.mxu0 0
        %2598 = vmatprep.subr.bf16.mxu0 0
        %2599 = vmatpush1.bf16.xpose.msra.mxu0 0
        %2600 = vmatprep.subr.bf16.mxu0 0
        %2601 = vmatpush1.bf16.xpose.msra.mxu0 0
        %2602 = vmatprep.subr.bf16.mxu0 0
        %2603 = vmatpush1.bf16.xpose.msra.mxu0 0
        %2604 = vmatprep.subr.bf16.mxu0 0
        %2605 = vmatpush1.bf16.xpose.msra.mxu0 0
        %2606 = vmatprep.subr.bf16.mxu0 0
        %2607 = vmatpush1.bf16.xpose.msra.mxu0 0
        %2608 = vmatprep.subr.bf16.mxu0 0
        %2609 = vmatpush1.bf16.xpose.msra.mxu0 0
        %2610 = vmatprep.subr.bf16.mxu0 0
        %2611 = vmatpush1.bf16.xpose.msra.mxu0 0
        %2612 = vmatprep.subr.bf16.mxu0 0
        %2613 = vmatpush1.bf16.xpose.msra.mxu0 0
        %2614 = vmatprep.subr.bf16.mxu0 0
        %2615 = vmatpush1.bf16.xpose.msra.mxu0 0
        %2616 = vmatprep.subr.bf16.mxu0 0
        %2617 = vmatpush1.bf16.xpose.msra.mxu0 0
        %2618 = vmatprep.subr.bf16.mxu0 0
        %2619 = vmatpush1.bf16.xpose.msra.mxu0 0
        %2620 = vmatprep.subr.bf16.mxu0 0
        %2621 = vmatpush1.bf16.xpose.msra.mxu0 0
        %2622 = vmatprep.mubr.bf16.mxu0 0
        %2623 = vmatmul.mubr.bf16.gmra.mrb[0].mxu0 %v2585
        %v2624 = vpop.f32.mrb[0].mxu0
        %v2625 = vadd.f32 0.0, %v2624
        %v2626 = vpop.f32.mrb[0].mxu0
        %v2627 = vpop.f32.mrb[0].mxu0
        %v2628 = vpop.f32.mrb[0].mxu0
        %2629 = vdwg.mxu0
        %v2631 = vsel %vm513, %v2532, 0
        %v2634 = vsel %vm513, %v2536, 0
        %2636 = vmatprep.subr.bf16.mxu0 0
        %2637 = vmatpush1.bf16.xpose.msra.mxu0 %v2634
        %2638 = vmatprep.subr.bf16.mxu0 0
        %2639 = vmatpush1.bf16.xpose.msra.mxu0 0
        %2640 = vmatprep.subr.bf16.mxu0 0
        %2641 = vmatpush1.bf16.xpose.msra.mxu0 0
        %2642 = vmatprep.subr.bf16.mxu0 0
        %2643 = vmatpush1.bf16.xpose.msra.mxu0 0
        %2644 = vmatprep.subr.bf16.mxu0 0
        %2645 = vmatpush1.bf16.xpose.msra.mxu0 0
        %2646 = vmatprep.subr.bf16.mxu0 0
        %2647 = vmatpush1.bf16.xpose.msra.mxu0 0
        %2648 = vmatprep.subr.bf16.mxu0 0
        %2649 = vmatpush1.bf16.xpose.msra.mxu0 0
        %2650 = vmatprep.subr.bf16.mxu0 0
        %2651 = vmatpush1.bf16.xpose.msra.mxu0 0
        %2652 = vmatprep.subr.bf16.mxu0 0
        %2653 = vmatpush1.bf16.xpose.msra.mxu0 0
        %2654 = vmatprep.subr.bf16.mxu0 0
        %2655 = vmatpush1.bf16.xpose.msra.mxu0 0
        %2656 = vmatprep.subr.bf16.mxu0 0
        %2657 = vmatpush1.bf16.xpose.msra.mxu0 0
        %2658 = vmatprep.subr.bf16.mxu0 0
        %2659 = vmatpush1.bf16.xpose.msra.mxu0 0
        %2660 = vmatprep.subr.bf16.mxu0 0
        %2661 = vmatpush1.bf16.xpose.msra.mxu0 0
        %2662 = vmatprep.subr.bf16.mxu0 0
        %2663 = vmatpush1.bf16.xpose.msra.mxu0 0
        %2664 = vmatprep.subr.bf16.mxu0 0
        %2665 = vmatpush1.bf16.xpose.msra.mxu0 0
        %2666 = vmatprep.subr.bf16.mxu0 0
        %2667 = vmatpush1.bf16.xpose.msra.mxu0 0
        %2668 = vmatprep.mubr.bf16.mxu0 0
        %2669 = vmatmul.mubr.bf16.gmra.mrb[0].mxu0 %v2631
        %v2670 = vpop.f32.mrb[0].mxu0
        %v2671 = vadd.f32 0.0, %v2670
        %v2672 = vpop.f32.mrb[0].mxu0
        %v2673 = vpop.f32.mrb[0].mxu0
        %v2674 = vpop.f32.mrb[0].mxu0
        %2675 = vdwg.mxu0
        %v2677 = vsel %vm513, %v2533, 0
        %v2680 = vsel %vm513, %v2537, 0
        %2682 = vmatprep.subr.bf16.mxu0 0
        %2683 = vmatpush1.bf16.xpose.msra.mxu0 %v2680
        %2684 = vmatprep.subr.bf16.mxu0 0
        %2685 = vmatpush1.bf16.xpose.msra.mxu0 0
        %2686 = vmatprep.subr.bf16.mxu0 0
        %2687 = vmatpush1.bf16.xpose.msra.mxu0 0
        %2688 = vmatprep.subr.bf16.mxu0 0
        %2689 = vmatpush1.bf16.xpose.msra.mxu0 0
        %2690 = vmatprep.subr.bf16.mxu0 0
        %2691 = vmatpush1.bf16.xpose.msra.mxu0 0
        %2692 = vmatprep.subr.bf16.mxu0 0
        %2693 = vmatpush1.bf16.xpose.msra.mxu0 0
        %2694 = vmatprep.subr.bf16.mxu0 0
        %2695 = vmatpush1.bf16.xpose.msra.mxu0 0
        %2696 = vmatprep.subr.bf16.mxu0 0
        %2697 = vmatpush1.bf16.xpose.msra.mxu0 0
        %2698 = vmatprep.subr.bf16.mxu0 0
        %2699 = vmatpush1.bf16.xpose.msra.mxu0 0
        %2700 = vmatprep.subr.bf16.mxu0 0
        %2701 = vmatpush1.bf16.xpose.msra.mxu0 0
        %2702 = vmatprep.subr.bf16.mxu0 0
        %2703 = vmatpush1.bf16.xpose.msra.mxu0 0
        %2704 = vmatprep.subr.bf16.mxu0 0
        %2705 = vmatpush1.bf16.xpose.msra.mxu0 0
        %2706 = vmatprep.subr.bf16.mxu0 0
        %2707 = vmatpush1.bf16.xpose.msra.mxu0 0
        %2708 = vmatprep.subr.bf16.mxu0 0
        %2709 = vmatpush1.bf16.xpose.msra.mxu0 0
        %2710 = vmatprep.subr.bf16.mxu0 0
        %2711 = vmatpush1.bf16.xpose.msra.mxu0 0
        %2712 = vmatprep.subr.bf16.mxu0 0
        %2713 = vmatpush1.bf16.xpose.msra.mxu0 0
        %2714 = vmatprep.mubr.bf16.mxu0 0
        %2715 = vmatmul.mubr.bf16.gmra.mrb[0].mxu0 %v2677
        %v2716 = vpop.f32.mrb[0].mxu0
        %v2717 = vadd.f32 0.0, %v2716
        %v2718 = vpop.f32.mrb[0].mxu0
        %v2719 = vpop.f32.mrb[0].mxu0
        %v2720 = vpop.f32.mrb[0].mxu0
        %2721 = vdwg.mxu0
        %v2722 = vsel %vm1327, %v2579, -inf
        %v2723 = vsel %vm1327, %v2625, -inf
        %v2724 = vsel %vm1327, %v2671, -inf
        %v2725 = vsel %vm1327, %v2717, -inf
        %v2726 = vsel %vm1332, %v2722, -inf
        %2727 = vmax.xlane.f32.xlu0 %v2726
        %v2728 = vpop.xlane.xlu0 %2727
        %v2729 = vsel %vm1332, %v2723, -inf
        %2730 = vmax.xlane.f32.xlu0 %v2729
        %v2731 = vpop.xlane.xlu0 %2730
        %v2732 = vsel %vm1332, %v2724, -inf
        %2733 = vmax.xlane.f32.xlu0 %v2732
        %v2734 = vpop.xlane.xlu0 %2733
        %v2735 = vsel %vm1332, %v2725, -inf
        %2736 = vmax.xlane.f32.xlu0 %v2735
        %v2737 = vpop.xlane.xlu0 %2736
        %v2738 = vsub.f32 %v2722, %v2728
        %v2739 = vsub.f32 %v2723, %v2731
        %v2740 = vsub.f32 %v2724, %v2734
        %v2741 = vsub.f32 %v2725, %v2737
        %v2742 = vmul.f32 %v2738, 1.442695
        %v2743 = vpow.pop %v2742
        %v2744 = vmul.f32 %v2739, 1.442695
        %v2745 = vpow.pop %v2744
        %v2746 = vmul.f32 %v2740, 1.442695
        %v2747 = vpow.pop %v2746
        %v2748 = vmul.f32 %v2741, 1.442695
        %v2749 = vpow.pop %v2748
        %v2750 = vsel %vm1332, %v2743, 0.0
        %2751 = vadd.xlane.f32.xlu0 %v2750
        %v2752 = vpop.xlane.xlu0 %2751
        %v2753 = vsel %vm1332, %v2745, 0.0
        %2754 = vadd.xlane.f32.xlu0 %v2753
        %v2755 = vpop.xlane.xlu0 %2754
        %v2756 = vsel %vm1332, %v2747, 0.0
        %2757 = vadd.xlane.f32.xlu0 %v2756
        %v2758 = vpop.xlane.xlu0 %2757
        %v2759 = vsel %vm1332, %v2749, 0.0
        %2760 = vadd.xlane.f32.xlu0 %v2759
        %v2761 = vpop.xlane.xlu0 %2760
        %v2762 = vrcp.pop %v2752
        %v2763 = vrcp.pop %v2755
        %v2764 = vrcp.pop %v2758
        %v2765 = vrcp.pop %v2761
        %v2766 = vmul.f32 %v2743, %v2762
        %v2767 = vmul.f32 %v2745, %v2763
        %v2768 = vmul.f32 %v2747, %v2764
        %v2769 = vmul.f32 %v2749, %v2765
        %v2770 = vpack.c.bf16 %v2766, %v2766
        %v2771 = vpack.c.bf16 %v2767, %v2767
        %v2772 = vpack.c.bf16 %v2768, %v2768
        %v2773 = vpack.c.bf16 %v2769, %v2769
        %v2774 = vpack.c.bf16 %v2526, %v2526
        %v2775 = vpack.c.bf16 %v2527, %v2527
        %v2776 = vpack.c.bf16 %v2528, %v2528
        %v2777 = vpack.c.bf16 %v2529, %v2529
        %v2779 = vsel %vm1332, %v2770, 0
        %v2782 = vsel %vm1388, %v2774, 0
        %2784 = vmatprep.subr.bf16.mxu0 0
        %2785 = vmatpush1.bf16.msra.mxu0 %v2782
        %2786 = vmatprep.subr.bf16.mxu0 0
        %2787 = vmatpush1.bf16.msra.mxu0 0
        %2788 = vmatprep.subr.bf16.mxu0 0
        %2789 = vmatpush1.bf16.msra.mxu0 0
        %2790 = vmatprep.subr.bf16.mxu0 0
        %2791 = vmatpush1.bf16.msra.mxu0 0
        %2792 = vmatprep.subr.bf16.mxu0 0
        %2793 = vmatpush1.bf16.msra.mxu0 0
        %2794 = vmatprep.subr.bf16.mxu0 0
        %2795 = vmatpush1.bf16.msra.mxu0 0
        %2796 = vmatprep.subr.bf16.mxu0 0
        %2797 = vmatpush1.bf16.msra.mxu0 0
        %2798 = vmatprep.subr.bf16.mxu0 0
        %2799 = vmatpush1.bf16.msra.mxu0 0
        %2800 = vmatprep.subr.bf16.mxu0 0
        %2801 = vmatpush1.bf16.msra.mxu0 0
        %2802 = vmatprep.subr.bf16.mxu0 0
        %2803 = vmatpush1.bf16.msra.mxu0 0
        %2804 = vmatprep.subr.bf16.mxu0 0
        %2805 = vmatpush1.bf16.msra.mxu0 0
        %2806 = vmatprep.subr.bf16.mxu0 0
        %2807 = vmatpush1.bf16.msra.mxu0 0
        %2808 = vmatprep.subr.bf16.mxu0 0
        %2809 = vmatpush1.bf16.msra.mxu0 0
        %2810 = vmatprep.subr.bf16.mxu0 0
        %2811 = vmatpush1.bf16.msra.mxu0 0
        %2812 = vmatprep.subr.bf16.mxu0 0
        %2813 = vmatpush1.bf16.msra.mxu0 0
        %2814 = vmatprep.subr.bf16.mxu0 0
        %2815 = vmatpush1.bf16.msra.mxu0 0
        %2816 = vmatprep.mubr.bf16.mxu0 0
        %2817 = vmatmul.mubr.bf16.gmra.mrb[0].mxu0 %v2779
        %v2818 = vpop.f32.mrb[0].mxu0
        %v2819 = vadd.f32 0.0, %v2818
        %v2820 = vpop.f32.mrb[0].mxu0
        %v2821 = vpop.f32.mrb[0].mxu0
        %v2822 = vpop.f32.mrb[0].mxu0
        %2823 = vdwg.mxu0
        %v2825 = vsel %vm1332, %v2771, 0
        %v2828 = vsel %vm1388, %v2775, 0
        %2830 = vmatprep.subr.bf16.mxu0 0
        %2831 = vmatpush1.bf16.msra.mxu0 %v2828
        %2832 = vmatprep.subr.bf16.mxu0 0
        %2833 = vmatpush1.bf16.msra.mxu0 0
        %2834 = vmatprep.subr.bf16.mxu0 0
        %2835 = vmatpush1.bf16.msra.mxu0 0
        %2836 = vmatprep.subr.bf16.mxu0 0
        %2837 = vmatpush1.bf16.msra.mxu0 0
        %2838 = vmatprep.subr.bf16.mxu0 0
        %2839 = vmatpush1.bf16.msra.mxu0 0
        %2840 = vmatprep.subr.bf16.mxu0 0
        %2841 = vmatpush1.bf16.msra.mxu0 0
        %2842 = vmatprep.subr.bf16.mxu0 0
        %2843 = vmatpush1.bf16.msra.mxu0 0
        %2844 = vmatprep.subr.bf16.mxu0 0
        %2845 = vmatpush1.bf16.msra.mxu0 0
        %2846 = vmatprep.subr.bf16.mxu0 0
        %2847 = vmatpush1.bf16.msra.mxu0 0
        %2848 = vmatprep.subr.bf16.mxu0 0
        %2849 = vmatpush1.bf16.msra.mxu0 0
        %2850 = vmatprep.subr.bf16.mxu0 0
        %2851 = vmatpush1.bf16.msra.mxu0 0
        %2852 = vmatprep.subr.bf16.mxu0 0
        %2853 = vmatpush1.bf16.msra.mxu0 0
        %2854 = vmatprep.subr.bf16.mxu0 0
        %2855 = vmatpush1.bf16.msra.mxu0 0
        %2856 = vmatprep.subr.bf16.mxu0 0
        %2857 = vmatpush1.bf16.msra.mxu0 0
        %2858 = vmatprep.subr.bf16.mxu0 0
        %2859 = vmatpush1.bf16.msra.mxu0 0
        %2860 = vmatprep.subr.bf16.mxu0 0
        %2861 = vmatpush1.bf16.msra.mxu0 0
        %2862 = vmatprep.mubr.bf16.mxu0 0
        %2863 = vmatmul.mubr.bf16.gmra.mrb[0].mxu0 %v2825
        %v2864 = vpop.f32.mrb[0].mxu0
        %v2865 = vadd.f32 0.0, %v2864
        %v2866 = vpop.f32.mrb[0].mxu0
        %v2867 = vpop.f32.mrb[0].mxu0
        %v2868 = vpop.f32.mrb[0].mxu0
        %2869 = vdwg.mxu0
        %v2871 = vsel %vm1332, %v2772, 0
        %v2874 = vsel %vm1388, %v2776, 0
        %2876 = vmatprep.subr.bf16.mxu0 0
        %2877 = vmatpush1.bf16.msra.mxu0 %v2874
        %2878 = vmatprep.subr.bf16.mxu0 0
        %2879 = vmatpush1.bf16.msra.mxu0 0
        %2880 = vmatprep.subr.bf16.mxu0 0
        %2881 = vmatpush1.bf16.msra.mxu0 0
        %2882 = vmatprep.subr.bf16.mxu0 0
        %2883 = vmatpush1.bf16.msra.mxu0 0
        %2884 = vmatprep.subr.bf16.mxu0 0
        %2885 = vmatpush1.bf16.msra.mxu0 0
        %2886 = vmatprep.subr.bf16.mxu0 0
        %2887 = vmatpush1.bf16.msra.mxu0 0
        %2888 = vmatprep.subr.bf16.mxu0 0
        %2889 = vmatpush1.bf16.msra.mxu0 0
        %2890 = vmatprep.subr.bf16.mxu0 0
        %2891 = vmatpush1.bf16.msra.mxu0 0
        %2892 = vmatprep.subr.bf16.mxu0 0
        %2893 = vmatpush1.bf16.msra.mxu0 0
        %2894 = vmatprep.subr.bf16.mxu0 0
        %2895 = vmatpush1.bf16.msra.mxu0 0
        %2896 = vmatprep.subr.bf16.mxu0 0
        %2897 = vmatpush1.bf16.msra.mxu0 0
        %2898 = vmatprep.subr.bf16.mxu0 0
        %2899 = vmatpush1.bf16.msra.mxu0 0
        %2900 = vmatprep.subr.bf16.mxu0 0
        %2901 = vmatpush1.bf16.msra.mxu0 0
        %2902 = vmatprep.subr.bf16.mxu0 0
        %2903 = vmatpush1.bf16.msra.mxu0 0
        %2904 = vmatprep.subr.bf16.mxu0 0
        %2905 = vmatpush1.bf16.msra.mxu0 0
        %2906 = vmatprep.subr.bf16.mxu0 0
        %2907 = vmatpush1.bf16.msra.mxu0 0
        %2908 = vmatprep.mubr.bf16.mxu0 0
        %2909 = vmatmul.mubr.bf16.gmra.mrb[0].mxu0 %v2871
        %v2910 = vpop.f32.mrb[0].mxu0
        %v2911 = vadd.f32 0.0, %v2910
        %v2912 = vpop.f32.mrb[0].mxu0
        %v2913 = vpop.f32.mrb[0].mxu0
        %v2914 = vpop.f32.mrb[0].mxu0
        %2915 = vdwg.mxu0
        %v2917 = vsel %vm1332, %v2773, 0
        %v2920 = vsel %vm1388, %v2777, 0
        %2922 = vmatprep.subr.bf16.mxu0 0
        %2923 = vmatpush1.bf16.msra.mxu0 %v2920
        %2924 = vmatprep.subr.bf16.mxu0 0
        %2925 = vmatpush1.bf16.msra.mxu0 0
        %2926 = vmatprep.subr.bf16.mxu0 0
        %2927 = vmatpush1.bf16.msra.mxu0 0
        %2928 = vmatprep.subr.bf16.mxu0 0
        %2929 = vmatpush1.bf16.msra.mxu0 0
        %2930 = vmatprep.subr.bf16.mxu0 0
        %2931 = vmatpush1.bf16.msra.mxu0 0
        %2932 = vmatprep.subr.bf16.mxu0 0
        %2933 = vmatpush1.bf16.msra.mxu0 0
        %2934 = vmatprep.subr.bf16.mxu0 0
        %2935 = vmatpush1.bf16.msra.mxu0 0
        %2936 = vmatprep.subr.bf16.mxu0 0
        %2937 = vmatpush1.bf16.msra.mxu0 0
        %2938 = vmatprep.subr.bf16.mxu0 0
        %2939 = vmatpush1.bf16.msra.mxu0 0
        %2940 = vmatprep.subr.bf16.mxu0 0
        %2941 = vmatpush1.bf16.msra.mxu0 0
        %2942 = vmatprep.subr.bf16.mxu0 0
        %2943 = vmatpush1.bf16.msra.mxu0 0
        %2944 = vmatprep.subr.bf16.mxu0 0
        %2945 = vmatpush1.bf16.msra.mxu0 0
        %2946 = vmatprep.subr.bf16.mxu0 0
        %2947 = vmatpush1.bf16.msra.mxu0 0
        %2948 = vmatprep.subr.bf16.mxu0 0
        %2949 = vmatpush1.bf16.msra.mxu0 0
        %2950 = vmatprep.subr.bf16.mxu0 0
        %2951 = vmatpush1.bf16.msra.mxu0 0
        %2952 = vmatprep.subr.bf16.mxu0 0
        %2953 = vmatpush1.bf16.msra.mxu0 0
        %2954 = vmatprep.mubr.bf16.mxu0 0
        %2955 = vmatmul.mubr.bf16.gmra.mrb[0].mxu0 %v2917
        %v2956 = vpop.f32.mrb[0].mxu0
        %v2957 = vadd.f32 0.0, %v2956
        %v2958 = vpop.f32.mrb[0].mxu0
        %v2959 = vpop.f32.mrb[0].mxu0
        %v2960 = vpop.f32.mrb[0].mxu0
        %2961 = vdwg.mxu0
        %v2962 = vcombine.low %v2819, %v2911
        %v2963 = vcombine.high %v2819, %v2911
        %v2965 = vunpack.c.l.s4 1983009808
        %v2966 = vunpack.c.0.s8 %v2965
        %v2967 = vlaneseq
        %v2968 = vshrl.u32 %v2967, 7
        %v2969 = vsub.s32 %v2966, %v2968
        %v2970 = vrot.slane %v2962, %v2969
        %v2972 = vunpack.c.l.s4 1983009808
        %v2973 = vunpack.c.0.s8 %v2972
        %v2974 = vlaneseq
        %v2975 = vshrl.u32 %v2974, 7
        %v2976 = vsub.s32 %v2973, %v2975
        %v2977 = vrot.slane %v2963, %v2976
        %v2978 = vcombine.low %v2865, %v2957
        %v2979 = vcombine.high %v2865, %v2957
        %v2981 = vunpack.c.l.s4 1983009808
        %v2982 = vunpack.c.0.s8 %v2981
        %v2983 = vlaneseq
        %v2984 = vshrl.u32 %v2983, 7
        %v2985 = vsub.s32 %v2982, %v2984
        %v2986 = vrot.slane %v2978, %v2985
        %v2988 = vunpack.c.l.s4 1983009808
        %v2989 = vunpack.c.0.s8 %v2988
        %v2990 = vlaneseq
        %v2991 = vshrl.u32 %v2990, 7
        %v2992 = vsub.s32 %v2989, %v2991
        %v2993 = vrot.slane %v2979, %v2992
        %v2994 = vcombine.low %v2970, %v2986
        %v2995 = vcombine.high %v2970, %v2986
        %v2997 = vunpack.c.l.s4 1934713408
        %v2998 = vunpack.c.0.s8 %v2997
        %v2999 = vlaneseq
        %v3000 = vshrl.u32 %v2999, 7
        %v3001 = vsub.s32 %v2998, %v3000
        %v3002 = vrot.slane %v2994, %v3001
        %v3004 = vunpack.c.l.s4 1934713408
        %v3005 = vunpack.c.0.s8 %v3004
        %v3006 = vlaneseq
        %v3007 = vshrl.u32 %v3006, 7
        %v3008 = vsub.s32 %v3005, %v3007
        %v3009 = vrot.slane %v2995, %v3008
        %v3010 = vcombine.low %v2977, %v2993
        %v3011 = vcombine.high %v2977, %v2993
        %v3013 = vunpack.c.l.s4 1934713408
        %v3014 = vunpack.c.0.s8 %v3013
        %v3015 = vlaneseq
        %v3016 = vshrl.u32 %v3015, 7
        %v3017 = vsub.s32 %v3014, %v3016
        %v3018 = vrot.slane %v3010, %v3017
        %v3020 = vunpack.c.l.s4 1934713408
        %v3021 = vunpack.c.0.s8 %v3020
        %v3022 = vlaneseq
        %v3023 = vshrl.u32 %v3022, 7
        %v3024 = vsub.s32 %v3021, %v3023
        %v3025 = vrot.slane %v3011, %v3024
        %v3026 = vcombine.high %v3002, 0.0
        %v3027 = vcombine.high %v3009, 0.0
        %v3028 = vcombine.high %v3018, 0.0
        %v3029 = vcombine.high %v3025, 0.0
        %v3030 = vcombine.low %v3002, %v3009
        %v3032 = vunpack.c.l.s4 1983009808
        %v3033 = vunpack.c.0.s8 %v3032
        %v3034 = vlaneseq
        %v3035 = vshrl.u32 %v3034, 7
        %v3036 = vsub.s32 %v3033, %v3035
        %v3037 = vrot.slane %v3030, %v3036
        %v3038 = vcombine.low %v3026, %v3027
        %v3040 = vunpack.c.l.s4 1983009808
        %v3041 = vunpack.c.0.s8 %v3040
        %v3042 = vlaneseq
        %v3043 = vshrl.u32 %v3042, 7
        %v3044 = vsub.s32 %v3041, %v3043
        %v3045 = vrot.slane %v3038, %v3044
        %v3046 = vcombine.low %v3018, %v3025
        %v3048 = vunpack.c.l.s4 1983009808
        %v3049 = vunpack.c.0.s8 %v3048
        %v3050 = vlaneseq
        %v3051 = vshrl.u32 %v3050, 7
        %v3052 = vsub.s32 %v3049, %v3051
        %v3053 = vrot.slane %v3046, %v3052
        %v3054 = vcombine.low %v3028, %v3029
        %v3056 = vunpack.c.l.s4 1983009808
        %v3057 = vunpack.c.0.s8 %v3056
        %v3058 = vlaneseq
        %v3059 = vshrl.u32 %v3058, 7
        %v3060 = vsub.s32 %v3057, %v3059
        %v3061 = vrot.slane %v3054, %v3060
        %v3062 = vcombine.low %v3037, %v3045
        %v3063 = vcombine.high %v3037, %v3045
        %v3065 = vunpack.c.l.s4 1934713408
        %v3066 = vunpack.c.0.s8 %v3065
        %v3067 = vlaneseq
        %v3068 = vshrl.u32 %v3067, 7
        %v3069 = vsub.s32 %v3066, %v3068
        %v3070 = vrot.slane %v3062, %v3069
        %v3072 = vunpack.c.l.s4 1934713408
        %v3073 = vunpack.c.0.s8 %v3072
        %v3074 = vlaneseq
        %v3075 = vshrl.u32 %v3074, 7
        %v3076 = vsub.s32 %v3073, %v3075
        %v3077 = vrot.slane %v3063, %v3076
        %v3078 = vcombine.low %v3053, %v3061
        %v3079 = vcombine.high %v3053, %v3061
        %v3081 = vunpack.c.l.s4 1934713408
        %v3082 = vunpack.c.0.s8 %v3081
        %v3083 = vlaneseq
        %v3084 = vshrl.u32 %v3083, 7
        %v3085 = vsub.s32 %v3082, %v3084
        %v3086 = vrot.slane %v3078, %v3085
        %v3088 = vunpack.c.l.s4 1934713408
        %v3089 = vunpack.c.0.s8 %v3088
        %v3090 = vlaneseq
        %v3091 = vshrl.u32 %v3090, 7
        %v3092 = vsub.s32 %v3089, %v3091
        %v3093 = vrot.slane %v3079, %v3092
        %v3094 = vcombine.low %v3070, %v3086
        %v3095 = vcombine.high %v3070, %v3086
        %v3096 = vcombine.low %v3077, %v3093
        %v3097 = vcombine.high %v3077, %v3093
        %3099 = vrot.lane.b32.xlu0 %v3095, 16
        %v3100 = vpop.permute.xlu0 %3099
        %3103 = vrot.lane.b32.xlu0 %v3096, 32
        %v3104 = vpop.permute.xlu0 %3103
        %3107 = vrot.lane.b32.xlu0 %v3097, 48
        %v3108 = vpop.permute.xlu0 %3107
        %v3110 = vsel %vm513, %v3094, %v3100
        %v3111 = vsel %vm515, %v3110, %v3104
        %v3112 = vsel %vm517, %v3111, %v3108
        %s3113 = scalar_lea.vmem [#allocation8], 32
        %v3114 = vld [vmem:[%s3113] sm:$0xf]
        %v3115 = vld [vmem:[%s3113 + $0x4] sm:$0xf]
        %v3116 = vld [vmem:[%s3113 + $0x8] sm:$0xf]
        %v3117 = vld [vmem:[%s3113 + $0xc] sm:$0xf]
        %v3118 = vld [vmem:[%s3113 + $0x10] sm:$0xf]
        %v3119 = vld [vmem:[%s3113 + $0x14] sm:$0xf]
        %v3120 = vld [vmem:[%s3113 + $0x18] sm:$0xf]
        %v3121 = vld [vmem:[%s3113 + $0x1c] sm:$0xf]
        %v3122 = vpack.c.bf16 %v3112, %v3112
        %v3131 = vunpack.c.l.b16 %v3114
        %v3132 = vunpack.c.l.b16 %v3115
        %v3133 = vunpack.c.l.b16 %v3116
        %v3134 = vunpack.c.l.b16 %v3117
        %v3135 = vunpack.c.l.b16 %v3118
        %v3136 = vunpack.c.l.b16 %v3119
        %v3137 = vunpack.c.l.b16 %v3120
        %v3138 = vunpack.c.l.b16 %v3121
        %v3139 = vpack.c.b16 %v3132, %v3131
        %v3140 = vpack.c.b16 %v3134, %v3133
        %v3141 = vpack.c.b16 %v3136, %v3135
        %v3142 = vpack.c.b16 %v3138, %v3137
        %v3148 = vsel %vm519, %v3122, 0
        %3150 = vmatprep.subr.bf16.mxu0 0
        %3151 = vmatpush1.bf16.msra.mxu0 %v3139
        %3152 = vmatprep.subr.bf16.mxu0 0
        %3153 = vmatpush1.bf16.msra.mxu0 %v3140
        %3154 = vmatprep.subr.bf16.mxu0 0
        %3155 = vmatpush1.bf16.msra.mxu0 %v3141
        %3156 = vmatprep.subr.bf16.mxu0 0
        %3157 = vmatpush1.bf16.msra.mxu0 %v3142
        %3158 = vmatprep.subr.bf16.mxu0 0
        %3159 = vmatpush1.bf16.msra.mxu0 0
        %3160 = vmatprep.subr.bf16.mxu0 0
        %3161 = vmatpush1.bf16.msra.mxu0 0
        %3162 = vmatprep.subr.bf16.mxu0 0
        %3163 = vmatpush1.bf16.msra.mxu0 0
        %3164 = vmatprep.subr.bf16.mxu0 0
        %3165 = vmatpush1.bf16.msra.mxu0 0
        %3166 = vmatprep.subr.bf16.mxu0 0
        %3167 = vmatpush1.bf16.msra.mxu0 0
        %3168 = vmatprep.subr.bf16.mxu0 0
        %3169 = vmatpush1.bf16.msra.mxu0 0
        %3170 = vmatprep.subr.bf16.mxu0 0
        %3171 = vmatpush1.bf16.msra.mxu0 0
        %3172 = vmatprep.subr.bf16.mxu0 0
        %3173 = vmatpush1.bf16.msra.mxu0 0
        %3174 = vmatprep.subr.bf16.mxu0 0
        %3175 = vmatpush1.bf16.msra.mxu0 0
        %3176 = vmatprep.subr.bf16.mxu0 0
        %3177 = vmatpush1.bf16.msra.mxu0 0
        %3178 = vmatprep.subr.bf16.mxu0 0
        %3179 = vmatpush1.bf16.msra.mxu0 0
        %3180 = vmatprep.subr.bf16.mxu0 0
        %3181 = vmatpush1.bf16.msra.mxu0 0
        %3182 = vmatprep.mubr.bf16.mxu0 0
        %3183 = vmatmul.mubr.bf16.gmra.mrb[0].mxu0 %v3148
        %v3184 = vpop.f32.mrb[0].mxu0
        %v3185 = vadd.f32 0.0, %v3184
        %v3186 = vpop.f32.mrb[0].mxu0
        %v3187 = vpop.f32.mrb[0].mxu0
        %v3188 = vpop.f32.mrb[0].mxu0
        %3189 = vdwg.mxu0
        %v3190 = vadd.f32 %v1970, %v3185
        %s3191 = scalar_lea.vmem [#allocation5], 1
        %v3192 = vld [vmem:[%s3191] sm:$0x1]
        %v3193 = vmul.f32 %v3190, %v3190
        %v3194 = vsel %vm519, %v3193, 0.0
        %3195 = vadd.xlane.f32.xlu0 %v3194
        %v3196 = vpop.xlane.xlu0 %3195
        %v3197 = vmul.f32 %v3196, %v581
        %v3198 = vadd.f32 %v3197, 1e-05
        %v3199 = vrsqrt.pop %v3198
        %v3200 = vmul.f32 %v3190, %v3199
        %v3202 = vlaneseq
        %v3203 = vshrl.u32 %v3202, 7
        %v3204 = vsub.s32 0, %v3203
        %v3205 = vrot.slane %v3192, %v3204
        %v3207 = vmul.f32 %v3200, %v3205
        %s3208 = scalar_lea.vmem [#allocation10], 32
        %v3209 = vld [vmem:[%s3208] sm:$0xf]
        %v3210 = vld [vmem:[%s3208 + $0x4] sm:$0xf]
        %v3211 = vld [vmem:[%s3208 + $0x8] sm:$0xf]
        %v3212 = vld [vmem:[%s3208 + $0xc] sm:$0xf]
        %v3213 = vld [vmem:[%s3208 + $0x10] sm:$0xf]
        %v3214 = vld [vmem:[%s3208 + $0x14] sm:$0xf]
        %v3215 = vld [vmem:[%s3208 + $0x18] sm:$0xf]
        %v3216 = vld [vmem:[%s3208 + $0x1c] sm:$0xf]
        %v3217 = vpack.c.bf16 %v3207, %v3207
        %v3226 = vunpack.c.l.b16 %v3209
        %v3227 = vunpack.c.l.b16 %v3210
        %v3228 = vunpack.c.l.b16 %v3211
        %v3229 = vunpack.c.l.b16 %v3212
        %v3230 = vunpack.c.l.b16 %v3213
        %v3231 = vunpack.c.l.b16 %v3214
        %v3232 = vunpack.c.l.b16 %v3215
        %v3233 = vunpack.c.l.b16 %v3216
        %v3234 = vpack.c.b16 %v3227, %v3226
        %v3235 = vpack.c.b16 %v3229, %v3228
        %v3236 = vpack.c.b16 %v3231, %v3230
        %v3237 = vpack.c.b16 %v3233, %v3232
        %v3243 = vsel %vm519, %v3217, 0
        %3245 = vmatprep.subr.bf16.mxu0 0
        %3246 = vmatpush1.bf16.msra.mxu0 %v3234
        %3247 = vmatprep.subr.bf16.mxu0 0
        %3248 = vmatpush1.bf16.msra.mxu0 %v3235
        %3249 = vmatprep.subr.bf16.mxu0 0
        %3250 = vmatpush1.bf16.msra.mxu0 %v3236
        %3251 = vmatprep.subr.bf16.mxu0 0
        %3252 = vmatpush1.bf16.msra.mxu0 %v3237
        %3253 = vmatprep.subr.bf16.mxu0 0
        %3254 = vmatpush1.bf16.msra.mxu0 0
        %3255 = vmatprep.subr.bf16.mxu0 0
        %3256 = vmatpush1.bf16.msra.mxu0 0
        %3257 = vmatprep.subr.bf16.mxu0 0
        %3258 = vmatpush1.bf16.msra.mxu0 0
        %3259 = vmatprep.subr.bf16.mxu0 0
        %3260 = vmatpush1.bf16.msra.mxu0 0
        %3261 = vmatprep.subr.bf16.mxu0 0
        %3262 = vmatpush1.bf16.msra.mxu0 0
        %3263 = vmatprep.subr.bf16.mxu0 0
        %3264 = vmatpush1.bf16.msra.mxu0 0
        %3265 = vmatprep.subr.bf16.mxu0 0
        %3266 = vmatpush1.bf16.msra.mxu0 0
        %3267 = vmatprep.subr.bf16.mxu0 0
        %3268 = vmatpush1.bf16.msra.mxu0 0
        %3269 = vmatprep.subr.bf16.mxu0 0
        %3270 = vmatpush1.bf16.msra.mxu0 0
        %3271 = vmatprep.subr.bf16.mxu0 0
        %3272 = vmatpush1.bf16.msra.mxu0 0
        %3273 = vmatprep.subr.bf16.mxu0 0
        %3274 = vmatpush1.bf16.msra.mxu0 0
        %3275 = vmatprep.subr.bf16.mxu0 0
        %3276 = vmatpush1.bf16.msra.mxu0 0
        %3277 = vmatprep.mubr.bf16.mxu0 0
        %3278 = vmatmul.mubr.bf16.gmra.mrb[0].mxu0 %v3243
        %v3279 = vpop.f32.mrb[0].mxu0
        %v3280 = vadd.f32 0.0, %v3279
        %v3281 = vpop.f32.mrb[0].mxu0
        %v3282 = vpop.f32.mrb[0].mxu0
        %v3283 = vpop.f32.mrb[0].mxu0
        %3284 = vdwg.mxu0
        %v3285 = vxor.u32 %v3280, 2147483648
        %v3286 = vmul.f32 %v3285, 1.442695
        %v3287 = vpow.pop %v3286
        %v3288 = vadd.f32 %v3287, 1.0
        %v3289 = vrcp.pop %v3288
        %v3290 = vmul.f32 1.0, %v3289
        %v3291 = vmul.f32 %v3280, %v3290
        %3293 = vrot.lane.b32.xlu0 %v3280, 80
        %v3294 = vpop.permute.xlu0 %3293
        %v3296 = vmul.f32 %v3291, %v3294
        %s3297 = scalar_lea.vmem [#allocation11], 24
        %v3298 = vld [vmem:[%s3297] sm:$0xf]
        %v3299 = vld [vmem:[%s3297 + $0x4] sm:$0xf]
        %v3300 = vld [vmem:[%s3297 + $0x8] sm:$0xf]
        %v3301 = vld [vmem:[%s3297 + $0xc] sm:$0xf]
        %v3302 = vld [vmem:[%s3297 + $0x10] sm:$0xf]
        %v3303 = vld [vmem:[%s3297 + $0x14] sm:$0xf]
        %v3304 = vpack.c.bf16 %v3296, %v3296
        %v3311 = vunpack.c.l.b16 %v3298
        %v3312 = vunpack.c.l.b16 %v3299
        %v3313 = vunpack.c.l.b16 %v3300
        %v3314 = vunpack.c.l.b16 %v3301
        %v3315 = vunpack.c.l.b16 %v3302
        %v3316 = vunpack.c.l.b16 %v3303
        %v3317 = vpack.c.b16 %v3312, %v3311
        %v3318 = vpack.c.b16 %v3314, %v3313
        %v3319 = vpack.c.b16 %v3316, %v3315
        %v3324 = vsel %vm517, %v3304, 0
        %3326 = vmatprep.subr.bf16.mxu0 0
        %3327 = vmatpush1.bf16.msra.mxu0 %v3317
        %3328 = vmatprep.subr.bf16.mxu0 0
        %3329 = vmatpush1.bf16.msra.mxu0 %v3318
        %3330 = vmatprep.subr.bf16.mxu0 0
        %3331 = vmatpush1.bf16.msra.mxu0 %v3319
        %3332 = vmatprep.subr.bf16.mxu0 0
        %3333 = vmatpush1.bf16.msra.mxu0 0
        %3334 = vmatprep.subr.bf16.mxu0 0
        %3335 = vmatpush1.bf16.msra.mxu0 0
        %3336 = vmatprep.subr.bf16.mxu0 0
        %3337 = vmatpush1.bf16.msra.mxu0 0
        %3338 = vmatprep.subr.bf16.mxu0 0
        %3339 = vmatpush1.bf16.msra.mxu0 0
        %3340 = vmatprep.subr.bf16.mxu0 0
        %3341 = vmatpush1.bf16.msra.mxu0 0
        %3342 = vmatprep.subr.bf16.mxu0 0
        %3343 = vmatpush1.bf16.msra.mxu0 0
        %3344 = vmatprep.subr.bf16.mxu0 0
        %3345 = vmatpush1.bf16.msra.mxu0 0
        %3346 = vmatprep.subr.bf16.mxu0 0
        %3347 = vmatpush1.bf16.msra.mxu0 0
        %3348 = vmatprep.subr.bf16.mxu0 0
        %3349 = vmatpush1.bf16.msra.mxu0 0
        %3350 = vmatprep.subr.bf16.mxu0 0
        %3351 = vmatpush1.bf16.msra.mxu0 0
        %3352 = vmatprep.subr.bf16.mxu0 0
        %3353 = vmatpush1.bf16.msra.mxu0 0
        %3354 = vmatprep.subr.bf16.mxu0 0
        %3355 = vmatpush1.bf16.msra.mxu0 0
        %3356 = vmatprep.subr.bf16.mxu0 0
        %3357 = vmatpush1.bf16.msra.mxu0 0
        %3358 = vmatprep.mubr.bf16.mxu0 0
        %3359 = vmatmul.mubr.bf16.gmra.mrb[0].mxu0 %v3324
        %v3360 = vpop.f32.mrb[0].mxu0
        %v3361 = vadd.f32 0.0, %v3360
        %v3362 = vpop.f32.mrb[0].mxu0
        %v3363 = vpop.f32.mrb[0].mxu0
        %v3364 = vpop.f32.mrb[0].mxu0
        %3365 = vdwg.mxu0
        %v3366 = vadd.f32 %v3190, %v3361
        %v3367 = vld [vmem:[%s7] sm:$0x1]
        %v3368 = vmul.f32 %v3366, %v3366
        %v3369 = vsel %vm519, %v3368, 0.0
        %3370 = vadd.xlane.f32.xlu0 %v3369
        %v3371 = vpop.xlane.xlu0 %3370
        %v3372 = vmul.f32 %v3371, %v581
        %v3373 = vadd.f32 %v3372, 1e-05
        %v3374 = vrsqrt.pop %v3373
        %v3375 = vmul.f32 %v3366, %v3374
        %v3377 = vlaneseq
        %v3378 = vshrl.u32 %v3377, 7
        %v3379 = vsub.s32 0, %v3378
        %v3380 = vrot.slane %v3367, %v3379
        %v3382 = vmul.f32 %v3375, %v3380
        %v3383 = vld [vmem:[#allocation13] sm:$0xff]
        %v3384 = vld [vmem:[#allocation13 + $0x8] sm:$0xff]
        %v3385 = vld [vmem:[#allocation13 + $0x10] sm:$0xff]
        %v3386 = vld [vmem:[#allocation13 + $0x18] sm:$0xff]
        %v3387 = vld [vmem:[#allocation13 + $0x20] sm:$0xff]
        %v3388 = vld [vmem:[#allocation13 + $0x28] sm:$0xff]
        %v3389 = vld [vmem:[#allocation13 + $0x30] sm:$0xff]
        %v3390 = vld [vmem:[#allocation13 + $0x38] sm:$0xff]
        %v3391 = vpack.c.bf16 %v3382, %v3382
        %v3400 = vunpack.c.l.b16 %v3383
        %v3401 = vunpack.c.h.b16 %v3383
        %v3402 = vunpack.c.l.b16 %v3384
        %v3403 = vunpack.c.h.b16 %v3384
        %v3404 = vunpack.c.l.b16 %v3385
        %v3405 = vunpack.c.h.b16 %v3385
        %v3406 = vunpack.c.l.b16 %v3386
        %v3407 = vunpack.c.h.b16 %v3386
        %v3408 = vunpack.c.l.b16 %v3387
        %v3409 = vunpack.c.h.b16 %v3387
        %v3410 = vunpack.c.l.b16 %v3388
        %v3411 = vunpack.c.h.b16 %v3388
        %v3412 = vunpack.c.l.b16 %v3389
        %v3413 = vunpack.c.h.b16 %v3389
        %v3414 = vunpack.c.l.b16 %v3390
        %v3415 = vunpack.c.h.b16 %v3390
        %v3416 = vpack.c.b16 %v3402, %v3400
        %v3417 = vpack.c.b16 %v3403, %v3401
        %v3418 = vpack.c.b16 %v3406, %v3404
        %v3419 = vpack.c.b16 %v3407, %v3405
        %v3420 = vpack.c.b16 %v3410, %v3408
        %v3421 = vpack.c.b16 %v3411, %v3409
        %v3422 = vpack.c.b16 %v3414, %v3412
        %v3423 = vpack.c.b16 %v3415, %v3413
        %v3433 = vsel %vm519, %v3391, 0
        %3435 = vmatprep.subr.bf16.mxu0 %v3417
        %3436 = vmatpush1.bf16.msra.mxu0 %v3416
        %3437 = vmatprep.subr.bf16.mxu0 %v3419
        %3438 = vmatpush1.bf16.msra.mxu0 %v3418
        %3439 = vmatprep.subr.bf16.mxu0 %v3421
        %3440 = vmatpush1.bf16.msra.mxu0 %v3420
        %3441 = vmatprep.subr.bf16.mxu0 %v3423
        %3442 = vmatpush1.bf16.msra.mxu0 %v3422
        %3443 = vmatprep.subr.bf16.mxu0 0
        %3444 = vmatpush1.bf16.msra.mxu0 0
        %3445 = vmatprep.subr.bf16.mxu0 0
        %3446 = vmatpush1.bf16.msra.mxu0 0
        %3447 = vmatprep.subr.bf16.mxu0 0
        %3448 = vmatpush1.bf16.msra.mxu0 0
        %3449 = vmatprep.subr.bf16.mxu0 0
        %3450 = vmatpush1.bf16.msra.mxu0 0
        %3451 = vmatprep.subr.bf16.mxu0 0
        %3452 = vmatpush1.bf16.msra.mxu0 0
        %3453 = vmatprep.subr.bf16.mxu0 0
        %3454 = vmatpush1.bf16.msra.mxu0 0
        %3455 = vmatprep.subr.bf16.mxu0 0
        %3456 = vmatpush1.bf16.msra.mxu0 0
        %3457 = vmatprep.subr.bf16.mxu0 0
        %3458 = vmatpush1.bf16.msra.mxu0 0
        %3459 = vmatprep.subr.bf16.mxu0 0
        %3460 = vmatpush1.bf16.msra.mxu0 0
        %3461 = vmatprep.subr.bf16.mxu0 0
        %3462 = vmatpush1.bf16.msra.mxu0 0
        %3463 = vmatprep.subr.bf16.mxu0 0
        %3464 = vmatpush1.bf16.msra.mxu0 0
        %3465 = vmatprep.subr.bf16.mxu0 0
        %3466 = vmatpush1.bf16.msra.mxu0 0
        %3467 = vmatprep.mubr.bf16.mxu0 0
        %3468 = vmatmul.mubr.bf16.gmra.mrb[0].mxu0 %v3433
        %v3469 = vpop.f32.mrb[0].mxu0
        %v3470 = vadd.f32 0.0, %v3469
        %v3471 = vpop.f32.mrb[0].mxu0
        %v3472 = vadd.f32 0.0, %v3471
        %v3473 = vpop.f32.mrb[0].mxu0
        %v3474 = vpop.f32.mrb[0].mxu0
        %3475 = vdwg.mxu0
        %3476 = vst [vmem:[%s488] sm:$0xff] %v3470
        %3477 = vst [vmem:[%s488 + $0x8] sm:$0xff] %v3472
        %s3478 = sand.u32 %s275, 1
        %s3479 = scalar_lea.sflag [#allocation4], %s3478
        %s3480 = sand.u32 %s275, 1
        %s3481 = smul.addr %s3480, 16
        %s3482 = scalar_lea.vmem [#allocation14], %s3481
        // Predicated region
        $region93: #{tpu_custom_call.1} parent=63 // pred_check
          %p3483 = pneg %p285
        $region94: #{tpu_custom_call.1} parent=63 // pred_check_branch
          %3485 = sbr.rel (%p3483) target = $region96
        $region95: #{tpu_custom_call.1} parent=63 // pred_region
          %s3487 = ssub.s32 256, 256
          %3488 = vsyncadd %s3479, %s3487
          %s3489 = smul.addr %s31, 2
          %s3490 = smul.addr %s3489, 128
          %s3491 = scalar_lea.hbm %s11, %s3490
          %s3493 = sshll.u32 %s3482, 4
          %s3494 = int_to_ptr.vmem [resolvable:$true] %s3493
          %3496 = dma.vmem_to_hbm [thread:$0]  %s3494, 256, %s3491, %s3479
        $region96: #{tpu_custom_call.1} parent=63 // pred_fallthru
          _
      $region64: #{tpu_custom_call.1} parent=5 // pred_fallthru
        _
      %p3497 = scmp.le.s32.totalorder 2, %s26
      // Predicated region
      $region97: #{tpu_custom_call.1} parent=5 // pred_check
        %p3498 = pneg %p3497
      $region98: #{tpu_custom_call.1} parent=5 // pred_check_branch
        %3500 = sbr.rel (%p3498) target = $region100
      $region99: #{tpu_custom_call.1} parent=5 // pred_region
        %s3501 = ssub.s32 %s26, 2
        // Predicated region
        $region101: #{tpu_custom_call.1} parent=99 // pred_check
          %p3502 = pneg %p291
        $region102: #{tpu_custom_call.1} parent=99 // pred_check_branch
          %3504 = sbr.rel (%p3502) target = $region104
        $region103: #{tpu_custom_call.1} parent=99 // pred_region
          %s3505 = sand.u32 %s276, 1
          %s3506 = scalar_lea.sflag [#allocation4], %s3505
          %s3507 = sand.u32 %s276, 1
          %s3508 = smul.addr %s3507, 16
          %s3509 = scalar_lea.vmem [#allocation14], %s3508
          %3510 = dma.done %s3506, 256
        $region104: #{tpu_custom_call.1} parent=99 // pred_fallthru
          _
      $region100: #{tpu_custom_call.1} parent=5 // pred_fallthru
        _
    $region6: #{tpu_custom_call.1} parent=1 // loop_footer
      %s30 = sadd.s32 1, %s26
    $region7: #{tpu_custom_call.1} parent=1 // loop_footer_branch
      %25 = sbr.rel target = $region3
    $region8: #{tpu_custom_call.1} parent=1 // loop_exit
      _
    %3511 = vsyncpa [#allocation3], 1
    %s3512 = scalar_lea.sflag [#allocation3], 1
    %3513 = vsyncpa %s3512, 1
    %3514 = vsyncpa [#allocation6], 1
    %3515 = vsyncpa [#allocation9], 1
    %3516 = vsyncpa [#allocation12], 1
    %3517 = vsyncpa [#allocation4], 1
    %s3518 = scalar_lea.sflag [#allocation4], 1
    %3519 = vsyncpa %s3518, 1

</llo_original>
